<compile_context>
chip_gen: v7x
topology: tpu7x:2x2x1
jax: 0.10.0
libtpu: 0.0.40
codegen_flags: <defaults>
</compile_context>

<pallas_src>
import functools

import jax
import jax.numpy as jnp
from jax import lax
from jax.experimental import pallas as pl
from jax.experimental.pallas import tpu as pltpu


def _round_up(x, m):
    return ((x + m - 1) // m) * m


# ----------------------------------------------------------------------------------
# Kernel 1: sequential LSTM recurrence.  One grid step == T_CHUNK decode time steps.
# ----------------------------------------------------------------------------------
def _lstm_chunk_kernel(xproj_ref, bias_ref, whh_ref, h0_ref, c0_ref,
                       h_out_ref, c_out_ref, h_sc, c_sc,
                       *, hidden_size, t_chunk):
    # Initialize the recurrent state on the first chunk.
    @pl.when(pl.program_id(0) == 0)
    def _():
        h_sc[...] = h0_ref[...]
        c_sc[...] = c0_ref[...]

    bias = bias_ref[...]                    # (1, 4H) f32  (b_ih + b_hh)
    whh = whh_ref[...]                      # (H, 4H) bf16
    H = hidden_size

    def step(tt, carry):
        h_prev, c_prev = carry              # (B, H) f32
        # gates = x_proj[t] (bf16 -> f32) + bias + h @ W_hh^T  (bf16 MXU, f32 acc)
        gates = (xproj_ref[tt].astype(jnp.float32) + bias
                 + jnp.dot(h_prev.astype(whh.dtype), whh,
                           preferred_element_type=jnp.float32))     # (B, 4H)
        # Gate slices: H multiple of 128 -> zero-cost lane-tile views.
        i_g = jax.nn.sigmoid(gates[:, 0 * H:1 * H])
        f_g = jax.nn.sigmoid(gates[:, 1 * H:2 * H])
        g_g = jnp.tanh(gates[:, 2 * H:3 * H])
        o_g = jax.nn.sigmoid(gates[:, 3 * H:4 * H])
        c_new = f_g * c_prev + i_g * g_g
        h_new = o_g * jnp.tanh(c_new)
        h_out_ref[tt] = h_new
        c_out_ref[tt] = c_new
        return h_new, c_new

    h_fin, c_fin = lax.fori_loop(0, t_chunk, step, (h_sc[...], c_sc[...]),
                                 unroll=(t_chunk <= 16))
    h_sc[...] = h_fin
    c_sc[...] = c_fin


# ----------------------------------------------------------------------------------
# Kernel 2: parallel, vocab-tiled output projection with fused argmax.
# logits = [h|c] @ W_out^T + b  (single K=2H matmul); running (max, argmax) per row.
# ----------------------------------------------------------------------------------
def _vocab_proj_argmax_kernel(hc_ref, w_ref, b_ref, out_ref, arg_ref,
                              max_sc, arg_sc, *, tile_v):
    j = pl.program_id(1)

    logits = (jnp.dot(hc_ref[...].astype(w_ref.dtype), w_ref[...],
                      preferred_element_type=jnp.float32)
              + b_ref[...])                                          # (tile_m, tile_v) f32
    out_ref[...] = logits

    @pl.when(j == 0)
    def _():
        max_sc[...] = jnp.full_like(max_sc, -jnp.inf)
        arg_sc[...] = jnp.zeros_like(arg_sc)

    # Leftmost argmax within this vocab tile (max/min reductions only).
    col = lax.broadcasted_iota(jnp.int32, logits.shape, 1)
    tile_max = jnp.max(logits, axis=-1, keepdims=True)               # (tile_m, 1)
    tile_arg = jnp.min(jnp.where(logits == tile_max, col, jnp.int32(tile_v)),
                       axis=-1, keepdims=True) + j * tile_v          # global column idx

    better = tile_max > max_sc[...]                                  # strict -> leftmost tie-break
    arg_sc[...] = jnp.where(better, tile_arg, arg_sc[...])
    max_sc[...] = jnp.where(better, tile_max, max_sc[...])

    @pl.when(j == pl.num_programs(1) - 1)
    def _():
        arg_ref[...] = arg_sc[...]


def _select_proj_tiles(m_rows, vocab, hidden, budget_bytes=24 * 1024 * 1024):
    """Raised tile caps (tile_m<=512, tile_v<=2048), shrunk to fit a VMEM budget
    that is safe even on v7x (64 MiB physical, 32 MiB limit used below)."""
    tile_m = min(512, _round_up(m_rows, 8))
    tile_v = min(2048, _round_up(vocab, 128))

    def working_set(tm, tv):
        return (2 * (2 * hidden) * tv * 2        # double-buffered bf16 weight tiles
                + 2 * tm * (2 * hidden) * 4      # double-buffered f32 [h|c] tiles
                + 2 * tm * tv * 4                # double-buffered f32 logits tiles
                + 2 * tv * 4 + 2 * tm * 8)       # bias + argmax/max scratch

    while working_set(tile_m, tile_v) > budget_bytes and tile_v > 128:
        tile_v //= 2
    while working_set(tile_m, tile_v) > budget_bytes and tile_m > 8:
        tile_m //= 2
    return tile_m, tile_v


def simple_rnn_decoder_forward(params, state, tgt_var, unk_idx):
    """Eval-mode forward of SimpleRNNDecoder (LSTM cell).

    params:  dict of f32 arrays (see init_params).
    state:   (h0, c0), each (B, H) f32.
    tgt_var: (B, T) int32 teacher-forcing targets.
    Returns (decoder_outputs_prob (T, B, V) f32, decoder_outputs (T, B) int32).
    """
    h0, c0 = state
    batch, tgt_len = tgt_var.shape
    hidden = h0.shape[-1]
    emb_table = params["emb"]                                       # (V, E)
    vocab, emb_dim = emb_table.shape
    four_h = 4 * hidden

    # ---------------- glue: token stream + embedding gather (data-dependent) -------
    first = jnp.full((1, batch), unk_idx, dtype=tgt_var.dtype)
    tokens = jnp.concatenate([first, tgt_var[:, :-1].T], axis=0)    # (T, B)
    emb_seq = jnp.take(emb_table, tokens, axis=0)                   # (T, B, E)

    # ---------------- hoisted input projection: one big bf16 matmul, kept bf16 -----
    wih_bf = params["w_ih"].T.astype(jnp.bfloat16)                  # (E, 4H)
    x_proj = jnp.dot(
        emb_seq.reshape(tgt_len * batch, emb_dim).astype(jnp.bfloat16),
        wih_bf, preferred_element_type=jnp.float32).astype(jnp.bfloat16)
    x_proj = x_proj.reshape(tgt_len, batch, four_h)                 # (T, B, 4H) bf16
    bias = (params["b_ih"] + params["b_hh"]).reshape(1, four_h).astype(jnp.float32)

    whh_bf = params["w_hh"].T.astype(jnp.bfloat16)                  # (H, 4H)

    # Time chunking: amortize per-grid-step overhead over T_CHUNK steps.
    t_chunk = min(tgt_len, 64)
    t_pad = _round_up(tgt_len, t_chunk)
    if t_pad != tgt_len:
        x_proj = jnp.pad(x_proj, ((0, t_pad - tgt_len), (0, 0), (0, 0)))

    # ---------------- Pallas kernel 1: sequential recurrence over T chunks ---------
    rec_cost = pl.CostEstimate(
        flops=int(2 * t_pad * batch * hidden * four_h + 12 * t_pad * batch * hidden),
        transcendentals=int(5 * t_pad * batch * hidden),
        bytes_accessed=int(t_pad * batch * four_h * 2 + whh_bf.size * 2
                           + 4 * batch * hidden * 4
                           + 2 * t_pad * batch * hidden * 4),
    )
    rec_kernel = functools.partial(_lstm_chunk_kernel,
                                   hidden_size=hidden, t_chunk=t_chunk)
    h_seq, c_seq = pl.pallas_call(
        rec_kernel,
        out_shape=(jax.ShapeDtypeStruct((t_pad, batch, hidden), jnp.float32),
                   jax.ShapeDtypeStruct((t_pad, batch, hidden), jnp.float32)),
        grid_spec=pltpu.PrefetchScalarGridSpec(
            num_scalar_prefetch=0,
            grid=(t_pad // t_chunk,),
            in_specs=[
                pl.BlockSpec((t_chunk, batch, four_h), lambda c: (c, 0, 0)),  # x_proj chunk
                pl.BlockSpec((1, four_h), lambda c: (0, 0)),                  # fused bias
                pl.BlockSpec((hidden, four_h), lambda c: (0, 0)),             # W_hh^T
                pl.BlockSpec((batch, hidden), lambda c: (0, 0)),              # h0
                pl.BlockSpec((batch, hidden), lambda c: (0, 0)),              # c0
            ],
            out_specs=[
                pl.BlockSpec((t_chunk, batch, hidden), lambda c: (c, 0, 0)),
                pl.BlockSpec((t_chunk, batch, hidden), lambda c: (c, 0, 0)),
            ],
            scratch_shapes=[
                pltpu.VMEM((batch, hidden), jnp.float32),   # h state
                pltpu.VMEM((batch, hidden), jnp.float32),   # c state
            ],
        ),
        compiler_params=pltpu.CompilerParams(
            dimension_semantics=("arbitrary",),             # true sequential recurrence
            vmem_limit_bytes=32 * 1024 * 1024,
        ),
        cost_estimate=rec_cost,
    )(x_proj, bias, whh_bf, h0, c0)

    # ---------------- Pallas kernel 2: fused-K vocab projection + fused argmax -----
    m_rows = tgt_len * batch
    hc_flat = jnp.concatenate(
        [h_seq[:tgt_len], c_seq[:tgt_len]], axis=-1).reshape(m_rows, 2 * hidden)

    w_out_bf = params["w_out"].T.astype(jnp.bfloat16)               # (2H, V) fused K
    b_out = params["b_out"].astype(jnp.float32)                     # (V,)

    tile_m, tile_v = _select_proj_tiles(m_rows, vocab, hidden)
    m_pad = _round_up(m_rows, tile_m)
    vocab_pad = _round_up(vocab, tile_v)

    if m_pad != m_rows:
        hc_flat = jnp.pad(hc_flat, ((0, m_pad - m_rows), (0, 0)))
    if vocab_pad != vocab:
        w_out_bf = jnp.pad(w_out_bf, ((0, 0), (0, vocab_pad - vocab)))
        # Padded vocab columns must never win the fused argmax.
        b_out = jnp.pad(b_out, (0, vocab_pad - vocab), constant_values=-1e30)
    b_out = b_out.reshape(1, vocab_pad)

    proj_cost = pl.CostEstimate(
        flops=int(2 * m_pad * (2 * hidden) * vocab_pad + 2 * m_pad * vocab_pad),
        transcendentals=0,
        bytes_accessed=int(hc_flat.size * 4
                           + (m_pad // tile_m) * w_out_bf.size * 2
                           + vocab_pad * 4
                           + m_pad * vocab_pad * 4 + m_pad * 4),
    )
    proj_kernel = functools.partial(_vocab_proj_argmax_kernel, tile_v=tile_v)
    logits_flat, arg_flat = pl.pallas_call(
        proj_kernel,
        out_shape=(jax.ShapeDtypeStruct((m_pad, vocab_pad), jnp.float32),
                   jax.ShapeDtypeStruct((m_pad, 1), jnp.int32)),
        grid_spec=pltpu.PrefetchScalarGridSpec(
            num_scalar_prefetch=0,
            grid=(m_pad // tile_m, vocab_pad // tile_v),
            in_specs=[
                pl.BlockSpec((tile_m, 2 * hidden), lambda i, j: (i, 0)),   # [h|c] rows
                pl.BlockSpec((2 * hidden, tile_v), lambda i, j: (0, j)),   # W_out tile
                pl.BlockSpec((1, tile_v), lambda i, j: (0, j)),            # b_out tile
            ],
            out_specs=[
                pl.BlockSpec((tile_m, tile_v), lambda i, j: (i, j)),       # logits
                pl.BlockSpec((tile_m, 1), lambda i, j: (i, 0)),            # argmax (resident over j)
            ],
            scratch_shapes=[
                pltpu.VMEM((tile_m, 1), jnp.float32),   # running max
                pltpu.VMEM((tile_m, 1), jnp.int32),     # running argmax
            ],
        ),
        compiler_params=pltpu.CompilerParams(
            dimension_semantics=("parallel", "arbitrary"),
            vmem_limit_bytes=32 * 1024 * 1024,
        ),
        cost_estimate=proj_cost,
    )(hc_flat, w_out_bf, b_out)

    probs = logits_flat[:m_rows, :vocab].reshape(tgt_len, batch, vocab)
    decoder_outputs = arg_flat[:m_rows, 0].reshape(tgt_len, batch).astype(jnp.int32)
    return probs, decoder_outputs


def init_params(key, vocab, emb_dim, hidden):
    """Deterministic synthetic parameters matching the module's shapes."""
    ks = jax.random.split(key, 6)
    scale = 0.1
    return {
        "emb": scale * jax.random.normal(ks[0], (vocab, emb_dim), jnp.float32),
        # torch.nn.LSTMCell parameter shapes:
        "w_ih": scale * jax.random.normal(ks[1], (4 * hidden, emb_dim), jnp.float32),
        "w_hh": scale * jax.random.normal(ks[2], (4 * hidden, hidden), jnp.float32),
        "b_ih": scale * jax.random.normal(ks[3], (4 * hidden,), jnp.float32),
        "b_hh": jnp.zeros((4 * hidden,), jnp.float32),
        # nn.Linear(hidden*2, full_dict_size):
        "w_out": scale * jax.random.normal(ks[4], (vocab, 2 * hidden), jnp.float32),
        "b_out": scale * jax.random.normal(ks[5], (vocab,), jnp.float32),
    }


def _bf16_round(x):
    return x.astype(jnp.bfloat16).astype(jnp.float32)


def reference_forward(params, state, tgt_var, unk_idx, mirror_bf16=False):
    """Pure-JAX reference replicating the PyTorch loop (eval mode).

    mirror_bf16=True rounds matmul operands AND the stored x_proj to bf16 (as the
    kernels do) while keeping all accumulation / gate math in f32.
    """
    rnd = _bf16_round if mirror_bf16 else (lambda x: x)
    h, c = state
    batch, tgt_len = tgt_var.shape
    hidden = h.shape[-1]
    first = jnp.full((1, batch), unk_idx, dtype=tgt_var.dtype)
    tokens = jnp.concatenate([first, tgt_var[:, :-1].T], axis=0)
    w_ih, w_hh, w_out = rnd(params["w_ih"]), rnd(params["w_hh"]), rnd(params["w_out"])
    probs = []
    for t in range(tgt_len):
        x = rnd(params["emb"][tokens[t]])
        xp = rnd(x @ w_ih.T)                                   # x_proj stored bf16
        gates = xp + params["b_ih"] + params["b_hh"] + rnd(h) @ w_hh.T
        i_g = jax.nn.sigmoid(gates[:, 0 * hidden:1 * hidden])
        f_g = jax.nn.sigmoid(gates[:, 1 * hidden:2 * hidden])
        g_g = jnp.tanh(gates[:, 2 * hidden:3 * hidden])
        o_g = jax.nn.sigmoid(gates[:, 3 * hidden:4 * hidden])
        c = f_g * c + i_g * g_g
        h = o_g * jnp.tanh(c)
        hc = jnp.concatenate([rnd(h), rnd(c)], axis=1)
        probs.append(hc @ w_out.T + params["b_out"])
    probs = jnp.stack(probs, axis=0)
    return probs, jnp.argmax(probs, axis=-1).astype(jnp.int32)


if __name__ == "__main__":
    # Small demo shapes; H multiple of 128 and B multiple of 8 so gate slices and
    # stores are (8,128)-tile aligned.  V=1024 exercises the vocab-tiled grid.
    BATCH, TGT_LEN, EMB_DIM, HIDDEN, VOCAB = 8, 8, 128, 128, 1024
    UNK = 1

    key = jax.random.PRNGKey(0)
    k_p, k_h, k_c, k_t = jax.random.split(key, 4)

    params = init_params(k_p, VOCAB, EMB_DIM, HIDDEN)
    h0 = 0.1 * jax.random.normal(k_h, (BATCH, HIDDEN), jnp.float32)
    c0 = 0.1 * jax.random.normal(k_c, (BATCH, HIDDEN), jnp.float32)
    tgt_var = jax.random.randint(k_t, (BATCH, TGT_LEN), 0, VOCAB, dtype=jnp.int32)

    forward = jax.jit(simple_rnn_decoder_forward, static_argnums=(3,))
    probs, outs = forward(params, (h0, c0), tgt_var, UNK)
    probs = jax.block_until_ready(probs)
    outs = jax.block_until_ready(outs)

    assert probs.shape == (TGT_LEN, BATCH, VOCAB)
    assert outs.shape == (TGT_LEN, BATCH)

    # Structural check of the fused in-kernel argmax against the kernel's own logits.
    assert jnp.array_equal(outs, jnp.argmax(probs, axis=-1).astype(jnp.int32))

    # Tight structural check: reference mirrors the kernel's bf16 operand rounding.
    ref_probs_bf, _ = reference_forward(params, (h0, c0), tgt_var, UNK,
                                        mirror_bf16=True)
    assert jnp.allclose(probs, ref_probs_bf, atol=2e-3, rtol=2e-3), \
        float(jnp.max(jnp.abs(probs - ref_probs_bf)))

    # Accuracy check vs the full-f32 PyTorch-equivalent loop (bf16 matmul operands
    # introduce small, bounded error in the logits).
    ref_probs_f32, _ = reference_forward(params, (h0, c0), tgt_var, UNK,
                                         mirror_bf16=False)
    assert jnp.allclose(probs, ref_probs_f32, atol=5e-2, rtol=5e-2), \
        float(jnp.max(jnp.abs(probs - ref_probs_f32)))

    print("KERNEL_OK")
</pallas_src>

<mosaic_0001>
module attributes {stable_mosaic.version = 11 : i64} {
  func.func @_lstm_chunk_kernel(%arg0: i32, %arg1: memref<8x8x512xbf16, #tpu.memory_space<vmem>>, %arg2: memref<1x512xf32, #tpu.memory_space<vmem>>, %arg3: memref<128x512xbf16, #tpu.memory_space<vmem>>, %arg4: memref<8x128xf32, #tpu.memory_space<vmem>>, %arg5: memref<8x128xf32, #tpu.memory_space<vmem>>, %arg6: memref<8x8x128xf32, #tpu.memory_space<vmem>>, %arg7: memref<8x8x128xf32, #tpu.memory_space<vmem>>, %arg8: memref<8x128xf32, #tpu.memory_space<vmem>>, %arg9: memref<8x128xf32, #tpu.memory_space<vmem>>) attributes {dimension_semantics = [#tpu.dimension_semantics<arbitrary>], iteration_bounds = array<i64: 1>, scalar_prefetch = 0 : i64, scratch_operands = 2 : i64, tpu.core_type = #tpu.core_type<tc>, window_params = [{transform_indices = @transform_0, window_bounds = array<i64: 8, 8, 512>}, {pipeline_mode = #tpu.pipeline_mode<synchronous>, transform_indices = @transform_1, window_bounds = array<i64: 1, 512>}, {pipeline_mode = #tpu.pipeline_mode<synchronous>, transform_indices = @transform_2, window_bounds = array<i64: 128, 512>}, {pipeline_mode = #tpu.pipeline_mode<synchronous>, transform_indices = @transform_3, window_bounds = array<i64: 8, 128>}, {pipeline_mode = #tpu.pipeline_mode<synchronous>, transform_indices = @transform_4, window_bounds = array<i64: 8, 128>}, {transform_indices = @transform_5, window_bounds = array<i64: 8, 8, 128>}, {transform_indices = @transform_6, window_bounds = array<i64: 8, 8, 128>}]} {
    %c0_i32 = arith.constant 0 : i32
    %0 = arith.cmpi eq, %arg0, %c0_i32 : i32
    %1 = arith.extui %0 : i1 to i32
    %c0_i32_0 = arith.constant 0 : i32
    %2 = arith.cmpi ne, %1, %c0_i32_0 : i32
    scf.if %2 {
      %c0_92 = arith.constant 0 : index
      %c0_93 = arith.constant 0 : index
      %345 = vector.load %arg4[%c0_92, %c0_93] : memref<8x128xf32, #tpu.memory_space<vmem>>, vector<8x128xf32>
      %c0_94 = arith.constant 0 : index
      %c0_95 = arith.constant 0 : index
      %346 = vector.load %arg8[%c0_94, %c0_95] : memref<8x128xf32, #tpu.memory_space<vmem>>, vector<8x128xf32>
      tpu.vector_store %arg8[%c0_94, %c0_95], %345 {strides = array<i32>} : memref<8x128xf32, #tpu.memory_space<vmem>>, vector<8x128xf32>,
      %c0_96 = arith.constant 0 : index
      %c0_97 = arith.constant 0 : index
      %347 = vector.load %arg5[%c0_96, %c0_97] : memref<8x128xf32, #tpu.memory_space<vmem>>, vector<8x128xf32>
      %c0_98 = arith.constant 0 : index
      %c0_99 = arith.constant 0 : index
      %348 = vector.load %arg9[%c0_98, %c0_99] : memref<8x128xf32, #tpu.memory_space<vmem>>, vector<8x128xf32>
      tpu.vector_store %arg9[%c0_98, %c0_99], %347 {strides = array<i32>} : memref<8x128xf32, #tpu.memory_space<vmem>>, vector<8x128xf32>,
    } else {
    }
    %c0 = arith.constant 0 : index
    %c0_1 = arith.constant 0 : index
    %3 = vector.load %arg2[%c0, %c0_1] : memref<1x512xf32, #tpu.memory_space<vmem>>, vector<1x512xf32>
    %c0_2 = arith.constant 0 : index
    %c0_3 = arith.constant 0 : index
    %4 = vector.load %arg3[%c0_2, %c0_3] : memref<128x512xbf16, #tpu.memory_space<vmem>>, vector<128x512xbf16>
    %c0_4 = arith.constant 0 : index
    %c0_5 = arith.constant 0 : index
    %5 = vector.load %arg8[%c0_4, %c0_5] : memref<8x128xf32, #tpu.memory_space<vmem>>, vector<8x128xf32>
    %c0_6 = arith.constant 0 : index
    %c0_7 = arith.constant 0 : index
    %6 = vector.load %arg9[%c0_6, %c0_7] : memref<8x128xf32, #tpu.memory_space<vmem>>, vector<8x128xf32>
    %c0_i32_8 = arith.constant 0 : i32
    %7 = arith.index_cast %c0_i32_8 : i32 to index
    %c0_9 = arith.constant 0 : index
    %c0_10 = arith.constant 0 : index
    %8 = vector.load %arg1[%7, %c0_9, %c0_10] : memref<8x8x512xbf16, #tpu.memory_space<vmem>>, vector<1x8x512xbf16>
    %9 = vector.shape_cast %8 : vector<1x8x512xbf16> to vector<8x512xbf16>
    %10 = arith.extf %9 : vector<8x512xbf16> to vector<8x512xf32>
    %11 = vector.broadcast %3 : vector<1x512xf32> to vector<8x512xf32>
    %12 = arith.addf %10, %11 : vector<8x512xf32>
    %13 = arith.truncf %5 : vector<8x128xf32> to vector<8x128xbf16>
    %cst = arith.constant dense<0.000000e+00> : vector<8x512xf32>
    %14 = tpu.matmul %13, %4, %cst {dimension_numbers = #tpu.dot_dimension_numbers<[1], [0], [0], [1], [0, 0, 1, 1], [], []>} : vector<8x128xbf16>, vector<128x512xbf16>, vector<8x512xf32> -> vector<8x512xf32>
    %15 = arith.addf %12, %14 : vector<8x512xf32>
    %16 = vector.extract_strided_slice %15 {offsets = [0, 0], sizes = [8, 128], strides = [1, 1]} : vector<8x512xf32> to vector<8x128xf32>
    %17 = arith.negf %16 : vector<8x128xf32>
    %18 = math.exp %17 : vector<8x128xf32>
    %cst_11 = arith.constant 1.000000e+00 : f32
    %19 = vector.broadcast %cst_11 : f32 to vector<8x128xf32>
    %20 = arith.addf %19, %18 : vector<8x128xf32>
    %21 = arith.divf %19, %20 : vector<8x128xf32>
    %22 = vector.extract_strided_slice %15 {offsets = [0, 128], sizes = [8, 128], strides = [1, 1]} : vector<8x512xf32> to vector<8x128xf32>
    %23 = arith.negf %22 : vector<8x128xf32>
    %24 = math.exp %23 : vector<8x128xf32>
    %cst_12 = arith.constant 1.000000e+00 : f32
    %25 = vector.broadcast %cst_12 : f32 to vector<8x128xf32>
    %26 = arith.addf %25, %24 : vector<8x128xf32>
    %27 = arith.divf %25, %26 : vector<8x128xf32>
    %28 = vector.extract_strided_slice %15 {offsets = [0, 256], sizes = [8, 128], strides = [1, 1]} : vector<8x512xf32> to vector<8x128xf32>
    %29 = math.tanh %28 : vector<8x128xf32>
    %30 = vector.extract_strided_slice %15 {offsets = [0, 384], sizes = [8, 128], strides = [1, 1]} : vector<8x512xf32> to vector<8x128xf32>
    %31 = arith.negf %30 : vector<8x128xf32>
    %32 = math.exp %31 : vector<8x128xf32>
    %cst_13 = arith.constant 1.000000e+00 : f32
    %33 = vector.broadcast %cst_13 : f32 to vector<8x128xf32>
    %34 = arith.addf %33, %32 : vector<8x128xf32>
    %35 = arith.divf %33, %34 : vector<8x128xf32>
    %36 = arith.mulf %27, %6 : vector<8x128xf32>
    %37 = arith.mulf %21, %29 : vector<8x128xf32>
    %38 = arith.addf %36, %37 : vector<8x128xf32>
    %39 = math.tanh %38 : vector<8x128xf32>
    %40 = arith.mulf %35, %39 : vector<8x128xf32>
    %41 = arith.index_cast %c0_i32_8 : i32 to index
    %c0_14 = arith.constant 0 : index
    %c0_15 = arith.constant 0 : index
    %42 = vector.load %arg6[%41, %c0_14, %c0_15] : memref<8x8x128xf32, #tpu.memory_space<vmem>>, vector<1x8x128xf32>
    %43 = vector.shape_cast %42 : vector<1x8x128xf32> to vector<8x128xf32>
    %44 = vector.shape_cast %40 : vector<8x128xf32> to vector<1x8x128xf32>
    tpu.vector_store %arg6[%41, %c0_14, %c0_15], %44 {strides = array<i32>} : memref<8x8x128xf32, #tpu.memory_space<vmem>>, vector<1x8x128xf32>,
    %45 = arith.index_cast %c0_i32_8 : i32 to index
    %c0_16 = arith.constant 0 : index
    %c0_17 = arith.constant 0 : index
    %46 = vector.load %arg7[%45, %c0_16, %c0_17] : memref<8x8x128xf32, #tpu.memory_space<vmem>>, vector<1x8x128xf32>
    %47 = vector.shape_cast %46 : vector<1x8x128xf32> to vector<8x128xf32>
    %48 = vector.shape_cast %38 : vector<8x128xf32> to vector<1x8x128xf32>
    tpu.vector_store %arg7[%45, %c0_16, %c0_17], %48 {strides = array<i32>} : memref<8x8x128xf32, #tpu.memory_space<vmem>>, vector<1x8x128xf32>,
    %c1_i32 = arith.constant 1 : i32
    %49 = arith.index_cast %c1_i32 : i32 to index
    %c0_18 = arith.constant 0 : index
    %c0_19 = arith.constant 0 : index
    %50 = vector.load %arg1[%49, %c0_18, %c0_19] : memref<8x8x512xbf16, #tpu.memory_space<vmem>>, vector<1x8x512xbf16>
    %51 = vector.shape_cast %50 : vector<1x8x512xbf16> to vector<8x512xbf16>
    %52 = arith.extf %51 : vector<8x512xbf16> to vector<8x512xf32>
    %53 = vector.broadcast %3 : vector<1x512xf32> to vector<8x512xf32>
    %54 = arith.addf %52, %53 : vector<8x512xf32>
    %55 = arith.truncf %40 : vector<8x128xf32> to vector<8x128xbf16>
    %cst_20 = arith.constant dense<0.000000e+00> : vector<8x512xf32>
    %56 = tpu.matmul %55, %4, %cst_20 {dimension_numbers = #tpu.dot_dimension_numbers<[1], [0], [0], [1], [0, 0, 1, 1], [], []>} : vector<8x128xbf16>, vector<128x512xbf16>, vector<8x512xf32> -> vector<8x512xf32>
    %57 = arith.addf %54, %56 : vector<8x512xf32>
    %58 = vector.extract_strided_slice %57 {offsets = [0, 0], sizes = [8, 128], strides = [1, 1]} : vector<8x512xf32> to vector<8x128xf32>
    %59 = arith.negf %58 : vector<8x128xf32>
    %60 = math.exp %59 : vector<8x128xf32>
    %cst_21 = arith.constant 1.000000e+00 : f32
    %61 = vector.broadcast %cst_21 : f32 to vector<8x128xf32>
    %62 = arith.addf %61, %60 : vector<8x128xf32>
    %63 = arith.divf %61, %62 : vector<8x128xf32>
    %64 = vector.extract_strided_slice %57 {offsets = [0, 128], sizes = [8, 128], strides = [1, 1]} : vector<8x512xf32> to vector<8x128xf32>
    %65 = arith.negf %64 : vector<8x128xf32>
    %66 = math.exp %65 : vector<8x128xf32>
    %cst_22 = arith.constant 1.000000e+00 : f32
    %67 = vector.broadcast %cst_22 : f32 to vector<8x128xf32>
    %68 = arith.addf %67, %66 : vector<8x128xf32>
    %69 = arith.divf %67, %68 : vector<8x128xf32>
    %70 = vector.extract_strided_slice %57 {offsets = [0, 256], sizes = [8, 128], strides = [1, 1]} : vector<8x512xf32> to vector<8x128xf32>
    %71 = math.tanh %70 : vector<8x128xf32>
    %72 = vector.extract_strided_slice %57 {offsets = [0, 384], sizes = [8, 128], strides = [1, 1]} : vector<8x512xf32> to vector<8x128xf32>
    %73 = arith.negf %72 : vector<8x128xf32>
    %74 = math.exp %73 : vector<8x128xf32>
    %cst_23 = arith.constant 1.000000e+00 : f32
    %75 = vector.broadcast %cst_23 : f32 to vector<8x128xf32>
    %76 = arith.addf %75, %74 : vector<8x128xf32>
    %77 = arith.divf %75, %76 : vector<8x128xf32>
    %78 = arith.mulf %69, %38 : vector<8x128xf32>
    %79 = arith.mulf %63, %71 : vector<8x128xf32>
    %80 = arith.addf %78, %79 : vector<8x128xf32>
    %81 = math.tanh %80 : vector<8x128xf32>
    %82 = arith.mulf %77, %81 : vector<8x128xf32>
    %83 = arith.index_cast %c1_i32 : i32 to index
    %c0_24 = arith.constant 0 : index
    %c0_25 = arith.constant 0 : index
    %84 = vector.load %arg6[%83, %c0_24, %c0_25] : memref<8x8x128xf32, #tpu.memory_space<vmem>>, vector<1x8x128xf32>
    %85 = vector.shape_cast %84 : vector<1x8x128xf32> to vector<8x128xf32>
    %86 = vector.shape_cast %82 : vector<8x128xf32> to vector<1x8x128xf32>
    tpu.vector_store %arg6[%83, %c0_24, %c0_25], %86 {strides = array<i32>} : memref<8x8x128xf32, #tpu.memory_space<vmem>>, vector<1x8x128xf32>,
    %87 = arith.index_cast %c1_i32 : i32 to index
    %c0_26 = arith.constant 0 : index
    %c0_27 = arith.constant 0 : index
    %88 = vector.load %arg7[%87, %c0_26, %c0_27] : memref<8x8x128xf32, #tpu.memory_space<vmem>>, vector<1x8x128xf32>
    %89 = vector.shape_cast %88 : vector<1x8x128xf32> to vector<8x128xf32>
    %90 = vector.shape_cast %80 : vector<8x128xf32> to vector<1x8x128xf32>
    tpu.vector_store %arg7[%87, %c0_26, %c0_27], %90 {strides = array<i32>} : memref<8x8x128xf32, #tpu.memory_space<vmem>>, vector<1x8x128xf32>,
    %c2_i32 = arith.constant 2 : i32
    %91 = arith.index_cast %c2_i32 : i32 to index
    %c0_28 = arith.constant 0 : index
    %c0_29 = arith.constant 0 : index
    %92 = vector.load %arg1[%91, %c0_28, %c0_29] : memref<8x8x512xbf16, #tpu.memory_space<vmem>>, vector<1x8x512xbf16>
    %93 = vector.shape_cast %92 : vector<1x8x512xbf16> to vector<8x512xbf16>
    %94 = arith.extf %93 : vector<8x512xbf16> to vector<8x512xf32>
    %95 = vector.broadcast %3 : vector<1x512xf32> to vector<8x512xf32>
    %96 = arith.addf %94, %95 : vector<8x512xf32>
    %97 = arith.truncf %82 : vector<8x128xf32> to vector<8x128xbf16>
    %cst_30 = arith.constant dense<0.000000e+00> : vector<8x512xf32>
    %98 = tpu.matmul %97, %4, %cst_30 {dimension_numbers = #tpu.dot_dimension_numbers<[1], [0], [0], [1], [0, 0, 1, 1], [], []>} : vector<8x128xbf16>, vector<128x512xbf16>, vector<8x512xf32> -> vector<8x512xf32>
    %99 = arith.addf %96, %98 : vector<8x512xf32>
    %100 = vector.extract_strided_slice %99 {offsets = [0, 0], sizes = [8, 128], strides = [1, 1]} : vector<8x512xf32> to vector<8x128xf32>
    %101 = arith.negf %100 : vector<8x128xf32>
    %102 = math.exp %101 : vector<8x128xf32>
    %cst_31 = arith.constant 1.000000e+00 : f32
    %103 = vector.broadcast %cst_31 : f32 to vector<8x128xf32>
    %104 = arith.addf %103, %102 : vector<8x128xf32>
    %105 = arith.divf %103, %104 : vector<8x128xf32>
    %106 = vector.extract_strided_slice %99 {offsets = [0, 128], sizes = [8, 128], strides = [1, 1]} : vector<8x512xf32> to vector<8x128xf32>
    %107 = arith.negf %106 : vector<8x128xf32>
    %108 = math.exp %107 : vector<8x128xf32>
    %cst_32 = arith.constant 1.000000e+00 : f32
    %109 = vector.broadcast %cst_32 : f32 to vector<8x128xf32>
    %110 = arith.addf %109, %108 : vector<8x128xf32>
    %111 = arith.divf %109, %110 : vector<8x128xf32>
    %112 = vector.extract_strided_slice %99 {offsets = [0, 256], sizes = [8, 128], strides = [1, 1]} : vector<8x512xf32> to vector<8x128xf32>
    %113 = math.tanh %112 : vector<8x128xf32>
    %114 = vector.extract_strided_slice %99 {offsets = [0, 384], sizes = [8, 128], strides = [1, 1]} : vector<8x512xf32> to vector<8x128xf32>
    %115 = arith.negf %114 : vector<8x128xf32>
    %116 = math.exp %115 : vector<8x128xf32>
    %cst_33 = arith.constant 1.000000e+00 : f32
    %117 = vector.broadcast %cst_33 : f32 to vector<8x128xf32>
    %118 = arith.addf %117, %116 : vector<8x128xf32>
    %119 = arith.divf %117, %118 : vector<8x128xf32>
    %120 = arith.mulf %111, %80 : vector<8x128xf32>
    %121 = arith.mulf %105, %113 : vector<8x128xf32>
    %122 = arith.addf %120, %121 : vector<8x128xf32>
    %123 = math.tanh %122 : vector<8x128xf32>
    %124 = arith.mulf %119, %123 : vector<8x128xf32>
    %125 = arith.index_cast %c2_i32 : i32 to index
    %c0_34 = arith.constant 0 : index
    %c0_35 = arith.constant 0 : index
    %126 = vector.load %arg6[%125, %c0_34, %c0_35] : memref<8x8x128xf32, #tpu.memory_space<vmem>>, vector<1x8x128xf32>
    %127 = vector.shape_cast %126 : vector<1x8x128xf32> to vector<8x128xf32>
    %128 = vector.shape_cast %124 : vector<8x128xf32> to vector<1x8x128xf32>
    tpu.vector_store %arg6[%125, %c0_34, %c0_35], %128 {strides = array<i32>} : memref<8x8x128xf32, #tpu.memory_space<vmem>>, vector<1x8x128xf32>,
    %129 = arith.index_cast %c2_i32 : i32 to index
    %c0_36 = arith.constant 0 : index
    %c0_37 = arith.constant 0 : index
    %130 = vector.load %arg7[%129, %c0_36, %c0_37] : memref<8x8x128xf32, #tpu.memory_space<vmem>>, vector<1x8x128xf32>
    %131 = vector.shape_cast %130 : vector<1x8x128xf32> to vector<8x128xf32>
    %132 = vector.shape_cast %122 : vector<8x128xf32> to vector<1x8x128xf32>
    tpu.vector_store %arg7[%129, %c0_36, %c0_37], %132 {strides = array<i32>} : memref<8x8x128xf32, #tpu.memory_space<vmem>>, vector<1x8x128xf32>,
    %c3_i32 = arith.constant 3 : i32
    %133 = arith.index_cast %c3_i32 : i32 to index
    %c0_38 = arith.constant 0 : index
    %c0_39 = arith.constant 0 : index
    %134 = vector.load %arg1[%133, %c0_38, %c0_39] : memref<8x8x512xbf16, #tpu.memory_space<vmem>>, vector<1x8x512xbf16>
    %135 = vector.shape_cast %134 : vector<1x8x512xbf16> to vector<8x512xbf16>
    %136 = arith.extf %135 : vector<8x512xbf16> to vector<8x512xf32>
    %137 = vector.broadcast %3 : vector<1x512xf32> to vector<8x512xf32>
    %138 = arith.addf %136, %137 : vector<8x512xf32>
    %139 = arith.truncf %124 : vector<8x128xf32> to vector<8x128xbf16>
    %cst_40 = arith.constant dense<0.000000e+00> : vector<8x512xf32>
    %140 = tpu.matmul %139, %4, %cst_40 {dimension_numbers = #tpu.dot_dimension_numbers<[1], [0], [0], [1], [0, 0, 1, 1], [], []>} : vector<8x128xbf16>, vector<128x512xbf16>, vector<8x512xf32> -> vector<8x512xf32>
    %141 = arith.addf %138, %140 : vector<8x512xf32>
    %142 = vector.extract_strided_slice %141 {offsets = [0, 0], sizes = [8, 128], strides = [1, 1]} : vector<8x512xf32> to vector<8x128xf32>
    %143 = arith.negf %142 : vector<8x128xf32>
    %144 = math.exp %143 : vector<8x128xf32>
    %cst_41 = arith.constant 1.000000e+00 : f32
    %145 = vector.broadcast %cst_41 : f32 to vector<8x128xf32>
    %146 = arith.addf %145, %144 : vector<8x128xf32>
    %147 = arith.divf %145, %146 : vector<8x128xf32>
    %148 = vector.extract_strided_slice %141 {offsets = [0, 128], sizes = [8, 128], strides = [1, 1]} : vector<8x512xf32> to vector<8x128xf32>
    %149 = arith.negf %148 : vector<8x128xf32>
    %150 = math.exp %149 : vector<8x128xf32>
    %cst_42 = arith.constant 1.000000e+00 : f32
    %151 = vector.broadcast %cst_42 : f32 to vector<8x128xf32>
    %152 = arith.addf %151, %150 : vector<8x128xf32>
    %153 = arith.divf %151, %152 : vector<8x128xf32>
    %154 = vector.extract_strided_slice %141 {offsets = [0, 256], sizes = [8, 128], strides = [1, 1]} : vector<8x512xf32> to vector<8x128xf32>
    %155 = math.tanh %154 : vector<8x128xf32>
    %156 = vector.extract_strided_slice %141 {offsets = [0, 384], sizes = [8, 128], strides = [1, 1]} : vector<8x512xf32> to vector<8x128xf32>
    %157 = arith.negf %156 : vector<8x128xf32>
    %158 = math.exp %157 : vector<8x128xf32>
    %cst_43 = arith.constant 1.000000e+00 : f32
    %159 = vector.broadcast %cst_43 : f32 to vector<8x128xf32>
    %160 = arith.addf %159, %158 : vector<8x128xf32>
    %161 = arith.divf %159, %160 : vector<8x128xf32>
    %162 = arith.mulf %153, %122 : vector<8x128xf32>
    %163 = arith.mulf %147, %155 : vector<8x128xf32>
    %164 = arith.addf %162, %163 : vector<8x128xf32>
    %165 = math.tanh %164 : vector<8x128xf32>
    %166 = arith.mulf %161, %165 : vector<8x128xf32>
    %167 = arith.index_cast %c3_i32 : i32 to index
    %c0_44 = arith.constant 0 : index
    %c0_45 = arith.constant 0 : index
    %168 = vector.load %arg6[%167, %c0_44, %c0_45] : memref<8x8x128xf32, #tpu.memory_space<vmem>>, vector<1x8x128xf32>
    %169 = vector.shape_cast %168 : vector<1x8x128xf32> to vector<8x128xf32>
    %170 = vector.shape_cast %166 : vector<8x128xf32> to vector<1x8x128xf32>
    tpu.vector_store %arg6[%167, %c0_44, %c0_45], %170 {strides = array<i32>} : memref<8x8x128xf32, #tpu.memory_space<vmem>>, vector<1x8x128xf32>,
    %171 = arith.index_cast %c3_i32 : i32 to index
    %c0_46 = arith.constant 0 : index
    %c0_47 = arith.constant 0 : index
    %172 = vector.load %arg7[%171, %c0_46, %c0_47] : memref<8x8x128xf32, #tpu.memory_space<vmem>>, vector<1x8x128xf32>
    %173 = vector.shape_cast %172 : vector<1x8x128xf32> to vector<8x128xf32>
    %174 = vector.shape_cast %164 : vector<8x128xf32> to vector<1x8x128xf32>
    tpu.vector_store %arg7[%171, %c0_46, %c0_47], %174 {strides = array<i32>} : memref<8x8x128xf32, #tpu.memory_space<vmem>>, vector<1x8x128xf32>,
    %c4_i32 = arith.constant 4 : i32
    %175 = arith.index_cast %c4_i32 : i32 to index
    %c0_48 = arith.constant 0 : index
    %c0_49 = arith.constant 0 : index
    %176 = vector.load %arg1[%175, %c0_48, %c0_49] : memref<8x8x512xbf16, #tpu.memory_space<vmem>>, vector<1x8x512xbf16>
    %177 = vector.shape_cast %176 : vector<1x8x512xbf16> to vector<8x512xbf16>
    %178 = arith.extf %177 : vector<8x512xbf16> to vector<8x512xf32>
    %179 = vector.broadcast %3 : vector<1x512xf32> to vector<8x512xf32>
    %180 = arith.addf %178, %179 : vector<8x512xf32>
    %181 = arith.truncf %166 : vector<8x128xf32> to vector<8x128xbf16>
    %cst_50 = arith.constant dense<0.000000e+00> : vector<8x512xf32>
    %182 = tpu.matmul %181, %4, %cst_50 {dimension_numbers = #tpu.dot_dimension_numbers<[1], [0], [0], [1], [0, 0, 1, 1], [], []>} : vector<8x128xbf16>, vector<128x512xbf16>, vector<8x512xf32> -> vector<8x512xf32>
    %183 = arith.addf %180, %182 : vector<8x512xf32>
    %184 = vector.extract_strided_slice %183 {offsets = [0, 0], sizes = [8, 128], strides = [1, 1]} : vector<8x512xf32> to vector<8x128xf32>
    %185 = arith.negf %184 : vector<8x128xf32>
    %186 = math.exp %185 : vector<8x128xf32>
    %cst_51 = arith.constant 1.000000e+00 : f32
    %187 = vector.broadcast %cst_51 : f32 to vector<8x128xf32>
    %188 = arith.addf %187, %186 : vector<8x128xf32>
    %189 = arith.divf %187, %188 : vector<8x128xf32>
    %190 = vector.extract_strided_slice %183 {offsets = [0, 128], sizes = [8, 128], strides = [1, 1]} : vector<8x512xf32> to vector<8x128xf32>
    %191 = arith.negf %190 : vector<8x128xf32>
    %192 = math.exp %191 : vector<8x128xf32>
    %cst_52 = arith.constant 1.000000e+00 : f32
    %193 = vector.broadcast %cst_52 : f32 to vector<8x128xf32>
    %194 = arith.addf %193, %192 : vector<8x128xf32>
    %195 = arith.divf %193, %194 : vector<8x128xf32>
    %196 = vector.extract_strided_slice %183 {offsets = [0, 256], sizes = [8, 128], strides = [1, 1]} : vector<8x512xf32> to vector<8x128xf32>
    %197 = math.tanh %196 : vector<8x128xf32>
    %198 = vector.extract_strided_slice %183 {offsets = [0, 384], sizes = [8, 128], strides = [1, 1]} : vector<8x512xf32> to vector<8x128xf32>
    %199 = arith.negf %198 : vector<8x128xf32>
    %200 = math.exp %199 : vector<8x128xf32>
    %cst_53 = arith.constant 1.000000e+00 : f32
    %201 = vector.broadcast %cst_53 : f32 to vector<8x128xf32>
    %202 = arith.addf %201, %200 : vector<8x128xf32>
    %203 = arith.divf %201, %202 : vector<8x128xf32>
    %204 = arith.mulf %195, %164 : vector<8x128xf32>
    %205 = arith.mulf %189, %197 : vector<8x128xf32>
    %206 = arith.addf %204, %205 : vector<8x128xf32>
    %207 = math.tanh %206 : vector<8x128xf32>
    %208 = arith.mulf %203, %207 : vector<8x128xf32>
    %209 = arith.index_cast %c4_i32 : i32 to index
    %c0_54 = arith.constant 0 : index
    %c0_55 = arith.constant 0 : index
    %210 = vector.load %arg6[%209, %c0_54, %c0_55] : memref<8x8x128xf32, #tpu.memory_space<vmem>>, vector<1x8x128xf32>
    %211 = vector.shape_cast %210 : vector<1x8x128xf32> to vector<8x128xf32>
    %212 = vector.shape_cast %208 : vector<8x128xf32> to vector<1x8x128xf32>
    tpu.vector_store %arg6[%209, %c0_54, %c0_55], %212 {strides = array<i32>} : memref<8x8x128xf32, #tpu.memory_space<vmem>>, vector<1x8x128xf32>,
    %213 = arith.index_cast %c4_i32 : i32 to index
    %c0_56 = arith.constant 0 : index
    %c0_57 = arith.constant 0 : index
    %214 = vector.load %arg7[%213, %c0_56, %c0_57] : memref<8x8x128xf32, #tpu.memory_space<vmem>>, vector<1x8x128xf32>
    %215 = vector.shape_cast %214 : vector<1x8x128xf32> to vector<8x128xf32>
    %216 = vector.shape_cast %206 : vector<8x128xf32> to vector<1x8x128xf32>
    tpu.vector_store %arg7[%213, %c0_56, %c0_57], %216 {strides = array<i32>} : memref<8x8x128xf32, #tpu.memory_space<vmem>>, vector<1x8x128xf32>,
    %c5_i32 = arith.constant 5 : i32
    %217 = arith.index_cast %c5_i32 : i32 to index
    %c0_58 = arith.constant 0 : index
    %c0_59 = arith.constant 0 : index
    %218 = vector.load %arg1[%217, %c0_58, %c0_59] : memref<8x8x512xbf16, #tpu.memory_space<vmem>>, vector<1x8x512xbf16>
    %219 = vector.shape_cast %218 : vector<1x8x512xbf16> to vector<8x512xbf16>
    %220 = arith.extf %219 : vector<8x512xbf16> to vector<8x512xf32>
    %221 = vector.broadcast %3 : vector<1x512xf32> to vector<8x512xf32>
    %222 = arith.addf %220, %221 : vector<8x512xf32>
    %223 = arith.truncf %208 : vector<8x128xf32> to vector<8x128xbf16>
    %cst_60 = arith.constant dense<0.000000e+00> : vector<8x512xf32>
    %224 = tpu.matmul %223, %4, %cst_60 {dimension_numbers = #tpu.dot_dimension_numbers<[1], [0], [0], [1], [0, 0, 1, 1], [], []>} : vector<8x128xbf16>, vector<128x512xbf16>, vector<8x512xf32> -> vector<8x512xf32>
    %225 = arith.addf %222, %224 : vector<8x512xf32>
    %226 = vector.extract_strided_slice %225 {offsets = [0, 0], sizes = [8, 128], strides = [1, 1]} : vector<8x512xf32> to vector<8x128xf32>
    %227 = arith.negf %226 : vector<8x128xf32>
    %228 = math.exp %227 : vector<8x128xf32>
    %cst_61 = arith.constant 1.000000e+00 : f32
    %229 = vector.broadcast %cst_61 : f32 to vector<8x128xf32>
    %230 = arith.addf %229, %228 : vector<8x128xf32>
    %231 = arith.divf %229, %230 : vector<8x128xf32>
    %232 = vector.extract_strided_slice %225 {offsets = [0, 128], sizes = [8, 128], strides = [1, 1]} : vector<8x512xf32> to vector<8x128xf32>
    %233 = arith.negf %232 : vector<8x128xf32>
    %234 = math.exp %233 : vector<8x128xf32>
    %cst_62 = arith.constant 1.000000e+00 : f32
    %235 = vector.broadcast %cst_62 : f32 to vector<8x128xf32>
    %236 = arith.addf %235, %234 : vector<8x128xf32>
    %237 = arith.divf %235, %236 : vector<8x128xf32>
    %238 = vector.extract_strided_slice %225 {offsets = [0, 256], sizes = [8, 128], strides = [1, 1]} : vector<8x512xf32> to vector<8x128xf32>
    %239 = math.tanh %238 : vector<8x128xf32>
    %240 = vector.extract_strided_slice %225 {offsets = [0, 384], sizes = [8, 128], strides = [1, 1]} : vector<8x512xf32> to vector<8x128xf32>
    %241 = arith.negf %240 : vector<8x128xf32>
    %242 = math.exp %241 : vector<8x128xf32>
    %cst_63 = arith.constant 1.000000e+00 : f32
    %243 = vector.broadcast %cst_63 : f32 to vector<8x128xf32>
    %244 = arith.addf %243, %242 : vector<8x128xf32>
    %245 = arith.divf %243, %244 : vector<8x128xf32>
    %246 = arith.mulf %237, %206 : vector<8x128xf32>
    %247 = arith.mulf %231, %239 : vector<8x128xf32>
    %248 = arith.addf %246, %247 : vector<8x128xf32>
    %249 = math.tanh %248 : vector<8x128xf32>
    %250 = arith.mulf %245, %249 : vector<8x128xf32>
    %251 = arith.index_cast %c5_i32 : i32 to index
    %c0_64 = arith.constant 0 : index
    %c0_65 = arith.constant 0 : index
    %252 = vector.load %arg6[%251, %c0_64, %c0_65] : memref<8x8x128xf32, #tpu.memory_space<vmem>>, vector<1x8x128xf32>
    %253 = vector.shape_cast %252 : vector<1x8x128xf32> to vector<8x128xf32>
    %254 = vector.shape_cast %250 : vector<8x128xf32> to vector<1x8x128xf32>
    tpu.vector_store %arg6[%251, %c0_64, %c0_65], %254 {strides = array<i32>} : memref<8x8x128xf32, #tpu.memory_space<vmem>>, vector<1x8x128xf32>,
    %255 = arith.index_cast %c5_i32 : i32 to index
    %c0_66 = arith.constant 0 : index
    %c0_67 = arith.constant 0 : index
    %256 = vector.load %arg7[%255, %c0_66, %c0_67] : memref<8x8x128xf32, #tpu.memory_space<vmem>>, vector<1x8x128xf32>
    %257 = vector.shape_cast %256 : vector<1x8x128xf32> to vector<8x128xf32>
    %258 = vector.shape_cast %248 : vector<8x128xf32> to vector<1x8x128xf32>
    tpu.vector_store %arg7[%255, %c0_66, %c0_67], %258 {strides = array<i32>} : memref<8x8x128xf32, #tpu.memory_space<vmem>>, vector<1x8x128xf32>,
    %c6_i32 = arith.constant 6 : i32
    %259 = arith.index_cast %c6_i32 : i32 to index
    %c0_68 = arith.constant 0 : index
    %c0_69 = arith.constant 0 : index
    %260 = vector.load %arg1[%259, %c0_68, %c0_69] : memref<8x8x512xbf16, #tpu.memory_space<vmem>>, vector<1x8x512xbf16>
    %261 = vector.shape_cast %260 : vector<1x8x512xbf16> to vector<8x512xbf16>
    %262 = arith.extf %261 : vector<8x512xbf16> to vector<8x512xf32>
    %263 = vector.broadcast %3 : vector<1x512xf32> to vector<8x512xf32>
    %264 = arith.addf %262, %263 : vector<8x512xf32>
    %265 = arith.truncf %250 : vector<8x128xf32> to vector<8x128xbf16>
    %cst_70 = arith.constant dense<0.000000e+00> : vector<8x512xf32>
    %266 = tpu.matmul %265, %4, %cst_70 {dimension_numbers = #tpu.dot_dimension_numbers<[1], [0], [0], [1], [0, 0, 1, 1], [], []>} : vector<8x128xbf16>, vector<128x512xbf16>, vector<8x512xf32> -> vector<8x512xf32>
    %267 = arith.addf %264, %266 : vector<8x512xf32>
    %268 = vector.extract_strided_slice %267 {offsets = [0, 0], sizes = [8, 128], strides = [1, 1]} : vector<8x512xf32> to vector<8x128xf32>
    %269 = arith.negf %268 : vector<8x128xf32>
    %270 = math.exp %269 : vector<8x128xf32>
    %cst_71 = arith.constant 1.000000e+00 : f32
    %271 = vector.broadcast %cst_71 : f32 to vector<8x128xf32>
    %272 = arith.addf %271, %270 : vector<8x128xf32>
    %273 = arith.divf %271, %272 : vector<8x128xf32>
    %274 = vector.extract_strided_slice %267 {offsets = [0, 128], sizes = [8, 128], strides = [1, 1]} : vector<8x512xf32> to vector<8x128xf32>
    %275 = arith.negf %274 : vector<8x128xf32>
    %276 = math.exp %275 : vector<8x128xf32>
    %cst_72 = arith.constant 1.000000e+00 : f32
    %277 = vector.broadcast %cst_72 : f32 to vector<8x128xf32>
    %278 = arith.addf %277, %276 : vector<8x128xf32>
    %279 = arith.divf %277, %278 : vector<8x128xf32>
    %280 = vector.extract_strided_slice %267 {offsets = [0, 256], sizes = [8, 128], strides = [1, 1]} : vector<8x512xf32> to vector<8x128xf32>
    %281 = math.tanh %280 : vector<8x128xf32>
    %282 = vector.extract_strided_slice %267 {offsets = [0, 384], sizes = [8, 128], strides = [1, 1]} : vector<8x512xf32> to vector<8x128xf32>
    %283 = arith.negf %282 : vector<8x128xf32>
    %284 = math.exp %283 : vector<8x128xf32>
    %cst_73 = arith.constant 1.000000e+00 : f32
    %285 = vector.broadcast %cst_73 : f32 to vector<8x128xf32>
    %286 = arith.addf %285, %284 : vector<8x128xf32>
    %287 = arith.divf %285, %286 : vector<8x128xf32>
    %288 = arith.mulf %279, %248 : vector<8x128xf32>
    %289 = arith.mulf %273, %281 : vector<8x128xf32>
    %290 = arith.addf %288, %289 : vector<8x128xf32>
    %291 = math.tanh %290 : vector<8x128xf32>
    %292 = arith.mulf %287, %291 : vector<8x128xf32>
    %293 = arith.index_cast %c6_i32 : i32 to index
    %c0_74 = arith.constant 0 : index
    %c0_75 = arith.constant 0 : index
    %294 = vector.load %arg6[%293, %c0_74, %c0_75] : memref<8x8x128xf32, #tpu.memory_space<vmem>>, vector<1x8x128xf32>
    %295 = vector.shape_cast %294 : vector<1x8x128xf32> to vector<8x128xf32>
    %296 = vector.shape_cast %292 : vector<8x128xf32> to vector<1x8x128xf32>
    tpu.vector_store %arg6[%293, %c0_74, %c0_75], %296 {strides = array<i32>} : memref<8x8x128xf32, #tpu.memory_space<vmem>>, vector<1x8x128xf32>,
    %297 = arith.index_cast %c6_i32 : i32 to index
    %c0_76 = arith.constant 0 : index
    %c0_77 = arith.constant 0 : index
    %298 = vector.load %arg7[%297, %c0_76, %c0_77] : memref<8x8x128xf32, #tpu.memory_space<vmem>>, vector<1x8x128xf32>
    %299 = vector.shape_cast %298 : vector<1x8x128xf32> to vector<8x128xf32>
    %300 = vector.shape_cast %290 : vector<8x128xf32> to vector<1x8x128xf32>
    tpu.vector_store %arg7[%297, %c0_76, %c0_77], %300 {strides = array<i32>} : memref<8x8x128xf32, #tpu.memory_space<vmem>>, vector<1x8x128xf32>,
    %c7_i32 = arith.constant 7 : i32
    %301 = arith.index_cast %c7_i32 : i32 to index
    %c0_78 = arith.constant 0 : index
    %c0_79 = arith.constant 0 : index
    %302 = vector.load %arg1[%301, %c0_78, %c0_79] : memref<8x8x512xbf16, #tpu.memory_space<vmem>>, vector<1x8x512xbf16>
    %303 = vector.shape_cast %302 : vector<1x8x512xbf16> to vector<8x512xbf16>
    %304 = arith.extf %303 : vector<8x512xbf16> to vector<8x512xf32>
    %305 = vector.broadcast %3 : vector<1x512xf32> to vector<8x512xf32>
    %306 = arith.addf %304, %305 : vector<8x512xf32>
    %307 = arith.truncf %292 : vector<8x128xf32> to vector<8x128xbf16>
    %cst_80 = arith.constant dense<0.000000e+00> : vector<8x512xf32>
    %308 = tpu.matmul %307, %4, %cst_80 {dimension_numbers = #tpu.dot_dimension_numbers<[1], [0], [0], [1], [0, 0, 1, 1], [], []>} : vector<8x128xbf16>, vector<128x512xbf16>, vector<8x512xf32> -> vector<8x512xf32>
    %309 = arith.addf %306, %308 : vector<8x512xf32>
    %310 = vector.extract_strided_slice %309 {offsets = [0, 0], sizes = [8, 128], strides = [1, 1]} : vector<8x512xf32> to vector<8x128xf32>
    %311 = arith.negf %310 : vector<8x128xf32>
    %312 = math.exp %311 : vector<8x128xf32>
    %cst_81 = arith.constant 1.000000e+00 : f32
    %313 = vector.broadcast %cst_81 : f32 to vector<8x128xf32>
    %314 = arith.addf %313, %312 : vector<8x128xf32>
    %315 = arith.divf %313, %314 : vector<8x128xf32>
    %316 = vector.extract_strided_slice %309 {offsets = [0, 128], sizes = [8, 128], strides = [1, 1]} : vector<8x512xf32> to vector<8x128xf32>
    %317 = arith.negf %316 : vector<8x128xf32>
    %318 = math.exp %317 : vector<8x128xf32>
    %cst_82 = arith.constant 1.000000e+00 : f32
    %319 = vector.broadcast %cst_82 : f32 to vector<8x128xf32>
    %320 = arith.addf %319, %318 : vector<8x128xf32>
    %321 = arith.divf %319, %320 : vector<8x128xf32>
    %322 = vector.extract_strided_slice %309 {offsets = [0, 256], sizes = [8, 128], strides = [1, 1]} : vector<8x512xf32> to vector<8x128xf32>
    %323 = math.tanh %322 : vector<8x128xf32>
    %324 = vector.extract_strided_slice %309 {offsets = [0, 384], sizes = [8, 128], strides = [1, 1]} : vector<8x512xf32> to vector<8x128xf32>
    %325 = arith.negf %324 : vector<8x128xf32>
    %326 = math.exp %325 : vector<8x128xf32>
    %cst_83 = arith.constant 1.000000e+00 : f32
    %327 = vector.broadcast %cst_83 : f32 to vector<8x128xf32>
    %328 = arith.addf %327, %326 : vector<8x128xf32>
    %329 = arith.divf %327, %328 : vector<8x128xf32>
    %330 = arith.mulf %321, %290 : vector<8x128xf32>
    %331 = arith.mulf %315, %323 : vector<8x128xf32>
    %332 = arith.addf %330, %331 : vector<8x128xf32>
    %333 = math.tanh %332 : vector<8x128xf32>
    %334 = arith.mulf %329, %333 : vector<8x128xf32>
    %335 = arith.index_cast %c7_i32 : i32 to index
    %c0_84 = arith.constant 0 : index
    %c0_85 = arith.constant 0 : index
    %336 = vector.load %arg6[%335, %c0_84, %c0_85] : memref<8x8x128xf32, #tpu.memory_space<vmem>>, vector<1x8x128xf32>
    %337 = vector.shape_cast %336 : vector<1x8x128xf32> to vector<8x128xf32>
    %338 = vector.shape_cast %334 : vector<8x128xf32> to vector<1x8x128xf32>
    tpu.vector_store %arg6[%335, %c0_84, %c0_85], %338 {strides = array<i32>} : memref<8x8x128xf32, #tpu.memory_space<vmem>>, vector<1x8x128xf32>,
    %339 = arith.index_cast %c7_i32 : i32 to index
    %c0_86 = arith.constant 0 : index
    %c0_87 = arith.constant 0 : index
    %340 = vector.load %arg7[%339, %c0_86, %c0_87] : memref<8x8x128xf32, #tpu.memory_space<vmem>>, vector<1x8x128xf32>
    %341 = vector.shape_cast %340 : vector<1x8x128xf32> to vector<8x128xf32>
    %342 = vector.shape_cast %332 : vector<8x128xf32> to vector<1x8x128xf32>
    tpu.vector_store %arg7[%339, %c0_86, %c0_87], %342 {strides = array<i32>} : memref<8x8x128xf32, #tpu.memory_space<vmem>>, vector<1x8x128xf32>,
    %c8_i32 = arith.constant 8 : i32
    %c0_88 = arith.constant 0 : index
    %c0_89 = arith.constant 0 : index
    %343 = vector.load %arg8[%c0_88, %c0_89] : memref<8x128xf32, #tpu.memory_space<vmem>>, vector<8x128xf32>
    tpu.vector_store %arg8[%c0_88, %c0_89], %334 {strides = array<i32>} : memref<8x128xf32, #tpu.memory_space<vmem>>, vector<8x128xf32>,
    %c0_90 = arith.constant 0 : index
    %c0_91 = arith.constant 0 : index
    %344 = vector.load %arg9[%c0_90, %c0_91] : memref<8x128xf32, #tpu.memory_space<vmem>>, vector<8x128xf32>
    tpu.vector_store %arg9[%c0_90, %c0_91], %332 {strides = array<i32>} : memref<8x128xf32, #tpu.memory_space<vmem>>, vector<8x128xf32>,
    return
  }
  func.func @transform_0(%arg0: i32) -> (i32, i32, i32) {
    %c0_i32 = arith.constant 0 : i32
    %c0_i32_0 = arith.constant 0 : i32
    %c0_i32_1 = arith.constant 0 : i32
    return %arg0, %c0_i32, %c0_i32_0 : i32, i32, i32
  }
  func.func @transform_1(%arg0: i32) -> (i32, i32) {
    %c0_i32 = arith.constant 0 : i32
    %c0_i32_0 = arith.constant 0 : i32
    %c0_i32_1 = arith.constant 0 : i32
    return %c0_i32, %c0_i32_0 : i32, i32
  }
  func.func @transform_2(%arg0: i32) -> (i32, i32) {
    %c0_i32 = arith.constant 0 : i32
    %c0_i32_0 = arith.constant 0 : i32
    %c0_i32_1 = arith.constant 0 : i32
    return %c0_i32, %c0_i32_0 : i32, i32
  }
  func.func @transform_3(%arg0: i32) -> (i32, i32) {
    %c0_i32 = arith.constant 0 : i32
    %c0_i32_0 = arith.constant 0 : i32
    %c0_i32_1 = arith.constant 0 : i32
    return %c0_i32, %c0_i32_0 : i32, i32
  }
  func.func @transform_4(%arg0: i32) -> (i32, i32) {
    %c0_i32 = arith.constant 0 : i32
    %c0_i32_0 = arith.constant 0 : i32
    %c0_i32_1 = arith.constant 0 : i32
    return %c0_i32, %c0_i32_0 : i32, i32
  }
  func.func @transform_5(%arg0: i32) -> (i32, i32, i32) {
    %c0_i32 = arith.constant 0 : i32
    %c0_i32_0 = arith.constant 0 : i32
    %c0_i32_1 = arith.constant 0 : i32
    return %arg0, %c0_i32, %c0_i32_0 : i32, i32, i32
  }
  func.func @transform_6(%arg0: i32) -> (i32, i32, i32) {
    %c0_i32 = arith.constant 0 : i32
    %c0_i32_0 = arith.constant 0 : i32
    %c0_i32_1 = arith.constant 0 : i32
    return %arg0, %c0_i32, %c0_i32_0 : i32, i32, i32
  }
}

module attributes {stable_mosaic.version = 11 : i64} {
  func.func @_vocab_proj_argmax_kernel(%arg0: i32, %arg1: i32, %arg2: memref<64x256xf32, #tpu.memory_space<vmem>>, %arg3: memref<256x1024xbf16, #tpu.memory_space<vmem>>, %arg4: memref<1x1024xf32, #tpu.memory_space<vmem>>, %arg5: memref<64x1024xf32, #tpu.memory_space<vmem>>, %arg6: memref<64x1xi32, #tpu.memory_space<vmem>>, %arg7: memref<64x1xf32, #tpu.memory_space<vmem>>, %arg8: memref<64x1xi32, #tpu.memory_space<vmem>>) attributes {dimension_semantics = [#tpu.dimension_semantics<parallel>, #tpu.dimension_semantics<arbitrary>], iteration_bounds = array<i64: 1, 1>, scalar_prefetch = 0 : i64, scratch_operands = 2 : i64, tpu.core_type = #tpu.core_type<tc>, window_params = [{transform_indices = @transform_0, window_bounds = array<i64: 64, 256>}, {transform_indices = @transform_1, window_bounds = array<i64: 256, 1024>}, {transform_indices = @transform_2, window_bounds = array<i64: 1, 1024>}, {transform_indices = @transform_3, window_bounds = array<i64: 64, 1024>}, {transform_indices = @transform_4, window_bounds = array<i64: 64, 1>}]} {
    %c0 = arith.constant 0 : index
    %c0_0 = arith.constant 0 : index
    %0 = vector.load %arg2[%c0, %c0_0] : memref<64x256xf32, #tpu.memory_space<vmem>>, vector<64x256xf32>
    %1 = arith.truncf %0 : vector<64x256xf32> to vector<64x256xbf16>
    %c0_1 = arith.constant 0 : index
    %c0_2 = arith.constant 0 : index
    %2 = vector.load %arg3[%c0_1, %c0_2] : memref<256x1024xbf16, #tpu.memory_space<vmem>>, vector<256x1024xbf16>
    %cst = arith.constant dense<0.000000e+00> : vector<64x1024xf32>
    %3 = tpu.matmul %1, %2, %cst {dimension_numbers = #tpu.dot_dimension_numbers<[1], [0], [0], [1], [0, 0, 1, 1], [], []>} : vector<64x256xbf16>, vector<256x1024xbf16>, vector<64x1024xf32> -> vector<64x1024xf32>
    %c0_3 = arith.constant 0 : index
    %c0_4 = arith.constant 0 : index
    %4 = vector.load %arg4[%c0_3, %c0_4] : memref<1x1024xf32, #tpu.memory_space<vmem>>, vector<1x1024xf32>
    %5 = vector.broadcast %4 : vector<1x1024xf32> to vector<64x1024xf32>
    %6 = arith.addf %3, %5 : vector<64x1024xf32>
    %c0_5 = arith.constant 0 : index
    %c0_6 = arith.constant 0 : index
    %7 = vector.load %arg5[%c0_5, %c0_6] : memref<64x1024xf32, #tpu.memory_space<vmem>>, vector<64x1024xf32>
    tpu.vector_store %arg5[%c0_5, %c0_6], %6 {strides = array<i32>} : memref<64x1024xf32, #tpu.memory_space<vmem>>, vector<64x1024xf32>,
    %c0_i32 = arith.constant 0 : i32
    %8 = arith.cmpi eq, %arg1, %c0_i32 : i32
    %9 = arith.extui %8 : i1 to i32
    %c0_i32_7 = arith.constant 0 : i32
    %10 = arith.cmpi ne, %9, %c0_i32_7 : i32
    scf.if %10 {
      %cst_23 = arith.constant 0xFF800000 : f32
      %34 = vector.broadcast %cst_23 : f32 to vector<64x1xf32>
      %c0_24 = arith.constant 0 : index
      %c0_25 = arith.constant 0 : index
      %35 = vector.load %arg7[%c0_24, %c0_25] : memref<64x1xf32, #tpu.memory_space<vmem>>, vector<64x1xf32>
      tpu.vector_store %arg7[%c0_24, %c0_25], %34 {strides = array<i32>} : memref<64x1xf32, #tpu.memory_space<vmem>>, vector<64x1xf32>,
      %c0_i32_26 = arith.constant 0 : i32
      %36 = vector.broadcast %c0_i32_26 : i32 to vector<64x1xi32>
      %c0_27 = arith.constant 0 : index
      %c0_28 = arith.constant 0 : index
      %37 = vector.load %arg8[%c0_27, %c0_28] : memref<64x1xi32, #tpu.memory_space<vmem>>, vector<64x1xi32>
      tpu.vector_store %arg8[%c0_27, %c0_28], %36 {strides = array<i32>} : memref<64x1xi32, #tpu.memory_space<vmem>>, vector<64x1xi32>,
    } else {
    }
    %11 = tpu.iota {dimensions = array<i32: 1>} : vector<64x1024xi32>
    %cst_8 = arith.constant dense<0xFF800000> : vector<64xf32>
    %12 = vector.multi_reduction <maximumf>, %6, %cst_8 [1] : vector<64x1024xf32> to vector<64xf32>
    %13 = vector.shape_cast %12 : vector<64xf32> to vector<64x1xf32>
    %14 = vector.broadcast %13 : vector<64x1xf32> to vector<64x1024xf32>
    %15 = arith.cmpf oeq, %6, %14 : vector<64x1024xf32>
    %c1024_i32 = arith.constant 1024 : i32
    %16 = vector.broadcast %c1024_i32 : i32 to vector<64x1024xi32>
    %17 = arith.select %15, %11, %16 : vector<64x1024xi1>, vector<64x1024xi32>
    %cst_9 = arith.constant dense<2147483647> : vector<64xi32>
    %18 = vector.multi_reduction <minsi>, %17, %cst_9 [1] : vector<64x1024xi32> to vector<64xi32>
    %19 = vector.shape_cast %18 : vector<64xi32> to vector<64x1xi32>
    %c1024_i32_10 = arith.constant 1024 : i32
    %20 = arith.muli %arg1, %c1024_i32_10 : i32
    %21 = vector.broadcast %20 : i32 to vector<64x1xi32>
    %22 = arith.addi %19, %21 : vector<64x1xi32>
    %c0_11 = arith.constant 0 : index
    %c0_12 = arith.constant 0 : index
    %23 = vector.load %arg7[%c0_11, %c0_12] : memref<64x1xf32, #tpu.memory_space<vmem>>, vector<64x1xf32>
    %24 = arith.cmpf ogt, %13, %23 : vector<64x1xf32>
    %c0_13 = arith.constant 0 : index
    %c0_14 = arith.constant 0 : index
    %25 = vector.load %arg8[%c0_13, %c0_14] : memref<64x1xi32, #tpu.memory_space<vmem>>, vector<64x1xi32>
    %26 = arith.select %24, %22, %25 : vector<64x1xi1>, vector<64x1xi32>
    %c0_15 = arith.constant 0 : index
    %c0_16 = arith.constant 0 : index
    %27 = vector.load %arg8[%c0_15, %c0_16] : memref<64x1xi32, #tpu.memory_space<vmem>>, vector<64x1xi32>
    tpu.vector_store %arg8[%c0_15, %c0_16], %26 {strides = array<i32>} : memref<64x1xi32, #tpu.memory_space<vmem>>, vector<64x1xi32>,
    %c0_17 = arith.constant 0 : index
    %c0_18 = arith.constant 0 : index
    %28 = vector.load %arg7[%c0_17, %c0_18] : memref<64x1xf32, #tpu.memory_space<vmem>>, vector<64x1xf32>
    %29 = arith.select %24, %13, %28 : vector<64x1xi1>, vector<64x1xf32>
    %c0_19 = arith.constant 0 : index
    %c0_20 = arith.constant 0 : index
    %30 = vector.load %arg7[%c0_19, %c0_20] : memref<64x1xf32, #tpu.memory_space<vmem>>, vector<64x1xf32>
    tpu.vector_store %arg7[%c0_19, %c0_20], %29 {strides = array<i32>} : memref<64x1xf32, #tpu.memory_space<vmem>>, vector<64x1xf32>,
    %c0_i32_21 = arith.constant 0 : i32
    %31 = arith.cmpi eq, %arg1, %c0_i32_21 : i32
    %32 = arith.extui %31 : i1 to i32
    %c0_i32_22 = arith.constant 0 : i32
    %33 = arith.cmpi ne, %32, %c0_i32_22 : i32
    scf.if %33 {
      %c0_23 = arith.constant 0 : index
      %c0_24 = arith.constant 0 : index
      %34 = vector.load %arg8[%c0_23, %c0_24] : memref<64x1xi32, #tpu.memory_space<vmem>>, vector<64x1xi32>
      %c0_25 = arith.constant 0 : index
      %c0_26 = arith.constant 0 : index
      %35 = vector.load %arg6[%c0_25, %c0_26] : memref<64x1xi32, #tpu.memory_space<vmem>>, vector<64x1xi32>
      tpu.vector_store %arg6[%c0_25, %c0_26], %34 {strides = array<i32>} : memref<64x1xi32, #tpu.memory_space<vmem>>, vector<64x1xi32>,
    } else {
    }
    return
  }
  func.func @transform_0(%arg0: i32, %arg1: i32) -> (i32, i32) {
    %c0_i32 = arith.constant 0 : i32
    %c0_i32_0 = arith.constant 0 : i32
    return %arg0, %c0_i32 : i32, i32
  }
  func.func @transform_1(%arg0: i32, %arg1: i32) -> (i32, i32) {
    %c0_i32 = arith.constant 0 : i32
    %c0_i32_0 = arith.constant 0 : i32
    return %c0_i32, %arg1 : i32, i32
  }
  func.func @transform_2(%arg0: i32, %arg1: i32) -> (i32, i32) {
    %c0_i32 = arith.constant 0 : i32
    %c0_i32_0 = arith.constant 0 : i32
    return %c0_i32, %arg1 : i32, i32
  }
  func.func @transform_3(%arg0: i32, %arg1: i32) -> (i32, i32) {
    %c0_i32 = arith.constant 0 : i32
    return %arg0, %arg1 : i32, i32
  }
  func.func @transform_4(%arg0: i32, %arg1: i32) -> (i32, i32) {
    %c0_i32 = arith.constant 0 : i32
    %c0_i32_0 = arith.constant 0 : i32
    return %arg0, %c0_i32 : i32, i32
  }
}

</mosaic_0001>

<llo_original>
// kernel: squeeze.1
$region0: #{squeeze.1}
  %s0 = inlined_call_operand.vmem [shape: s32[64], index: 0, kind: input, shape index: {}]
  %s1 = inlined_call_operand.hbm [shape: s32[8,8], index: 1, kind: output, shape index: {}]
  $region1: #{squeeze.1} parent=0
    #allocation0 [shape = 'u8[4096]{0}', space=vmem, size = 0x1000, scoped, tag = 'operand span for operand 1']
    #allocation1 [shape = 's32[1]{0}', space=sflag, size = 0x4, scoped, tag = 'scoped memory for squeeze.1']
    #allocation2 [shape = 'u8[4096]{0}', space=vmem, size = 0x1000, scoped, tag = 'scoped mem for input reshape']
    %2 = vsyncpa [#allocation1], 0
    %s4 = sshllo.u32 0, 1
    %v5 = vld [vmem:[%s0] sm:%s4]
    %6 = vst [vmem:[#allocation2] sm:%s4] %v5
    %v7 = vld [vmem:[#allocation2] sm:$0x1]
    %vm8 = vcmask 64512
    %9 = vst.msk [vmem:[#allocation0] sm:$0x1] %vm8, %v7
    %v10 = vld [vmem:[#allocation2] sm:$0x1]
    %11 = vrot.lane.b32.xlu0 %v10, 120
    %v12 = vpop.permute.xlu0 %11
    %vm13 = vcmask 64512
    %s14 = scalar_lea.vmem [#allocation0], 1
    %15 = vst.msk [vmem:[%s14] sm:$0x1] %vm13, %v12
    %v16 = vld [vmem:[#allocation2] sm:$0x1]
    %17 = vrot.lane.b32.xlu0 %v16, 112
    %v18 = vpop.permute.xlu0 %17
    %vm19 = vcmask 64512
    %s20 = scalar_lea.vmem [#allocation0], 2
    %21 = vst.msk [vmem:[%s20] sm:$0x1] %vm19, %v18
    %v22 = vld [vmem:[#allocation2] sm:$0x1]
    %23 = vrot.lane.b32.xlu0 %v22, 104
    %v24 = vpop.permute.xlu0 %23
    %vm25 = vcmask 64512
    %s26 = scalar_lea.vmem [#allocation0], 3
    %27 = vst.msk [vmem:[%s26] sm:$0x1] %vm25, %v24
    %v28 = vld [vmem:[#allocation2] sm:$0x1]
    %29 = vrot.lane.b32.xlu0 %v28, 96
    %v30 = vpop.permute.xlu0 %29
    %vm31 = vcmask 64512
    %s32 = scalar_lea.vmem [#allocation0], 4
    %33 = vst.msk [vmem:[%s32] sm:$0x1] %vm31, %v30
    %v34 = vld [vmem:[#allocation2] sm:$0x1]
    %35 = vrot.lane.b32.xlu0 %v34, 88
    %v36 = vpop.permute.xlu0 %35
    %vm37 = vcmask 64512
    %s38 = scalar_lea.vmem [#allocation0], 5
    %39 = vst.msk [vmem:[%s38] sm:$0x1] %vm37, %v36
    %v40 = vld [vmem:[#allocation2] sm:$0x1]
    %41 = vrot.lane.b32.xlu0 %v40, 80
    %v42 = vpop.permute.xlu0 %41
    %vm43 = vcmask 64512
    %s44 = scalar_lea.vmem [#allocation0], 6
    %45 = vst.msk [vmem:[%s44] sm:$0x1] %vm43, %v42
    %v46 = vld [vmem:[#allocation2] sm:$0x1]
    %47 = vrot.lane.b32.xlu0 %v46, 72
    %v48 = vpop.permute.xlu0 %47
    %vm49 = vcmask 64512
    %s50 = scalar_lea.vmem [#allocation0], 7
    %51 = vst.msk [vmem:[%s50] sm:$0x1] %vm49, %v48
    %s53 = ssub.s32 128, 128
    %54 = vsyncadd [#allocation1], %s53
    %s56 = sshll.u32 [#allocation0], 4
    %s57 = int_to_ptr.vmem [resolvable:$true] %s56
    %59 = dma.vmem_to_hbm [thread:$0]  %s57, 128, %s1, [#allocation1]
    %60 = dma.done [#allocation1], 128
    %61 = vsyncpa [#allocation1], 1

// kernel: simple_rnn_decoder_forward.2
$region0: #{simple_rnn_decoder_forward.2}
  #allocation0 [shape = 'u32[]', space=smem, size = 0x4, offset = 0x4, fixed_abs, tag = 'smem constant byte address 0x4 - core index']
  #allocation1 [shape = 'u32[144,128]{1,0:T(1,128)}', space=vmem, size = 0x12000, scoped, tag = 'internal scratch']
  #allocation2 [shape = 'f32[8,128]{1,0:T(8,128)}', space=vmem, size = 0x1000, scoped, tag = 'scratch operand']
  #allocation3 [shape = 'f32[8,128]{1,0:T(8,128)}', space=vmem, size = 0x1000, scoped, tag = 'scratch operand']
  %s0 = inlined_call_operand.vmem [shape: bf16[8,8,512], index: 0, kind: input, shape index: {}]
  %s1 = inlined_call_operand.vmem [shape: f32[1,512], index: 1, kind: input, shape index: {}]
  %s2 = inlined_call_operand.vmem [shape: bf16[128,512], index: 2, kind: input, shape index: {}]
  %s3 = inlined_call_operand.hbm [shape: f32[8,128], index: 3, kind: input, shape index: {}]
  %s4 = inlined_call_operand.hbm [shape: f32[8,128], index: 4, kind: input, shape index: {}]
  %s5 = inlined_call_operand.vmem [shape: f32[8,8,128], index: 5, kind: output, shape index: {0}]
  %s6 = inlined_call_operand.vmem [shape: f32[8,8,128], index: 6, kind: output, shape index: {1}]
  %7 = xla_tuple %s5, %s6
  %s8 = sld [smem:[#allocation0]]
  $region50: #{simple_rnn_decoder_forward.2} parent=0
    _
  %s10 = ssub.s32 1, %s8
  %s11 = scalar_select 0, %s10, %s8
  $region1: #{simple_rnn_decoder_forward.2} parent=0
    #allocation4 [shape = 'u8[4096]{0}', space=vmem, size = 0x1000, scoped, tag = 'input window, operand 3, single buffered']
    #allocation5 [shape = 's32[1]{0}', space=sflag, size = 0x4, scoped, tag = 'scoped memory for simple_rnn_decoder_forward.2']
    #allocation6 [shape = 'u8[4096]{0}', space=vmem, size = 0x1000, scoped, tag = 'input window, operand 4, single buffered']
    #allocation7 [shape = 's32[1]{0}', space=sflag, size = 0x4, scoped, tag = 'scoped memory for simple_rnn_decoder_forward.2']
    %12 = vsyncpa [#allocation5], 0
    %13 = vsyncpa [#allocation7], 0
    // Predicated region
    $region2: #{simple_rnn_decoder_forward.2} parent=1 // pred_check
      _
    $region3: #{simple_rnn_decoder_forward.2} parent=1 // pred_check_branch
      %15 = sbr.rel (0) target = $region5
    $region4: #{simple_rnn_decoder_forward.2} parent=1 // pred_region
      _
    $region5: #{simple_rnn_decoder_forward.2} parent=1 // pred_fallthru
      _
    // Predicated region
    $region6: #{simple_rnn_decoder_forward.2} parent=1 // pred_check
      _
    $region7: #{simple_rnn_decoder_forward.2} parent=1 // pred_check_branch
      %17 = sbr.rel (0) target = $region9
    $region8: #{simple_rnn_decoder_forward.2} parent=1 // pred_region
      _
    $region9: #{simple_rnn_decoder_forward.2} parent=1 // pred_fallthru
      _
    // Predicated region
    $region10: #{simple_rnn_decoder_forward.2} parent=1 // pred_check
      _
    $region11: #{simple_rnn_decoder_forward.2} parent=1 // pred_check_branch
      %19 = sbr.rel (0) target = $region13
    $region12: #{simple_rnn_decoder_forward.2} parent=1 // pred_region
      _
    $region13: #{simple_rnn_decoder_forward.2} parent=1 // pred_fallthru
      _
    // Predicated region
    $region14: #{simple_rnn_decoder_forward.2} parent=1 // pred_check
      _
    $region15: #{simple_rnn_decoder_forward.2} parent=1 // pred_check_branch
      %21 = sbr.rel (0) target = $region17
    $region16: #{simple_rnn_decoder_forward.2} parent=1 // pred_region
      %s23 = ssub.s32 128, 128
      %24 = vsyncadd [#allocation5], %s23
      %s26 = sshll.u32 [#allocation4], 4
      %s27 = int_to_ptr.vmem [resolvable:$true] %s26
      %29 = dma.hbm_to_vmem [thread:$0]  %s3, 128, %s27, [#allocation5]
    $region17: #{simple_rnn_decoder_forward.2} parent=1 // pred_fallthru
      _
    // Predicated region
    $region18: #{simple_rnn_decoder_forward.2} parent=1 // pred_check
      _
    $region19: #{simple_rnn_decoder_forward.2} parent=1 // pred_check_branch
      %31 = sbr.rel (0) target = $region21
    $region20: #{simple_rnn_decoder_forward.2} parent=1 // pred_region
      %s33 = ssub.s32 128, 128
      %34 = vsyncadd [#allocation7], %s33
      %s36 = sshll.u32 [#allocation6], 4
      %s37 = int_to_ptr.vmem [resolvable:$true] %s36
      %39 = dma.hbm_to_vmem [thread:$0]  %s4, 128, %s37, [#allocation7]
    $region21: #{simple_rnn_decoder_forward.2} parent=1 // pred_fallthru
      _
    // Predicated region
    $region22: #{simple_rnn_decoder_forward.2} parent=1 // pred_check
      _
    $region23: #{simple_rnn_decoder_forward.2} parent=1 // pred_check_branch
      %41 = sbr.rel (0) target = $region25
    $region24: #{simple_rnn_decoder_forward.2} parent=1 // pred_region
      %42 = dma.done [#allocation5], 128
    $region25: #{simple_rnn_decoder_forward.2} parent=1 // pred_fallthru
      _
    // Predicated region
    $region26: #{simple_rnn_decoder_forward.2} parent=1 // pred_check
      _
    $region27: #{simple_rnn_decoder_forward.2} parent=1 // pred_check_branch
      %44 = sbr.rel (0) target = $region29
    $region28: #{simple_rnn_decoder_forward.2} parent=1 // pred_region
      %45 = dma.done [#allocation7], 128
    $region29: #{simple_rnn_decoder_forward.2} parent=1 // pred_fallthru
      _
    %p47 = scmp.eq.s32.totalorder 0, 0
    // Predicated region
    $region30: #{simple_rnn_decoder_forward.2} parent=1 // pred_check
      %p48 = pneg %p47
    $region31: #{simple_rnn_decoder_forward.2} parent=1 // pred_check_branch
      %50 = sbr.rel (%p48) target = $region33
    $region32: #{simple_rnn_decoder_forward.2} parent=1 // pred_region
      %v51 = vld [vmem:[#allocation4] sm:$0xff]
      %52 = vst [vmem:[#allocation2] sm:$0xff] %v51
      %v53 = vld [vmem:[#allocation6] sm:$0xff]
      %54 = vst [vmem:[#allocation3] sm:$0xff] %v53
    $region33: #{simple_rnn_decoder_forward.2} parent=1 // pred_fallthru
      _
    %v55 = vld [vmem:[%s1] sm:$0xf]
    %v56 = vld [vmem:[%s2] sm:$0xff]
    %v57 = vld [vmem:[%s2 + $0x8] sm:$0xff]
    %v58 = vld [vmem:[%s2 + $0x10] sm:$0xff]
    %v59 = vld [vmem:[%s2 + $0x18] sm:$0xff]
    %v60 = vld [vmem:[%s2 + $0x20] sm:$0xff]
    %v61 = vld [vmem:[%s2 + $0x28] sm:$0xff]
    %v62 = vld [vmem:[%s2 + $0x30] sm:$0xff]
    %v63 = vld [vmem:[%s2 + $0x38] sm:$0xff]
    %v64 = vld [vmem:[%s2 + $0x40] sm:$0xff]
    %v65 = vld [vmem:[%s2 + $0x48] sm:$0xff]
    %v66 = vld [vmem:[%s2 + $0x50] sm:$0xff]
    %v67 = vld [vmem:[%s2 + $0x58] sm:$0xff]
    %v68 = vld [vmem:[%s2 + $0x60] sm:$0xff]
    %v69 = vld [vmem:[%s2 + $0x68] sm:$0xff]
    %v70 = vld [vmem:[%s2 + $0x70] sm:$0xff]
    %v71 = vld [vmem:[%s2 + $0x78] sm:$0xff]
    %v72 = vld [vmem:[%s2 + $0x80] sm:$0xff]
    %v73 = vld [vmem:[%s2 + $0x88] sm:$0xff]
    %v74 = vld [vmem:[%s2 + $0x90] sm:$0xff]
    %v75 = vld [vmem:[%s2 + $0x98] sm:$0xff]
    %v76 = vld [vmem:[%s2 + $0xa0] sm:$0xff]
    %v77 = vld [vmem:[%s2 + $0xa8] sm:$0xff]
    %v78 = vld [vmem:[%s2 + $0xb0] sm:$0xff]
    %v79 = vld [vmem:[%s2 + $0xb8] sm:$0xff]
    %v80 = vld [vmem:[%s2 + $0xc0] sm:$0xff]
    %v81 = vld [vmem:[%s2 + $0xc8] sm:$0xff]
    %v82 = vld [vmem:[%s2 + $0xd0] sm:$0xff]
    %v83 = vld [vmem:[%s2 + $0xd8] sm:$0xff]
    %v84 = vld [vmem:[%s2 + $0xe0] sm:$0xff]
    %v85 = vld [vmem:[%s2 + $0xe8] sm:$0xff]
    %v86 = vld [vmem:[%s2 + $0xf0] sm:$0xff]
    %v87 = vld [vmem:[%s2 + $0xf8] sm:$0xff]
    %v88 = vld [vmem:[#allocation2] sm:$0xff]
    %v89 = vld [vmem:[#allocation3] sm:$0xff]
    %v90 = vld [vmem:[%s0] sm:$0xff]
    %v91 = vld [vmem:[%s0 + $0x8] sm:$0xff]
    %v92 = vunpack.c.l.bf16 %v90
    %v93 = vunpack.c.h.bf16 %v90
    %v94 = vunpack.c.l.bf16 %v91
    %v95 = vunpack.c.h.bf16 %v91
    %v97 = vlaneseq
    %v98 = vshrl.u32 %v97, 7
    %v99 = vsub.s32 0, %v98
    %v100 = vrot.slane %v55, %v99
    %v101 = vlaneseq
    %v102 = vshrl.u32 %v101, 7
    %v103 = vsub.s32 1, %v102
    %v104 = vrot.slane %v55, %v103
    %v105 = vlaneseq
    %v106 = vshrl.u32 %v105, 7
    %v107 = vsub.s32 2, %v106
    %v108 = vrot.slane %v55, %v107
    %v109 = vlaneseq
    %v110 = vshrl.u32 %v109, 7
    %v111 = vsub.s32 3, %v110
    %v112 = vrot.slane %v55, %v111
    %v117 = vadd.f32 %v92, %v100
    %v118 = vadd.f32 %v93, %v104
    %v119 = vadd.f32 %v94, %v108
    %v120 = vadd.f32 %v95, %v112
    %v121 = vpack.c.bf16 %v88, %v88
    %v154 = vunpack.c.l.b16 %v56
    %v155 = vunpack.c.h.b16 %v56
    %v156 = vunpack.c.l.b16 %v57
    %v157 = vunpack.c.h.b16 %v57
    %v158 = vunpack.c.l.b16 %v58
    %v159 = vunpack.c.h.b16 %v58
    %v160 = vunpack.c.l.b16 %v59
    %v161 = vunpack.c.h.b16 %v59
    %v162 = vunpack.c.l.b16 %v60
    %v163 = vunpack.c.h.b16 %v60
    %v164 = vunpack.c.l.b16 %v61
    %v165 = vunpack.c.h.b16 %v61
    %v166 = vunpack.c.l.b16 %v62
    %v167 = vunpack.c.h.b16 %v62
    %v168 = vunpack.c.l.b16 %v63
    %v169 = vunpack.c.h.b16 %v63
    %v170 = vunpack.c.l.b16 %v64
    %v171 = vunpack.c.h.b16 %v64
    %v172 = vunpack.c.l.b16 %v65
    %v173 = vunpack.c.h.b16 %v65
    %v174 = vunpack.c.l.b16 %v66
    %v175 = vunpack.c.h.b16 %v66
    %v176 = vunpack.c.l.b16 %v67
    %v177 = vunpack.c.h.b16 %v67
    %v178 = vunpack.c.l.b16 %v68
    %v179 = vunpack.c.h.b16 %v68
    %v180 = vunpack.c.l.b16 %v69
    %v181 = vunpack.c.h.b16 %v69
    %v182 = vunpack.c.l.b16 %v70
    %v183 = vunpack.c.h.b16 %v70
    %v184 = vunpack.c.l.b16 %v71
    %v185 = vunpack.c.h.b16 %v71
    %v186 = vunpack.c.l.b16 %v72
    %v187 = vunpack.c.h.b16 %v72
    %v188 = vunpack.c.l.b16 %v73
    %v189 = vunpack.c.h.b16 %v73
    %v190 = vunpack.c.l.b16 %v74
    %v191 = vunpack.c.h.b16 %v74
    %v192 = vunpack.c.l.b16 %v75
    %v193 = vunpack.c.h.b16 %v75
    %v194 = vunpack.c.l.b16 %v76
    %v195 = vunpack.c.h.b16 %v76
    %v196 = vunpack.c.l.b16 %v77
    %v197 = vunpack.c.h.b16 %v77
    %v198 = vunpack.c.l.b16 %v78
    %v199 = vunpack.c.h.b16 %v78
    %v200 = vunpack.c.l.b16 %v79
    %v201 = vunpack.c.h.b16 %v79
    %v202 = vunpack.c.l.b16 %v80
    %v203 = vunpack.c.h.b16 %v80
    %v204 = vunpack.c.l.b16 %v81
    %v205 = vunpack.c.h.b16 %v81
    %v206 = vunpack.c.l.b16 %v82
    %v207 = vunpack.c.h.b16 %v82
    %v208 = vunpack.c.l.b16 %v83
    %v209 = vunpack.c.h.b16 %v83
    %v210 = vunpack.c.l.b16 %v84
    %v211 = vunpack.c.h.b16 %v84
    %v212 = vunpack.c.l.b16 %v85
    %v213 = vunpack.c.h.b16 %v85
    %v214 = vunpack.c.l.b16 %v86
    %v215 = vunpack.c.h.b16 %v86
    %v216 = vunpack.c.l.b16 %v87
    %v217 = vunpack.c.h.b16 %v87
    %v218 = vpack.c.b16 %v158, %v154
    %v219 = vpack.c.b16 %v159, %v155
    %v220 = vpack.c.b16 %v160, %v156
    %v221 = vpack.c.b16 %v161, %v157
    %v222 = vpack.c.b16 %v166, %v162
    %v223 = vpack.c.b16 %v167, %v163
    %v224 = vpack.c.b16 %v168, %v164
    %v225 = vpack.c.b16 %v169, %v165
    %v226 = vpack.c.b16 %v174, %v170
    %v227 = vpack.c.b16 %v175, %v171
    %v228 = vpack.c.b16 %v176, %v172
    %v229 = vpack.c.b16 %v177, %v173
    %v230 = vpack.c.b16 %v182, %v178
    %v231 = vpack.c.b16 %v183, %v179
    %v232 = vpack.c.b16 %v184, %v180
    %v233 = vpack.c.b16 %v185, %v181
    %v234 = vpack.c.b16 %v190, %v186
    %v235 = vpack.c.b16 %v191, %v187
    %v236 = vpack.c.b16 %v192, %v188
    %v237 = vpack.c.b16 %v193, %v189
    %v238 = vpack.c.b16 %v198, %v194
    %v239 = vpack.c.b16 %v199, %v195
    %v240 = vpack.c.b16 %v200, %v196
    %v241 = vpack.c.b16 %v201, %v197
    %v242 = vpack.c.b16 %v206, %v202
    %v243 = vpack.c.b16 %v207, %v203
    %v244 = vpack.c.b16 %v208, %v204
    %v245 = vpack.c.b16 %v209, %v205
    %v246 = vpack.c.b16 %v214, %v210
    %v247 = vpack.c.b16 %v215, %v211
    %v248 = vpack.c.b16 %v216, %v212
    %v249 = vpack.c.b16 %v217, %v213
    %282 = vmatprep.subr.bf16.mxu0 %v219
    %283 = vmatpush1.bf16.msra.mxu0 %v218
    %284 = vmatprep.subr.bf16.mxu0 %v223
    %285 = vmatpush1.bf16.msra.mxu0 %v222
    %286 = vmatprep.subr.bf16.mxu0 %v227
    %287 = vmatpush1.bf16.msra.mxu0 %v226
    %288 = vmatprep.subr.bf16.mxu0 %v231
    %289 = vmatpush1.bf16.msra.mxu0 %v230
    %290 = vmatprep.subr.bf16.mxu0 %v235
    %291 = vmatpush1.bf16.msra.mxu0 %v234
    %292 = vmatprep.subr.bf16.mxu0 %v239
    %293 = vmatpush1.bf16.msra.mxu0 %v238
    %294 = vmatprep.subr.bf16.mxu0 %v243
    %295 = vmatpush1.bf16.msra.mxu0 %v242
    %296 = vmatprep.subr.bf16.mxu0 %v247
    %297 = vmatpush1.bf16.msra.mxu0 %v246
    %298 = vmatprep.subr.bf16.mxu0 0
    %299 = vmatpush1.bf16.msra.mxu0 0
    %300 = vmatprep.subr.bf16.mxu0 0
    %301 = vmatpush1.bf16.msra.mxu0 0
    %302 = vmatprep.subr.bf16.mxu0 0
    %303 = vmatpush1.bf16.msra.mxu0 0
    %304 = vmatprep.subr.bf16.mxu0 0
    %305 = vmatpush1.bf16.msra.mxu0 0
    %306 = vmatprep.subr.bf16.mxu0 0
    %307 = vmatpush1.bf16.msra.mxu0 0
    %308 = vmatprep.subr.bf16.mxu0 0
    %309 = vmatpush1.bf16.msra.mxu0 0
    %310 = vmatprep.subr.bf16.mxu0 0
    %311 = vmatpush1.bf16.msra.mxu0 0
    %312 = vmatprep.subr.bf16.mxu0 0
    %313 = vmatpush1.bf16.msra.mxu0 0
    %314 = vmatprep.mubr.bf16.mxu0 0
    %315 = vmatmul.mubr.bf16.gmra.mrb[0].mxu0 %v121
    %v316 = vpop.f32.mrb[0].mxu0
    %v317 = vadd.f32 0.0, %v316
    %v318 = vpop.f32.mrb[0].mxu0
    %v319 = vadd.f32 0.0, %v318
    %v320 = vpop.f32.mrb[0].mxu0
    %v321 = vpop.f32.mrb[0].mxu0
    %322 = vdwg.mxu0
    %323 = vmatprep.subr.bf16.mxu0 %v221
    %324 = vmatpush1.bf16.msra.mxu0 %v220
    %325 = vmatprep.subr.bf16.mxu0 %v225
    %326 = vmatpush1.bf16.msra.mxu0 %v224
    %327 = vmatprep.subr.bf16.mxu0 %v229
    %328 = vmatpush1.bf16.msra.mxu0 %v228
    %329 = vmatprep.subr.bf16.mxu0 %v233
    %330 = vmatpush1.bf16.msra.mxu0 %v232
    %331 = vmatprep.subr.bf16.mxu0 %v237
    %332 = vmatpush1.bf16.msra.mxu0 %v236
    %333 = vmatprep.subr.bf16.mxu0 %v241
    %334 = vmatpush1.bf16.msra.mxu0 %v240
    %335 = vmatprep.subr.bf16.mxu0 %v245
    %336 = vmatpush1.bf16.msra.mxu0 %v244
    %337 = vmatprep.subr.bf16.mxu0 %v249
    %338 = vmatpush1.bf16.msra.mxu0 %v248
    %339 = vmatprep.subr.bf16.mxu0 0
    %340 = vmatpush1.bf16.msra.mxu0 0
    %341 = vmatprep.subr.bf16.mxu0 0
    %342 = vmatpush1.bf16.msra.mxu0 0
    %343 = vmatprep.subr.bf16.mxu0 0
    %344 = vmatpush1.bf16.msra.mxu0 0
    %345 = vmatprep.subr.bf16.mxu0 0
    %346 = vmatpush1.bf16.msra.mxu0 0
    %347 = vmatprep.subr.bf16.mxu0 0
    %348 = vmatpush1.bf16.msra.mxu0 0
    %349 = vmatprep.subr.bf16.mxu0 0
    %350 = vmatpush1.bf16.msra.mxu0 0
    %351 = vmatprep.subr.bf16.mxu0 0
    %352 = vmatpush1.bf16.msra.mxu0 0
    %353 = vmatprep.subr.bf16.mxu0 0
    %354 = vmatpush1.bf16.msra.mxu0 0
    %355 = vmatprep.mubr.bf16.mxu0 0
    %356 = vmatmul.mubr.bf16.gmra.mrb[0].mxu0 %v121
    %v357 = vpop.f32.mrb[0].mxu0
    %v358 = vadd.f32 0.0, %v357
    %v359 = vpop.f32.mrb[0].mxu0
    %v360 = vadd.f32 0.0, %v359
    %v361 = vpop.f32.mrb[0].mxu0
    %v362 = vpop.f32.mrb[0].mxu0
    %363 = vdwg.mxu0
    %v364 = vadd.f32 %v117, %v317
    %v365 = vadd.f32 %v118, %v319
    %v366 = vadd.f32 %v119, %v358
    %v367 = vadd.f32 %v120, %v360
    %v368 = vxor.u32 %v364, 2147483648
    %v369 = vmul.f32 %v368, 1.442695
    %v370 = vpow.pop %v369
    %v371 = vadd.f32 %v370, 1.0
    %v372 = vrcp.pop %v371
    %v373 = vmul.f32 1.0, %v372
    %v374 = vxor.u32 %v365, 2147483648
    %v375 = vmul.f32 %v374, 1.442695
    %v376 = vpow.pop %v375
    %v377 = vadd.f32 %v376, 1.0
    %v378 = vrcp.pop %v377
    %v379 = vmul.f32 1.0, %v378
    %v380 = vtanh.pop %v366
    %v381 = vxor.u32 %v367, 2147483648
    %v382 = vmul.f32 %v381, 1.442695
    %v383 = vpow.pop %v382
    %v384 = vadd.f32 %v383, 1.0
    %v385 = vrcp.pop %v384
    %v386 = vmul.f32 1.0, %v385
    %v387 = vmul.f32 %v379, %v89
    %v388 = vmul.f32 %v373, %v380
    %v389 = vadd.f32 %v387, %v388
    %v390 = vtanh.pop %v389
    %v391 = vmul.f32 %v386, %v390
    %392 = vst [vmem:[%s5] sm:$0xff] %v391
    %393 = vst [vmem:[%s6] sm:$0xff] %v389
    %s394 = scalar_lea.vmem %s0, 16
    %v395 = vld [vmem:[%s394] sm:$0xff]
    %v396 = vld [vmem:[%s394 + $0x8] sm:$0xff]
    %v397 = vunpack.c.l.bf16 %v395
    %v398 = vunpack.c.h.bf16 %v395
    %v399 = vunpack.c.l.bf16 %v396
    %v400 = vunpack.c.h.bf16 %v396
    %v401 = vadd.f32 %v397, %v100
    %v402 = vadd.f32 %v398, %v104
    %v403 = vadd.f32 %v399, %v108
    %v404 = vadd.f32 %v400, %v112
    %v405 = vpack.c.bf16 %v391, %v391
    %406 = vmatprep.subr.bf16.mxu0 %v219
    %407 = vmatpush1.bf16.msra.mxu0 %v218
    %408 = vmatprep.subr.bf16.mxu0 %v223
    %409 = vmatpush1.bf16.msra.mxu0 %v222
    %410 = vmatprep.subr.bf16.mxu0 %v227
    %411 = vmatpush1.bf16.msra.mxu0 %v226
    %412 = vmatprep.subr.bf16.mxu0 %v231
    %413 = vmatpush1.bf16.msra.mxu0 %v230
    %414 = vmatprep.subr.bf16.mxu0 %v235
    %415 = vmatpush1.bf16.msra.mxu0 %v234
    %416 = vmatprep.subr.bf16.mxu0 %v239
    %417 = vmatpush1.bf16.msra.mxu0 %v238
    %418 = vmatprep.subr.bf16.mxu0 %v243
    %419 = vmatpush1.bf16.msra.mxu0 %v242
    %420 = vmatprep.subr.bf16.mxu0 %v247
    %421 = vmatpush1.bf16.msra.mxu0 %v246
    %422 = vmatprep.subr.bf16.mxu0 0
    %423 = vmatpush1.bf16.msra.mxu0 0
    %424 = vmatprep.subr.bf16.mxu0 0
    %425 = vmatpush1.bf16.msra.mxu0 0
    %426 = vmatprep.subr.bf16.mxu0 0
    %427 = vmatpush1.bf16.msra.mxu0 0
    %428 = vmatprep.subr.bf16.mxu0 0
    %429 = vmatpush1.bf16.msra.mxu0 0
    %430 = vmatprep.subr.bf16.mxu0 0
    %431 = vmatpush1.bf16.msra.mxu0 0
    %432 = vmatprep.subr.bf16.mxu0 0
    %433 = vmatpush1.bf16.msra.mxu0 0
    %434 = vmatprep.subr.bf16.mxu0 0
    %435 = vmatpush1.bf16.msra.mxu0 0
    %436 = vmatprep.subr.bf16.mxu0 0
    %437 = vmatpush1.bf16.msra.mxu0 0
    %438 = vmatprep.mubr.bf16.mxu0 0
    %439 = vmatmul.mubr.bf16.gmra.mrb[0].mxu0 %v405
    %v440 = vpop.f32.mrb[0].mxu0
    %v441 = vadd.f32 0.0, %v440
    %v442 = vpop.f32.mrb[0].mxu0
    %v443 = vadd.f32 0.0, %v442
    %v444 = vpop.f32.mrb[0].mxu0
    %v445 = vpop.f32.mrb[0].mxu0
    %446 = vdwg.mxu0
    %447 = vmatprep.subr.bf16.mxu0 %v221
    %448 = vmatpush1.bf16.msra.mxu0 %v220
    %449 = vmatprep.subr.bf16.mxu0 %v225
    %450 = vmatpush1.bf16.msra.mxu0 %v224
    %451 = vmatprep.subr.bf16.mxu0 %v229
    %452 = vmatpush1.bf16.msra.mxu0 %v228
    %453 = vmatprep.subr.bf16.mxu0 %v233
    %454 = vmatpush1.bf16.msra.mxu0 %v232
    %455 = vmatprep.subr.bf16.mxu0 %v237
    %456 = vmatpush1.bf16.msra.mxu0 %v236
    %457 = vmatprep.subr.bf16.mxu0 %v241
    %458 = vmatpush1.bf16.msra.mxu0 %v240
    %459 = vmatprep.subr.bf16.mxu0 %v245
    %460 = vmatpush1.bf16.msra.mxu0 %v244
    %461 = vmatprep.subr.bf16.mxu0 %v249
    %462 = vmatpush1.bf16.msra.mxu0 %v248
    %463 = vmatprep.subr.bf16.mxu0 0
    %464 = vmatpush1.bf16.msra.mxu0 0
    %465 = vmatprep.subr.bf16.mxu0 0
    %466 = vmatpush1.bf16.msra.mxu0 0
    %467 = vmatprep.subr.bf16.mxu0 0
    %468 = vmatpush1.bf16.msra.mxu0 0
    %469 = vmatprep.subr.bf16.mxu0 0
    %470 = vmatpush1.bf16.msra.mxu0 0
    %471 = vmatprep.subr.bf16.mxu0 0
    %472 = vmatpush1.bf16.msra.mxu0 0
    %473 = vmatprep.subr.bf16.mxu0 0
    %474 = vmatpush1.bf16.msra.mxu0 0
    %475 = vmatprep.subr.bf16.mxu0 0
    %476 = vmatpush1.bf16.msra.mxu0 0
    %477 = vmatprep.subr.bf16.mxu0 0
    %478 = vmatpush1.bf16.msra.mxu0 0
    %479 = vmatprep.mubr.bf16.mxu0 0
    %480 = vmatmul.mubr.bf16.gmra.mrb[0].mxu0 %v405
    %v481 = vpop.f32.mrb[0].mxu0
    %v482 = vadd.f32 0.0, %v481
    %v483 = vpop.f32.mrb[0].mxu0
    %v484 = vadd.f32 0.0, %v483
    %v485 = vpop.f32.mrb[0].mxu0
    %v486 = vpop.f32.mrb[0].mxu0
    %487 = vdwg.mxu0
    %v488 = vadd.f32 %v401, %v441
    %v489 = vadd.f32 %v402, %v443
    %v490 = vadd.f32 %v403, %v482
    %v491 = vadd.f32 %v404, %v484
    %v492 = vxor.u32 %v488, 2147483648
    %v493 = vmul.f32 %v492, 1.442695
    %v494 = vpow.pop %v493
    %v495 = vadd.f32 %v494, 1.0
    %v496 = vrcp.pop %v495
    %v497 = vmul.f32 1.0, %v496
    %v498 = vxor.u32 %v489, 2147483648
    %v499 = vmul.f32 %v498, 1.442695
    %v500 = vpow.pop %v499
    %v501 = vadd.f32 %v500, 1.0
    %v502 = vrcp.pop %v501
    %v503 = vmul.f32 1.0, %v502
    %v504 = vtanh.pop %v490
    %v505 = vxor.u32 %v491, 2147483648
    %v506 = vmul.f32 %v505, 1.442695
    %v507 = vpow.pop %v506
    %v508 = vadd.f32 %v507, 1.0
    %v509 = vrcp.pop %v508
    %v510 = vmul.f32 1.0, %v509
    %v511 = vmul.f32 %v503, %v389
    %v512 = vmul.f32 %v497, %v504
    %v513 = vadd.f32 %v511, %v512
    %v514 = vtanh.pop %v513
    %v515 = vmul.f32 %v510, %v514
    %s516 = scalar_lea.vmem %s5, 8
    %517 = vst [vmem:[%s516] sm:$0xff] %v515
    %s518 = scalar_lea.vmem %s6, 8
    %519 = vst [vmem:[%s518] sm:$0xff] %v513
    %s520 = scalar_lea.vmem %s0, 32
    %v521 = vld [vmem:[%s520] sm:$0xff]
    %v522 = vld [vmem:[%s520 + $0x8] sm:$0xff]
    %v523 = vunpack.c.l.bf16 %v521
    %v524 = vunpack.c.h.bf16 %v521
    %v525 = vunpack.c.l.bf16 %v522
    %v526 = vunpack.c.h.bf16 %v522
    %v527 = vadd.f32 %v523, %v100
    %v528 = vadd.f32 %v524, %v104
    %v529 = vadd.f32 %v525, %v108
    %v530 = vadd.f32 %v526, %v112
    %v531 = vpack.c.bf16 %v515, %v515
    %532 = vmatprep.subr.bf16.mxu0 %v219
    %533 = vmatpush1.bf16.msra.mxu0 %v218
    %534 = vmatprep.subr.bf16.mxu0 %v223
    %535 = vmatpush1.bf16.msra.mxu0 %v222
    %536 = vmatprep.subr.bf16.mxu0 %v227
    %537 = vmatpush1.bf16.msra.mxu0 %v226
    %538 = vmatprep.subr.bf16.mxu0 %v231
    %539 = vmatpush1.bf16.msra.mxu0 %v230
    %540 = vmatprep.subr.bf16.mxu0 %v235
    %541 = vmatpush1.bf16.msra.mxu0 %v234
    %542 = vmatprep.subr.bf16.mxu0 %v239
    %543 = vmatpush1.bf16.msra.mxu0 %v238
    %544 = vmatprep.subr.bf16.mxu0 %v243
    %545 = vmatpush1.bf16.msra.mxu0 %v242
    %546 = vmatprep.subr.bf16.mxu0 %v247
    %547 = vmatpush1.bf16.msra.mxu0 %v246
    %548 = vmatprep.subr.bf16.mxu0 0
    %549 = vmatpush1.bf16.msra.mxu0 0
    %550 = vmatprep.subr.bf16.mxu0 0
    %551 = vmatpush1.bf16.msra.mxu0 0
    %552 = vmatprep.subr.bf16.mxu0 0
    %553 = vmatpush1.bf16.msra.mxu0 0
    %554 = vmatprep.subr.bf16.mxu0 0
    %555 = vmatpush1.bf16.msra.mxu0 0
    %556 = vmatprep.subr.bf16.mxu0 0
    %557 = vmatpush1.bf16.msra.mxu0 0
    %558 = vmatprep.subr.bf16.mxu0 0
    %559 = vmatpush1.bf16.msra.mxu0 0
    %560 = vmatprep.subr.bf16.mxu0 0
    %561 = vmatpush1.bf16.msra.mxu0 0
    %562 = vmatprep.subr.bf16.mxu0 0
    %563 = vmatpush1.bf16.msra.mxu0 0
    %564 = vmatprep.mubr.bf16.mxu0 0
    %565 = vmatmul.mubr.bf16.gmra.mrb[0].mxu0 %v531
    %v566 = vpop.f32.mrb[0].mxu0
    %v567 = vadd.f32 0.0, %v566
    %v568 = vpop.f32.mrb[0].mxu0
    %v569 = vadd.f32 0.0, %v568
    %v570 = vpop.f32.mrb[0].mxu0
    %v571 = vpop.f32.mrb[0].mxu0
    %572 = vdwg.mxu0
    %573 = vmatprep.subr.bf16.mxu0 %v221
    %574 = vmatpush1.bf16.msra.mxu0 %v220
    %575 = vmatprep.subr.bf16.mxu0 %v225
    %576 = vmatpush1.bf16.msra.mxu0 %v224
    %577 = vmatprep.subr.bf16.mxu0 %v229
    %578 = vmatpush1.bf16.msra.mxu0 %v228
    %579 = vmatprep.subr.bf16.mxu0 %v233
    %580 = vmatpush1.bf16.msra.mxu0 %v232
    %581 = vmatprep.subr.bf16.mxu0 %v237
    %582 = vmatpush1.bf16.msra.mxu0 %v236
    %583 = vmatprep.subr.bf16.mxu0 %v241
    %584 = vmatpush1.bf16.msra.mxu0 %v240
    %585 = vmatprep.subr.bf16.mxu0 %v245
    %586 = vmatpush1.bf16.msra.mxu0 %v244
    %587 = vmatprep.subr.bf16.mxu0 %v249
    %588 = vmatpush1.bf16.msra.mxu0 %v248
    %589 = vmatprep.subr.bf16.mxu0 0
    %590 = vmatpush1.bf16.msra.mxu0 0
    %591 = vmatprep.subr.bf16.mxu0 0
    %592 = vmatpush1.bf16.msra.mxu0 0
    %593 = vmatprep.subr.bf16.mxu0 0
    %594 = vmatpush1.bf16.msra.mxu0 0
    %595 = vmatprep.subr.bf16.mxu0 0
    %596 = vmatpush1.bf16.msra.mxu0 0
    %597 = vmatprep.subr.bf16.mxu0 0
    %598 = vmatpush1.bf16.msra.mxu0 0
    %599 = vmatprep.subr.bf16.mxu0 0
    %600 = vmatpush1.bf16.msra.mxu0 0
    %601 = vmatprep.subr.bf16.mxu0 0
    %602 = vmatpush1.bf16.msra.mxu0 0
    %603 = vmatprep.subr.bf16.mxu0 0
    %604 = vmatpush1.bf16.msra.mxu0 0
    %605 = vmatprep.mubr.bf16.mxu0 0
    %606 = vmatmul.mubr.bf16.gmra.mrb[0].mxu0 %v531
    %v607 = vpop.f32.mrb[0].mxu0
    %v608 = vadd.f32 0.0, %v607
    %v609 = vpop.f32.mrb[0].mxu0
    %v610 = vadd.f32 0.0, %v609
    %v611 = vpop.f32.mrb[0].mxu0
    %v612 = vpop.f32.mrb[0].mxu0
    %613 = vdwg.mxu0
    %v614 = vadd.f32 %v527, %v567
    %v615 = vadd.f32 %v528, %v569
    %v616 = vadd.f32 %v529, %v608
    %v617 = vadd.f32 %v530, %v610
    %v618 = vxor.u32 %v614, 2147483648
    %v619 = vmul.f32 %v618, 1.442695
    %v620 = vpow.pop %v619
    %v621 = vadd.f32 %v620, 1.0
    %v622 = vrcp.pop %v621
    %v623 = vmul.f32 1.0, %v622
    %v624 = vxor.u32 %v615, 2147483648
    %v625 = vmul.f32 %v624, 1.442695
    %v626 = vpow.pop %v625
    %v627 = vadd.f32 %v626, 1.0
    %v628 = vrcp.pop %v627
    %v629 = vmul.f32 1.0, %v628
    %v630 = vtanh.pop %v616
    %v631 = vxor.u32 %v617, 2147483648
    %v632 = vmul.f32 %v631, 1.442695
    %v633 = vpow.pop %v632
    %v634 = vadd.f32 %v633, 1.0
    %v635 = vrcp.pop %v634
    %v636 = vmul.f32 1.0, %v635
    %v637 = vmul.f32 %v629, %v513
    %v638 = vmul.f32 %v623, %v630
    %v639 = vadd.f32 %v637, %v638
    %v640 = vtanh.pop %v639
    %v641 = vmul.f32 %v636, %v640
    %s642 = scalar_lea.vmem %s5, 16
    %643 = vst [vmem:[%s642] sm:$0xff] %v641
    %s644 = scalar_lea.vmem %s6, 16
    %645 = vst [vmem:[%s644] sm:$0xff] %v639
    %s646 = scalar_lea.vmem %s0, 48
    %v647 = vld [vmem:[%s646] sm:$0xff]
    %v648 = vld [vmem:[%s646 + $0x8] sm:$0xff]
    %v649 = vunpack.c.l.bf16 %v647
    %v650 = vunpack.c.h.bf16 %v647
    %v651 = vunpack.c.l.bf16 %v648
    %v652 = vunpack.c.h.bf16 %v648
    %v653 = vadd.f32 %v649, %v100
    %v654 = vadd.f32 %v650, %v104
    %v655 = vadd.f32 %v651, %v108
    %v656 = vadd.f32 %v652, %v112
    %v657 = vpack.c.bf16 %v641, %v641
    %658 = vmatprep.subr.bf16.mxu0 %v219
    %659 = vmatpush1.bf16.msra.mxu0 %v218
    %660 = vmatprep.subr.bf16.mxu0 %v223
    %661 = vmatpush1.bf16.msra.mxu0 %v222
    %662 = vmatprep.subr.bf16.mxu0 %v227
    %663 = vmatpush1.bf16.msra.mxu0 %v226
    %664 = vmatprep.subr.bf16.mxu0 %v231
    %665 = vmatpush1.bf16.msra.mxu0 %v230
    %666 = vmatprep.subr.bf16.mxu0 %v235
    %667 = vmatpush1.bf16.msra.mxu0 %v234
    %668 = vmatprep.subr.bf16.mxu0 %v239
    %669 = vmatpush1.bf16.msra.mxu0 %v238
    %670 = vmatprep.subr.bf16.mxu0 %v243
    %671 = vmatpush1.bf16.msra.mxu0 %v242
    %672 = vmatprep.subr.bf16.mxu0 %v247
    %673 = vmatpush1.bf16.msra.mxu0 %v246
    %674 = vmatprep.subr.bf16.mxu0 0
    %675 = vmatpush1.bf16.msra.mxu0 0
    %676 = vmatprep.subr.bf16.mxu0 0
    %677 = vmatpush1.bf16.msra.mxu0 0
    %678 = vmatprep.subr.bf16.mxu0 0
    %679 = vmatpush1.bf16.msra.mxu0 0
    %680 = vmatprep.subr.bf16.mxu0 0
    %681 = vmatpush1.bf16.msra.mxu0 0
    %682 = vmatprep.subr.bf16.mxu0 0
    %683 = vmatpush1.bf16.msra.mxu0 0
    %684 = vmatprep.subr.bf16.mxu0 0
    %685 = vmatpush1.bf16.msra.mxu0 0
    %686 = vmatprep.subr.bf16.mxu0 0
    %687 = vmatpush1.bf16.msra.mxu0 0
    %688 = vmatprep.subr.bf16.mxu0 0
    %689 = vmatpush1.bf16.msra.mxu0 0
    %690 = vmatprep.mubr.bf16.mxu0 0
    %691 = vmatmul.mubr.bf16.gmra.mrb[0].mxu0 %v657
    %v692 = vpop.f32.mrb[0].mxu0
    %v693 = vadd.f32 0.0, %v692
    %v694 = vpop.f32.mrb[0].mxu0
    %v695 = vadd.f32 0.0, %v694
    %v696 = vpop.f32.mrb[0].mxu0
    %v697 = vpop.f32.mrb[0].mxu0
    %698 = vdwg.mxu0
    %699 = vmatprep.subr.bf16.mxu0 %v221
    %700 = vmatpush1.bf16.msra.mxu0 %v220
    %701 = vmatprep.subr.bf16.mxu0 %v225
    %702 = vmatpush1.bf16.msra.mxu0 %v224
    %703 = vmatprep.subr.bf16.mxu0 %v229
    %704 = vmatpush1.bf16.msra.mxu0 %v228
    %705 = vmatprep.subr.bf16.mxu0 %v233
    %706 = vmatpush1.bf16.msra.mxu0 %v232
    %707 = vmatprep.subr.bf16.mxu0 %v237
    %708 = vmatpush1.bf16.msra.mxu0 %v236
    %709 = vmatprep.subr.bf16.mxu0 %v241
    %710 = vmatpush1.bf16.msra.mxu0 %v240
    %711 = vmatprep.subr.bf16.mxu0 %v245
    %712 = vmatpush1.bf16.msra.mxu0 %v244
    %713 = vmatprep.subr.bf16.mxu0 %v249
    %714 = vmatpush1.bf16.msra.mxu0 %v248
    %715 = vmatprep.subr.bf16.mxu0 0
    %716 = vmatpush1.bf16.msra.mxu0 0
    %717 = vmatprep.subr.bf16.mxu0 0
    %718 = vmatpush1.bf16.msra.mxu0 0
    %719 = vmatprep.subr.bf16.mxu0 0
    %720 = vmatpush1.bf16.msra.mxu0 0
    %721 = vmatprep.subr.bf16.mxu0 0
    %722 = vmatpush1.bf16.msra.mxu0 0
    %723 = vmatprep.subr.bf16.mxu0 0
    %724 = vmatpush1.bf16.msra.mxu0 0
    %725 = vmatprep.subr.bf16.mxu0 0
    %726 = vmatpush1.bf16.msra.mxu0 0
    %727 = vmatprep.subr.bf16.mxu0 0
    %728 = vmatpush1.bf16.msra.mxu0 0
    %729 = vmatprep.subr.bf16.mxu0 0
    %730 = vmatpush1.bf16.msra.mxu0 0
    %731 = vmatprep.mubr.bf16.mxu0 0
    %732 = vmatmul.mubr.bf16.gmra.mrb[0].mxu0 %v657
    %v733 = vpop.f32.mrb[0].mxu0
    %v734 = vadd.f32 0.0, %v733
    %v735 = vpop.f32.mrb[0].mxu0
    %v736 = vadd.f32 0.0, %v735
    %v737 = vpop.f32.mrb[0].mxu0
    %v738 = vpop.f32.mrb[0].mxu0
    %739 = vdwg.mxu0
    %v740 = vadd.f32 %v653, %v693
    %v741 = vadd.f32 %v654, %v695
    %v742 = vadd.f32 %v655, %v734
    %v743 = vadd.f32 %v656, %v736
    %v744 = vxor.u32 %v740, 2147483648
    %v745 = vmul.f32 %v744, 1.442695
    %v746 = vpow.pop %v745
    %v747 = vadd.f32 %v746, 1.0
    %v748 = vrcp.pop %v747
    %v749 = vmul.f32 1.0, %v748
    %v750 = vxor.u32 %v741, 2147483648
    %v751 = vmul.f32 %v750, 1.442695
    %v752 = vpow.pop %v751
    %v753 = vadd.f32 %v752, 1.0
    %v754 = vrcp.pop %v753
    %v755 = vmul.f32 1.0, %v754
    %v756 = vtanh.pop %v742
    %v757 = vxor.u32 %v743, 2147483648
    %v758 = vmul.f32 %v757, 1.442695
    %v759 = vpow.pop %v758
    %v760 = vadd.f32 %v759, 1.0
    %v761 = vrcp.pop %v760
    %v762 = vmul.f32 1.0, %v761
    %v763 = vmul.f32 %v755, %v639
    %v764 = vmul.f32 %v749, %v756
    %v765 = vadd.f32 %v763, %v764
    %v766 = vtanh.pop %v765
    %v767 = vmul.f32 %v762, %v766
    %s768 = scalar_lea.vmem %s5, 24
    %769 = vst [vmem:[%s768] sm:$0xff] %v767
    %s770 = scalar_lea.vmem %s6, 24
    %771 = vst [vmem:[%s770] sm:$0xff] %v765
    %s772 = scalar_lea.vmem %s0, 64
    %v773 = vld [vmem:[%s772] sm:$0xff]
    %v774 = vld [vmem:[%s772 + $0x8] sm:$0xff]
    %v775 = vunpack.c.l.bf16 %v773
    %v776 = vunpack.c.h.bf16 %v773
    %v777 = vunpack.c.l.bf16 %v774
    %v778 = vunpack.c.h.bf16 %v774
    %v779 = vadd.f32 %v775, %v100
    %v780 = vadd.f32 %v776, %v104
    %v781 = vadd.f32 %v777, %v108
    %v782 = vadd.f32 %v778, %v112
    %v783 = vpack.c.bf16 %v767, %v767
    %784 = vmatprep.subr.bf16.mxu0 %v219
    %785 = vmatpush1.bf16.msra.mxu0 %v218
    %786 = vmatprep.subr.bf16.mxu0 %v223
    %787 = vmatpush1.bf16.msra.mxu0 %v222
    %788 = vmatprep.subr.bf16.mxu0 %v227
    %789 = vmatpush1.bf16.msra.mxu0 %v226
    %790 = vmatprep.subr.bf16.mxu0 %v231
    %791 = vmatpush1.bf16.msra.mxu0 %v230
    %792 = vmatprep.subr.bf16.mxu0 %v235
    %793 = vmatpush1.bf16.msra.mxu0 %v234
    %794 = vmatprep.subr.bf16.mxu0 %v239
    %795 = vmatpush1.bf16.msra.mxu0 %v238
    %796 = vmatprep.subr.bf16.mxu0 %v243
    %797 = vmatpush1.bf16.msra.mxu0 %v242
    %798 = vmatprep.subr.bf16.mxu0 %v247
    %799 = vmatpush1.bf16.msra.mxu0 %v246
    %800 = vmatprep.subr.bf16.mxu0 0
    %801 = vmatpush1.bf16.msra.mxu0 0
    %802 = vmatprep.subr.bf16.mxu0 0
    %803 = vmatpush1.bf16.msra.mxu0 0
    %804 = vmatprep.subr.bf16.mxu0 0
    %805 = vmatpush1.bf16.msra.mxu0 0
    %806 = vmatprep.subr.bf16.mxu0 0
    %807 = vmatpush1.bf16.msra.mxu0 0
    %808 = vmatprep.subr.bf16.mxu0 0
    %809 = vmatpush1.bf16.msra.mxu0 0
    %810 = vmatprep.subr.bf16.mxu0 0
    %811 = vmatpush1.bf16.msra.mxu0 0
    %812 = vmatprep.subr.bf16.mxu0 0
    %813 = vmatpush1.bf16.msra.mxu0 0
    %814 = vmatprep.subr.bf16.mxu0 0
    %815 = vmatpush1.bf16.msra.mxu0 0
    %816 = vmatprep.mubr.bf16.mxu0 0
    %817 = vmatmul.mubr.bf16.gmra.mrb[0].mxu0 %v783
    %v818 = vpop.f32.mrb[0].mxu0
    %v819 = vadd.f32 0.0, %v818
    %v820 = vpop.f32.mrb[0].mxu0
    %v821 = vadd.f32 0.0, %v820
    %v822 = vpop.f32.mrb[0].mxu0
    %v823 = vpop.f32.mrb[0].mxu0
    %824 = vdwg.mxu0
    %825 = vmatprep.subr.bf16.mxu0 %v221
    %826 = vmatpush1.bf16.msra.mxu0 %v220
    %827 = vmatprep.subr.bf16.mxu0 %v225
    %828 = vmatpush1.bf16.msra.mxu0 %v224
    %829 = vmatprep.subr.bf16.mxu0 %v229
    %830 = vmatpush1.bf16.msra.mxu0 %v228
    %831 = vmatprep.subr.bf16.mxu0 %v233
    %832 = vmatpush1.bf16.msra.mxu0 %v232
    %833 = vmatprep.subr.bf16.mxu0 %v237
    %834 = vmatpush1.bf16.msra.mxu0 %v236
    %835 = vmatprep.subr.bf16.mxu0 %v241
    %836 = vmatpush1.bf16.msra.mxu0 %v240
    %837 = vmatprep.subr.bf16.mxu0 %v245
    %838 = vmatpush1.bf16.msra.mxu0 %v244
    %839 = vmatprep.subr.bf16.mxu0 %v249
    %840 = vmatpush1.bf16.msra.mxu0 %v248
    %841 = vmatprep.subr.bf16.mxu0 0
    %842 = vmatpush1.bf16.msra.mxu0 0
    %843 = vmatprep.subr.bf16.mxu0 0
    %844 = vmatpush1.bf16.msra.mxu0 0
    %845 = vmatprep.subr.bf16.mxu0 0
    %846 = vmatpush1.bf16.msra.mxu0 0
    %847 = vmatprep.subr.bf16.mxu0 0
    %848 = vmatpush1.bf16.msra.mxu0 0
    %849 = vmatprep.subr.bf16.mxu0 0
    %850 = vmatpush1.bf16.msra.mxu0 0
    %851 = vmatprep.subr.bf16.mxu0 0
    %852 = vmatpush1.bf16.msra.mxu0 0
    %853 = vmatprep.subr.bf16.mxu0 0
    %854 = vmatpush1.bf16.msra.mxu0 0
    %855 = vmatprep.subr.bf16.mxu0 0
    %856 = vmatpush1.bf16.msra.mxu0 0
    %857 = vmatprep.mubr.bf16.mxu0 0
    %858 = vmatmul.mubr.bf16.gmra.mrb[0].mxu0 %v783
    %v859 = vpop.f32.mrb[0].mxu0
    %v860 = vadd.f32 0.0, %v859
    %v861 = vpop.f32.mrb[0].mxu0
    %v862 = vadd.f32 0.0, %v861
    %v863 = vpop.f32.mrb[0].mxu0
    %v864 = vpop.f32.mrb[0].mxu0
    %865 = vdwg.mxu0
    %v866 = vadd.f32 %v779, %v819
    %v867 = vadd.f32 %v780, %v821
    %v868 = vadd.f32 %v781, %v860
    %v869 = vadd.f32 %v782, %v862
    %v870 = vxor.u32 %v866, 2147483648
    %v871 = vmul.f32 %v870, 1.442695
    %v872 = vpow.pop %v871
    %v873 = vadd.f32 %v872, 1.0
    %v874 = vrcp.pop %v873
    %v875 = vmul.f32 1.0, %v874
    %v876 = vxor.u32 %v867, 2147483648
    %v877 = vmul.f32 %v876, 1.442695
    %v878 = vpow.pop %v877
    %v879 = vadd.f32 %v878, 1.0
    %v880 = vrcp.pop %v879
    %v881 = vmul.f32 1.0, %v880
    %v882 = vtanh.pop %v868
    %v883 = vxor.u32 %v869, 2147483648
    %v884 = vmul.f32 %v883, 1.442695
    %v885 = vpow.pop %v884
    %v886 = vadd.f32 %v885, 1.0
    %v887 = vrcp.pop %v886
    %v888 = vmul.f32 1.0, %v887
    %v889 = vmul.f32 %v881, %v765
    %v890 = vmul.f32 %v875, %v882
    %v891 = vadd.f32 %v889, %v890
    %v892 = vtanh.pop %v891
    %v893 = vmul.f32 %v888, %v892
    %s894 = scalar_lea.vmem %s5, 32
    %895 = vst [vmem:[%s894] sm:$0xff] %v893
    %s896 = scalar_lea.vmem %s6, 32
    %897 = vst [vmem:[%s896] sm:$0xff] %v891
    %s898 = scalar_lea.vmem %s0, 80
    %v899 = vld [vmem:[%s898] sm:$0xff]
    %v900 = vld [vmem:[%s898 + $0x8] sm:$0xff]
    %v901 = vunpack.c.l.bf16 %v899
    %v902 = vunpack.c.h.bf16 %v899
    %v903 = vunpack.c.l.bf16 %v900
    %v904 = vunpack.c.h.bf16 %v900
    %v905 = vadd.f32 %v901, %v100
    %v906 = vadd.f32 %v902, %v104
    %v907 = vadd.f32 %v903, %v108
    %v908 = vadd.f32 %v904, %v112
    %v909 = vpack.c.bf16 %v893, %v893
    %910 = vmatprep.subr.bf16.mxu0 %v219
    %911 = vmatpush1.bf16.msra.mxu0 %v218
    %912 = vmatprep.subr.bf16.mxu0 %v223
    %913 = vmatpush1.bf16.msra.mxu0 %v222
    %914 = vmatprep.subr.bf16.mxu0 %v227
    %915 = vmatpush1.bf16.msra.mxu0 %v226
    %916 = vmatprep.subr.bf16.mxu0 %v231
    %917 = vmatpush1.bf16.msra.mxu0 %v230
    %918 = vmatprep.subr.bf16.mxu0 %v235
    %919 = vmatpush1.bf16.msra.mxu0 %v234
    %920 = vmatprep.subr.bf16.mxu0 %v239
    %921 = vmatpush1.bf16.msra.mxu0 %v238
    %922 = vmatprep.subr.bf16.mxu0 %v243
    %923 = vmatpush1.bf16.msra.mxu0 %v242
    %924 = vmatprep.subr.bf16.mxu0 %v247
    %925 = vmatpush1.bf16.msra.mxu0 %v246
    %926 = vmatprep.subr.bf16.mxu0 0
    %927 = vmatpush1.bf16.msra.mxu0 0
    %928 = vmatprep.subr.bf16.mxu0 0
    %929 = vmatpush1.bf16.msra.mxu0 0
    %930 = vmatprep.subr.bf16.mxu0 0
    %931 = vmatpush1.bf16.msra.mxu0 0
    %932 = vmatprep.subr.bf16.mxu0 0
    %933 = vmatpush1.bf16.msra.mxu0 0
    %934 = vmatprep.subr.bf16.mxu0 0
    %935 = vmatpush1.bf16.msra.mxu0 0
    %936 = vmatprep.subr.bf16.mxu0 0
    %937 = vmatpush1.bf16.msra.mxu0 0
    %938 = vmatprep.subr.bf16.mxu0 0
    %939 = vmatpush1.bf16.msra.mxu0 0
    %940 = vmatprep.subr.bf16.mxu0 0
    %941 = vmatpush1.bf16.msra.mxu0 0
    %942 = vmatprep.mubr.bf16.mxu0 0
    %943 = vmatmul.mubr.bf16.gmra.mrb[0].mxu0 %v909
    %v944 = vpop.f32.mrb[0].mxu0
    %v945 = vadd.f32 0.0, %v944
    %v946 = vpop.f32.mrb[0].mxu0
    %v947 = vadd.f32 0.0, %v946
    %v948 = vpop.f32.mrb[0].mxu0
    %v949 = vpop.f32.mrb[0].mxu0
    %950 = vdwg.mxu0
    %951 = vmatprep.subr.bf16.mxu0 %v221
    %952 = vmatpush1.bf16.msra.mxu0 %v220
    %953 = vmatprep.subr.bf16.mxu0 %v225
    %954 = vmatpush1.bf16.msra.mxu0 %v224
    %955 = vmatprep.subr.bf16.mxu0 %v229
    %956 = vmatpush1.bf16.msra.mxu0 %v228
    %957 = vmatprep.subr.bf16.mxu0 %v233
    %958 = vmatpush1.bf16.msra.mxu0 %v232
    %959 = vmatprep.subr.bf16.mxu0 %v237
    %960 = vmatpush1.bf16.msra.mxu0 %v236
    %961 = vmatprep.subr.bf16.mxu0 %v241
    %962 = vmatpush1.bf16.msra.mxu0 %v240
    %963 = vmatprep.subr.bf16.mxu0 %v245
    %964 = vmatpush1.bf16.msra.mxu0 %v244
    %965 = vmatprep.subr.bf16.mxu0 %v249
    %966 = vmatpush1.bf16.msra.mxu0 %v248
    %967 = vmatprep.subr.bf16.mxu0 0
    %968 = vmatpush1.bf16.msra.mxu0 0
    %969 = vmatprep.subr.bf16.mxu0 0
    %970 = vmatpush1.bf16.msra.mxu0 0
    %971 = vmatprep.subr.bf16.mxu0 0
    %972 = vmatpush1.bf16.msra.mxu0 0
    %973 = vmatprep.subr.bf16.mxu0 0
    %974 = vmatpush1.bf16.msra.mxu0 0
    %975 = vmatprep.subr.bf16.mxu0 0
    %976 = vmatpush1.bf16.msra.mxu0 0
    %977 = vmatprep.subr.bf16.mxu0 0
    %978 = vmatpush1.bf16.msra.mxu0 0
    %979 = vmatprep.subr.bf16.mxu0 0
    %980 = vmatpush1.bf16.msra.mxu0 0
    %981 = vmatprep.subr.bf16.mxu0 0
    %982 = vmatpush1.bf16.msra.mxu0 0
    %983 = vmatprep.mubr.bf16.mxu0 0
    %984 = vmatmul.mubr.bf16.gmra.mrb[0].mxu0 %v909
    %v985 = vpop.f32.mrb[0].mxu0
    %v986 = vadd.f32 0.0, %v985
    %v987 = vpop.f32.mrb[0].mxu0
    %v988 = vadd.f32 0.0, %v987
    %v989 = vpop.f32.mrb[0].mxu0
    %v990 = vpop.f32.mrb[0].mxu0
    %991 = vdwg.mxu0
    %v992 = vadd.f32 %v905, %v945
    %v993 = vadd.f32 %v906, %v947
    %v994 = vadd.f32 %v907, %v986
    %v995 = vadd.f32 %v908, %v988
    %v996 = vxor.u32 %v992, 2147483648
    %v997 = vmul.f32 %v996, 1.442695
    %v998 = vpow.pop %v997
    %v999 = vadd.f32 %v998, 1.0
    %v1000 = vrcp.pop %v999
    %v1001 = vmul.f32 1.0, %v1000
    %v1002 = vxor.u32 %v993, 2147483648
    %v1003 = vmul.f32 %v1002, 1.442695
    %v1004 = vpow.pop %v1003
    %v1005 = vadd.f32 %v1004, 1.0
    %v1006 = vrcp.pop %v1005
    %v1007 = vmul.f32 1.0, %v1006
    %v1008 = vtanh.pop %v994
    %v1009 = vxor.u32 %v995, 2147483648
    %v1010 = vmul.f32 %v1009, 1.442695
    %v1011 = vpow.pop %v1010
    %v1012 = vadd.f32 %v1011, 1.0
    %v1013 = vrcp.pop %v1012
    %v1014 = vmul.f32 1.0, %v1013
    %v1015 = vmul.f32 %v1007, %v891
    %v1016 = vmul.f32 %v1001, %v1008
    %v1017 = vadd.f32 %v1015, %v1016
    %v1018 = vtanh.pop %v1017
    %v1019 = vmul.f32 %v1014, %v1018
    %s1020 = scalar_lea.vmem %s5, 40
    %1021 = vst [vmem:[%s1020] sm:$0xff] %v1019
    %s1022 = scalar_lea.vmem %s6, 40
    %1023 = vst [vmem:[%s1022] sm:$0xff] %v1017
    %s1024 = scalar_lea.vmem %s0, 96
    %v1025 = vld [vmem:[%s1024] sm:$0xff]
    %v1026 = vld [vmem:[%s1024 + $0x8] sm:$0xff]
    %v1027 = vunpack.c.l.bf16 %v1025
    %v1028 = vunpack.c.h.bf16 %v1025
    %v1029 = vunpack.c.l.bf16 %v1026
    %v1030 = vunpack.c.h.bf16 %v1026
    %v1031 = vadd.f32 %v1027, %v100
    %v1032 = vadd.f32 %v1028, %v104
    %v1033 = vadd.f32 %v1029, %v108
    %v1034 = vadd.f32 %v1030, %v112
    %v1035 = vpack.c.bf16 %v1019, %v1019
    %1036 = vmatprep.subr.bf16.mxu0 %v219
    %1037 = vmatpush1.bf16.msra.mxu0 %v218
    %1038 = vmatprep.subr.bf16.mxu0 %v223
    %1039 = vmatpush1.bf16.msra.mxu0 %v222
    %1040 = vmatprep.subr.bf16.mxu0 %v227
    %1041 = vmatpush1.bf16.msra.mxu0 %v226
    %1042 = vmatprep.subr.bf16.mxu0 %v231
    %1043 = vmatpush1.bf16.msra.mxu0 %v230
    %1044 = vmatprep.subr.bf16.mxu0 %v235
    %1045 = vmatpush1.bf16.msra.mxu0 %v234
    %1046 = vmatprep.subr.bf16.mxu0 %v239
    %1047 = vmatpush1.bf16.msra.mxu0 %v238
    %1048 = vmatprep.subr.bf16.mxu0 %v243
    %1049 = vmatpush1.bf16.msra.mxu0 %v242
    %1050 = vmatprep.subr.bf16.mxu0 %v247
    %1051 = vmatpush1.bf16.msra.mxu0 %v246
    %1052 = vmatprep.subr.bf16.mxu0 0
    %1053 = vmatpush1.bf16.msra.mxu0 0
    %1054 = vmatprep.subr.bf16.mxu0 0
    %1055 = vmatpush1.bf16.msra.mxu0 0
    %1056 = vmatprep.subr.bf16.mxu0 0
    %1057 = vmatpush1.bf16.msra.mxu0 0
    %1058 = vmatprep.subr.bf16.mxu0 0
    %1059 = vmatpush1.bf16.msra.mxu0 0
    %1060 = vmatprep.subr.bf16.mxu0 0
    %1061 = vmatpush1.bf16.msra.mxu0 0
    %1062 = vmatprep.subr.bf16.mxu0 0
    %1063 = vmatpush1.bf16.msra.mxu0 0
    %1064 = vmatprep.subr.bf16.mxu0 0
    %1065 = vmatpush1.bf16.msra.mxu0 0
    %1066 = vmatprep.subr.bf16.mxu0 0
    %1067 = vmatpush1.bf16.msra.mxu0 0
    %1068 = vmatprep.mubr.bf16.mxu0 0
    %1069 = vmatmul.mubr.bf16.gmra.mrb[0].mxu0 %v1035
    %v1070 = vpop.f32.mrb[0].mxu0
    %v1071 = vadd.f32 0.0, %v1070
    %v1072 = vpop.f32.mrb[0].mxu0
    %v1073 = vadd.f32 0.0, %v1072
    %v1074 = vpop.f32.mrb[0].mxu0
    %v1075 = vpop.f32.mrb[0].mxu0
    %1076 = vdwg.mxu0
    %1077 = vmatprep.subr.bf16.mxu0 %v221
    %1078 = vmatpush1.bf16.msra.mxu0 %v220
    %1079 = vmatprep.subr.bf16.mxu0 %v225
    %1080 = vmatpush1.bf16.msra.mxu0 %v224
    %1081 = vmatprep.subr.bf16.mxu0 %v229
    %1082 = vmatpush1.bf16.msra.mxu0 %v228
    %1083 = vmatprep.subr.bf16.mxu0 %v233
    %1084 = vmatpush1.bf16.msra.mxu0 %v232
    %1085 = vmatprep.subr.bf16.mxu0 %v237
    %1086 = vmatpush1.bf16.msra.mxu0 %v236
    %1087 = vmatprep.subr.bf16.mxu0 %v241
    %1088 = vmatpush1.bf16.msra.mxu0 %v240
    %1089 = vmatprep.subr.bf16.mxu0 %v245
    %1090 = vmatpush1.bf16.msra.mxu0 %v244
    %1091 = vmatprep.subr.bf16.mxu0 %v249
    %1092 = vmatpush1.bf16.msra.mxu0 %v248
    %1093 = vmatprep.subr.bf16.mxu0 0
    %1094 = vmatpush1.bf16.msra.mxu0 0
    %1095 = vmatprep.subr.bf16.mxu0 0
    %1096 = vmatpush1.bf16.msra.mxu0 0
    %1097 = vmatprep.subr.bf16.mxu0 0
    %1098 = vmatpush1.bf16.msra.mxu0 0
    %1099 = vmatprep.subr.bf16.mxu0 0
    %1100 = vmatpush1.bf16.msra.mxu0 0
    %1101 = vmatprep.subr.bf16.mxu0 0
    %1102 = vmatpush1.bf16.msra.mxu0 0
    %1103 = vmatprep.subr.bf16.mxu0 0
    %1104 = vmatpush1.bf16.msra.mxu0 0
    %1105 = vmatprep.subr.bf16.mxu0 0
    %1106 = vmatpush1.bf16.msra.mxu0 0
    %1107 = vmatprep.subr.bf16.mxu0 0
    %1108 = vmatpush1.bf16.msra.mxu0 0
    %1109 = vmatprep.mubr.bf16.mxu0 0
    %1110 = vmatmul.mubr.bf16.gmra.mrb[0].mxu0 %v1035
    %v1111 = vpop.f32.mrb[0].mxu0
    %v1112 = vadd.f32 0.0, %v1111
    %v1113 = vpop.f32.mrb[0].mxu0
    %v1114 = vadd.f32 0.0, %v1113
    %v1115 = vpop.f32.mrb[0].mxu0
    %v1116 = vpop.f32.mrb[0].mxu0
    %1117 = vdwg.mxu0
    %v1118 = vadd.f32 %v1031, %v1071
    %v1119 = vadd.f32 %v1032, %v1073
    %v1120 = vadd.f32 %v1033, %v1112
    %v1121 = vadd.f32 %v1034, %v1114
    %v1122 = vxor.u32 %v1118, 2147483648
    %v1123 = vmul.f32 %v1122, 1.442695
    %v1124 = vpow.pop %v1123
    %v1125 = vadd.f32 %v1124, 1.0
    %v1126 = vrcp.pop %v1125
    %v1127 = vmul.f32 1.0, %v1126
    %v1128 = vxor.u32 %v1119, 2147483648
    %v1129 = vmul.f32 %v1128, 1.442695
    %v1130 = vpow.pop %v1129
    %v1131 = vadd.f32 %v1130, 1.0
    %v1132 = vrcp.pop %v1131
    %v1133 = vmul.f32 1.0, %v1132
    %v1134 = vtanh.pop %v1120
    %v1135 = vxor.u32 %v1121, 2147483648
    %v1136 = vmul.f32 %v1135, 1.442695
    %v1137 = vpow.pop %v1136
    %v1138 = vadd.f32 %v1137, 1.0
    %v1139 = vrcp.pop %v1138
    %v1140 = vmul.f32 1.0, %v1139
    %v1141 = vmul.f32 %v1133, %v1017
    %v1142 = vmul.f32 %v1127, %v1134
    %v1143 = vadd.f32 %v1141, %v1142
    %v1144 = vtanh.pop %v1143
    %v1145 = vmul.f32 %v1140, %v1144
    %s1146 = scalar_lea.vmem %s5, 48
    %1147 = vst [vmem:[%s1146] sm:$0xff] %v1145
    %s1148 = scalar_lea.vmem %s6, 48
    %1149 = vst [vmem:[%s1148] sm:$0xff] %v1143
    %s1150 = scalar_lea.vmem %s0, 112
    %v1151 = vld [vmem:[%s1150] sm:$0xff]
    %v1152 = vld [vmem:[%s1150 + $0x8] sm:$0xff]
    %v1153 = vunpack.c.l.bf16 %v1151
    %v1154 = vunpack.c.h.bf16 %v1151
    %v1155 = vunpack.c.l.bf16 %v1152
    %v1156 = vunpack.c.h.bf16 %v1152
    %v1157 = vadd.f32 %v1153, %v100
    %v1158 = vadd.f32 %v1154, %v104
    %v1159 = vadd.f32 %v1155, %v108
    %v1160 = vadd.f32 %v1156, %v112
    %v1161 = vpack.c.bf16 %v1145, %v1145
    %1162 = vmatprep.subr.bf16.mxu0 %v219
    %1163 = vmatpush1.bf16.msra.mxu0 %v218
    %1164 = vmatprep.subr.bf16.mxu0 %v223
    %1165 = vmatpush1.bf16.msra.mxu0 %v222
    %1166 = vmatprep.subr.bf16.mxu0 %v227
    %1167 = vmatpush1.bf16.msra.mxu0 %v226
    %1168 = vmatprep.subr.bf16.mxu0 %v231
    %1169 = vmatpush1.bf16.msra.mxu0 %v230
    %1170 = vmatprep.subr.bf16.mxu0 %v235
    %1171 = vmatpush1.bf16.msra.mxu0 %v234
    %1172 = vmatprep.subr.bf16.mxu0 %v239
    %1173 = vmatpush1.bf16.msra.mxu0 %v238
    %1174 = vmatprep.subr.bf16.mxu0 %v243
    %1175 = vmatpush1.bf16.msra.mxu0 %v242
    %1176 = vmatprep.subr.bf16.mxu0 %v247
    %1177 = vmatpush1.bf16.msra.mxu0 %v246
    %1178 = vmatprep.subr.bf16.mxu0 0
    %1179 = vmatpush1.bf16.msra.mxu0 0
    %1180 = vmatprep.subr.bf16.mxu0 0
    %1181 = vmatpush1.bf16.msra.mxu0 0
    %1182 = vmatprep.subr.bf16.mxu0 0
    %1183 = vmatpush1.bf16.msra.mxu0 0
    %1184 = vmatprep.subr.bf16.mxu0 0
    %1185 = vmatpush1.bf16.msra.mxu0 0
    %1186 = vmatprep.subr.bf16.mxu0 0
    %1187 = vmatpush1.bf16.msra.mxu0 0
    %1188 = vmatprep.subr.bf16.mxu0 0
    %1189 = vmatpush1.bf16.msra.mxu0 0
    %1190 = vmatprep.subr.bf16.mxu0 0
    %1191 = vmatpush1.bf16.msra.mxu0 0
    %1192 = vmatprep.subr.bf16.mxu0 0
    %1193 = vmatpush1.bf16.msra.mxu0 0
    %1194 = vmatprep.mubr.bf16.mxu0 0
    %1195 = vmatmul.mubr.bf16.gmra.mrb[0].mxu0 %v1161
    %v1196 = vpop.f32.mrb[0].mxu0
    %v1197 = vadd.f32 0.0, %v1196
    %v1198 = vpop.f32.mrb[0].mxu0
    %v1199 = vadd.f32 0.0, %v1198
    %v1200 = vpop.f32.mrb[0].mxu0
    %v1201 = vpop.f32.mrb[0].mxu0
    %1202 = vdwg.mxu0
    %1203 = vmatprep.subr.bf16.mxu0 %v221
    %1204 = vmatpush1.bf16.msra.mxu0 %v220
    %1205 = vmatprep.subr.bf16.mxu0 %v225
    %1206 = vmatpush1.bf16.msra.mxu0 %v224
    %1207 = vmatprep.subr.bf16.mxu0 %v229
    %1208 = vmatpush1.bf16.msra.mxu0 %v228
    %1209 = vmatprep.subr.bf16.mxu0 %v233
    %1210 = vmatpush1.bf16.msra.mxu0 %v232
    %1211 = vmatprep.subr.bf16.mxu0 %v237
    %1212 = vmatpush1.bf16.msra.mxu0 %v236
    %1213 = vmatprep.subr.bf16.mxu0 %v241
    %1214 = vmatpush1.bf16.msra.mxu0 %v240
    %1215 = vmatprep.subr.bf16.mxu0 %v245
    %1216 = vmatpush1.bf16.msra.mxu0 %v244
    %1217 = vmatprep.subr.bf16.mxu0 %v249
    %1218 = vmatpush1.bf16.msra.mxu0 %v248
    %1219 = vmatprep.subr.bf16.mxu0 0
    %1220 = vmatpush1.bf16.msra.mxu0 0
    %1221 = vmatprep.subr.bf16.mxu0 0
    %1222 = vmatpush1.bf16.msra.mxu0 0
    %1223 = vmatprep.subr.bf16.mxu0 0
    %1224 = vmatpush1.bf16.msra.mxu0 0
    %1225 = vmatprep.subr.bf16.mxu0 0
    %1226 = vmatpush1.bf16.msra.mxu0 0
    %1227 = vmatprep.subr.bf16.mxu0 0
    %1228 = vmatpush1.bf16.msra.mxu0 0
    %1229 = vmatprep.subr.bf16.mxu0 0
    %1230 = vmatpush1.bf16.msra.mxu0 0
    %1231 = vmatprep.subr.bf16.mxu0 0
    %1232 = vmatpush1.bf16.msra.mxu0 0
    %1233 = vmatprep.subr.bf16.mxu0 0
    %1234 = vmatpush1.bf16.msra.mxu0 0
    %1235 = vmatprep.mubr.bf16.mxu0 0
    %1236 = vmatmul.mubr.bf16.gmra.mrb[0].mxu0 %v1161
    %v1237 = vpop.f32.mrb[0].mxu0
    %v1238 = vadd.f32 0.0, %v1237
    %v1239 = vpop.f32.mrb[0].mxu0
    %v1240 = vadd.f32 0.0, %v1239
    %v1241 = vpop.f32.mrb[0].mxu0
    %v1242 = vpop.f32.mrb[0].mxu0
    %1243 = vdwg.mxu0
    %v1244 = vadd.f32 %v1157, %v1197
    %v1245 = vadd.f32 %v1158, %v1199
    %v1246 = vadd.f32 %v1159, %v1238
    %v1247 = vadd.f32 %v1160, %v1240
    %v1248 = vxor.u32 %v1244, 2147483648
    %v1249 = vmul.f32 %v1248, 1.442695
    %v1250 = vpow.pop %v1249
    %v1251 = vadd.f32 %v1250, 1.0
    %v1252 = vrcp.pop %v1251
    %v1253 = vmul.f32 1.0, %v1252
    %v1254 = vxor.u32 %v1245, 2147483648
    %v1255 = vmul.f32 %v1254, 1.442695
    %v1256 = vpow.pop %v1255
    %v1257 = vadd.f32 %v1256, 1.0
    %v1258 = vrcp.pop %v1257
    %v1259 = vmul.f32 1.0, %v1258
    %v1260 = vtanh.pop %v1246
    %v1261 = vxor.u32 %v1247, 2147483648
    %v1262 = vmul.f32 %v1261, 1.442695
    %v1263 = vpow.pop %v1262
    %v1264 = vadd.f32 %v1263, 1.0
    %v1265 = vrcp.pop %v1264
    %v1266 = vmul.f32 1.0, %v1265
    %v1267 = vmul.f32 %v1259, %v1143
    %v1268 = vmul.f32 %v1253, %v1260
    %v1269 = vadd.f32 %v1267, %v1268
    %v1270 = vtanh.pop %v1269
    %v1271 = vmul.f32 %v1266, %v1270
    %s1272 = scalar_lea.vmem %s5, 56
    %1273 = vst [vmem:[%s1272] sm:$0xff] %v1271
    %s1274 = scalar_lea.vmem %s6, 56
    %1275 = vst [vmem:[%s1274] sm:$0xff] %v1269
    %1276 = vst [vmem:[#allocation2] sm:$0xff] %v1271
    %1277 = vst [vmem:[#allocation3] sm:$0xff] %v1269
    // Predicated region
    $region34: #{simple_rnn_decoder_forward.2} parent=1 // pred_check
      _
    $region35: #{simple_rnn_decoder_forward.2} parent=1 // pred_check_branch
      %1279 = sbr.rel (0) target = $region37
    $region36: #{simple_rnn_decoder_forward.2} parent=1 // pred_region
      _
    $region37: #{simple_rnn_decoder_forward.2} parent=1 // pred_fallthru
      _
    // Predicated region
    $region38: #{simple_rnn_decoder_forward.2} parent=1 // pred_check
      _
    $region39: #{simple_rnn_decoder_forward.2} parent=1 // pred_check_branch
      %1281 = sbr.rel (0) target = $region41
    $region40: #{simple_rnn_decoder_forward.2} parent=1 // pred_region
      _
    $region41: #{simple_rnn_decoder_forward.2} parent=1 // pred_fallthru
      _
    // Predicated region
    $region42: #{simple_rnn_decoder_forward.2} parent=1 // pred_check
      _
    $region43: #{simple_rnn_decoder_forward.2} parent=1 // pred_check_branch
      %1283 = sbr.rel (0) target = $region45
    $region44: #{simple_rnn_decoder_forward.2} parent=1 // pred_region
      _
    $region45: #{simple_rnn_decoder_forward.2} parent=1 // pred_fallthru
      _
    // Predicated region
    $region46: #{simple_rnn_decoder_forward.2} parent=1 // pred_check
      _
    $region47: #{simple_rnn_decoder_forward.2} parent=1 // pred_check_branch
      %1285 = sbr.rel (0) target = $region49
    $region48: #{simple_rnn_decoder_forward.2} parent=1 // pred_region
      _
    $region49: #{simple_rnn_decoder_forward.2} parent=1 // pred_fallthru
      _
    %1286 = vsyncpa [#allocation5], 1
    %1287 = vsyncpa [#allocation7], 1

// kernel: simple_rnn_decoder_forward.3
$region0: #{simple_rnn_decoder_forward.3}
  #allocation0 [shape = 'u32[]', space=smem, size = 0x4, offset = 0x4, fixed_abs, tag = 'smem constant byte address 0x4 - core index']
  #allocation1 [shape = 'u32[144,128]{1,0:T(1,128)}', space=vmem, size = 0x12000, scoped, tag = 'internal scratch']
  #allocation2 [shape = 'f32[64,1]{1,0:T(8,128)}', space=vmem, size = 0x8000, scoped, tag = 'scratch operand']
  #allocation3 [shape = 's32[64,1]{1,0:T(8,128)}', space=vmem, size = 0x8000, scoped, tag = 'scratch operand']
  %s0 = inlined_call_operand.vmem [shape: f32[64,256], index: 0, kind: input, shape index: {}]
  %s1 = inlined_call_operand.vmem [shape: bf16[256,1024], index: 1, kind: input, shape index: {}]
  %s2 = inlined_call_operand.vmem [shape: f32[1,1024], index: 2, kind: input, shape index: {}]
  %s3 = inlined_call_operand.hbm [shape: f32[64,1024], index: 3, kind: output, shape index: {0}]
  %s4 = inlined_call_operand.vmem [shape: s32[64,1], index: 4, kind: output, shape index: {1}]
  %5 = xla_tuple %s3, %s4
  %s6 = sld [smem:[#allocation0]]
  $region38: #{simple_rnn_decoder_forward.3} parent=0
    _
  %s8 = ssub.s32 1, %s6
  %s9 = scalar_select 0, %s8, %s6
  $region1: #{simple_rnn_decoder_forward.3} parent=0
    #allocation4 [shape = 'u8[262144]{0}', space=vmem, size = 0x40000, scoped, tag = 'output window, operand 0, single buffered']
    #allocation5 [shape = 's32[1]{0}', space=sflag, size = 0x4, scoped, tag = 'scoped memory for simple_rnn_decoder_forward.3']
    %10 = vsyncpa [#allocation5], 0
    // Predicated region
    $region2: #{simple_rnn_decoder_forward.3} parent=1 // pred_check
      _
    $region3: #{simple_rnn_decoder_forward.3} parent=1 // pred_check_branch
      %12 = sbr.rel (0) target = $region5
    $region4: #{simple_rnn_decoder_forward.3} parent=1 // pred_region
      _
    $region5: #{simple_rnn_decoder_forward.3} parent=1 // pred_fallthru
      _
    // Predicated region
    $region6: #{simple_rnn_decoder_forward.3} parent=1 // pred_check
      _
    $region7: #{simple_rnn_decoder_forward.3} parent=1 // pred_check_branch
      %14 = sbr.rel (0) target = $region9
    $region8: #{simple_rnn_decoder_forward.3} parent=1 // pred_region
      _
    $region9: #{simple_rnn_decoder_forward.3} parent=1 // pred_fallthru
      _
    // Predicated region
    $region10: #{simple_rnn_decoder_forward.3} parent=1 // pred_check
      _
    $region11: #{simple_rnn_decoder_forward.3} parent=1 // pred_check_branch
      %16 = sbr.rel (0) target = $region13
    $region12: #{simple_rnn_decoder_forward.3} parent=1 // pred_region
      _
    $region13: #{simple_rnn_decoder_forward.3} parent=1 // pred_fallthru
      _
    %v17 = vld [vmem:[%s0] sm:$0xff]
    %v18 = vld [vmem:[%s0 + $0x8] sm:$0xff]
    %v19 = vld [vmem:[%s0 + $0x10] sm:$0xff]
    %v20 = vld [vmem:[%s0 + $0x18] sm:$0xff]
    %v21 = vld [vmem:[%s0 + $0x20] sm:$0xff]
    %v22 = vld [vmem:[%s0 + $0x28] sm:$0xff]
    %v23 = vld [vmem:[%s0 + $0x30] sm:$0xff]
    %v24 = vld [vmem:[%s0 + $0x38] sm:$0xff]
    %v25 = vld [vmem:[%s0 + $0x40] sm:$0xff]
    %v26 = vld [vmem:[%s0 + $0x48] sm:$0xff]
    %v27 = vld [vmem:[%s0 + $0x50] sm:$0xff]
    %v28 = vld [vmem:[%s0 + $0x58] sm:$0xff]
    %v29 = vld [vmem:[%s0 + $0x60] sm:$0xff]
    %v30 = vld [vmem:[%s0 + $0x68] sm:$0xff]
    %v31 = vld [vmem:[%s0 + $0x70] sm:$0xff]
    %v32 = vld [vmem:[%s0 + $0x78] sm:$0xff]
    %v33 = vpack.c.bf16 %v19, %v17
    %v34 = vpack.c.bf16 %v20, %v18
    %v35 = vpack.c.bf16 %v23, %v21
    %v36 = vpack.c.bf16 %v24, %v22
    %v37 = vpack.c.bf16 %v27, %v25
    %v38 = vpack.c.bf16 %v28, %v26
    %v39 = vpack.c.bf16 %v31, %v29
    %v40 = vpack.c.bf16 %v32, %v30
    %v41 = vld [vmem:[%s1] sm:$0xff]
    %v42 = vld [vmem:[%s1 + $0x8] sm:$0xff]
    %v43 = vld [vmem:[%s1 + $0x10] sm:$0xff]
    %v44 = vld [vmem:[%s1 + $0x18] sm:$0xff]
    %v45 = vld [vmem:[%s1 + $0x20] sm:$0xff]
    %v46 = vld [vmem:[%s1 + $0x28] sm:$0xff]
    %v47 = vld [vmem:[%s1 + $0x30] sm:$0xff]
    %v48 = vld [vmem:[%s1 + $0x38] sm:$0xff]
    %v49 = vld [vmem:[%s1 + $0x40] sm:$0xff]
    %v50 = vld [vmem:[%s1 + $0x48] sm:$0xff]
    %v51 = vld [vmem:[%s1 + $0x50] sm:$0xff]
    %v52 = vld [vmem:[%s1 + $0x58] sm:$0xff]
    %v53 = vld [vmem:[%s1 + $0x60] sm:$0xff]
    %v54 = vld [vmem:[%s1 + $0x68] sm:$0xff]
    %v55 = vld [vmem:[%s1 + $0x70] sm:$0xff]
    %v56 = vld [vmem:[%s1 + $0x78] sm:$0xff]
    %v57 = vld [vmem:[%s1 + $0x80] sm:$0xff]
    %v58 = vld [vmem:[%s1 + $0x88] sm:$0xff]
    %v59 = vld [vmem:[%s1 + $0x90] sm:$0xff]
    %v60 = vld [vmem:[%s1 + $0x98] sm:$0xff]
    %v61 = vld [vmem:[%s1 + $0xa0] sm:$0xff]
    %v62 = vld [vmem:[%s1 + $0xa8] sm:$0xff]
    %v63 = vld [vmem:[%s1 + $0xb0] sm:$0xff]
    %v64 = vld [vmem:[%s1 + $0xb8] sm:$0xff]
    %v65 = vld [vmem:[%s1 + $0xc0] sm:$0xff]
    %v66 = vld [vmem:[%s1 + $0xc8] sm:$0xff]
    %v67 = vld [vmem:[%s1 + $0xd0] sm:$0xff]
    %v68 = vld [vmem:[%s1 + $0xd8] sm:$0xff]
    %v69 = vld [vmem:[%s1 + $0xe0] sm:$0xff]
    %v70 = vld [vmem:[%s1 + $0xe8] sm:$0xff]
    %v71 = vld [vmem:[%s1 + $0xf0] sm:$0xff]
    %v72 = vld [vmem:[%s1 + $0xf8] sm:$0xff]
    %v73 = vld [vmem:[%s1 + $0x100] sm:$0xff]
    %v74 = vld [vmem:[%s1 + $0x108] sm:$0xff]
    %v75 = vld [vmem:[%s1 + $0x110] sm:$0xff]
    %v76 = vld [vmem:[%s1 + $0x118] sm:$0xff]
    %v77 = vld [vmem:[%s1 + $0x120] sm:$0xff]
    %v78 = vld [vmem:[%s1 + $0x128] sm:$0xff]
    %v79 = vld [vmem:[%s1 + $0x130] sm:$0xff]
    %v80 = vld [vmem:[%s1 + $0x138] sm:$0xff]
    %v81 = vld [vmem:[%s1 + $0x140] sm:$0xff]
    %v82 = vld [vmem:[%s1 + $0x148] sm:$0xff]
    %v83 = vld [vmem:[%s1 + $0x150] sm:$0xff]
    %v84 = vld [vmem:[%s1 + $0x158] sm:$0xff]
    %v85 = vld [vmem:[%s1 + $0x160] sm:$0xff]
    %v86 = vld [vmem:[%s1 + $0x168] sm:$0xff]
    %v87 = vld [vmem:[%s1 + $0x170] sm:$0xff]
    %v88 = vld [vmem:[%s1 + $0x178] sm:$0xff]
    %v89 = vld [vmem:[%s1 + $0x180] sm:$0xff]
    %v90 = vld [vmem:[%s1 + $0x188] sm:$0xff]
    %v91 = vld [vmem:[%s1 + $0x190] sm:$0xff]
    %v92 = vld [vmem:[%s1 + $0x198] sm:$0xff]
    %v93 = vld [vmem:[%s1 + $0x1a0] sm:$0xff]
    %v94 = vld [vmem:[%s1 + $0x1a8] sm:$0xff]
    %v95 = vld [vmem:[%s1 + $0x1b0] sm:$0xff]
    %v96 = vld [vmem:[%s1 + $0x1b8] sm:$0xff]
    %v97 = vld [vmem:[%s1 + $0x1c0] sm:$0xff]
    %v98 = vld [vmem:[%s1 + $0x1c8] sm:$0xff]
    %v99 = vld [vmem:[%s1 + $0x1d0] sm:$0xff]
    %v100 = vld [vmem:[%s1 + $0x1d8] sm:$0xff]
    %v101 = vld [vmem:[%s1 + $0x1e0] sm:$0xff]
    %v102 = vld [vmem:[%s1 + $0x1e8] sm:$0xff]
    %v103 = vld [vmem:[%s1 + $0x1f0] sm:$0xff]
    %v104 = vld [vmem:[%s1 + $0x1f8] sm:$0xff]
    %v105 = vld [vmem:[%s1 + $0x200] sm:$0xff]
    %v106 = vld [vmem:[%s1 + $0x208] sm:$0xff]
    %v107 = vld [vmem:[%s1 + $0x210] sm:$0xff]
    %v108 = vld [vmem:[%s1 + $0x218] sm:$0xff]
    %v109 = vld [vmem:[%s1 + $0x220] sm:$0xff]
    %v110 = vld [vmem:[%s1 + $0x228] sm:$0xff]
    %v111 = vld [vmem:[%s1 + $0x230] sm:$0xff]
    %v112 = vld [vmem:[%s1 + $0x238] sm:$0xff]
    %v113 = vld [vmem:[%s1 + $0x240] sm:$0xff]
    %v114 = vld [vmem:[%s1 + $0x248] sm:$0xff]
    %v115 = vld [vmem:[%s1 + $0x250] sm:$0xff]
    %v116 = vld [vmem:[%s1 + $0x258] sm:$0xff]
    %v117 = vld [vmem:[%s1 + $0x260] sm:$0xff]
    %v118 = vld [vmem:[%s1 + $0x268] sm:$0xff]
    %v119 = vld [vmem:[%s1 + $0x270] sm:$0xff]
    %v120 = vld [vmem:[%s1 + $0x278] sm:$0xff]
    %v121 = vld [vmem:[%s1 + $0x280] sm:$0xff]
    %v122 = vld [vmem:[%s1 + $0x288] sm:$0xff]
    %v123 = vld [vmem:[%s1 + $0x290] sm:$0xff]
    %v124 = vld [vmem:[%s1 + $0x298] sm:$0xff]
    %v125 = vld [vmem:[%s1 + $0x2a0] sm:$0xff]
    %v126 = vld [vmem:[%s1 + $0x2a8] sm:$0xff]
    %v127 = vld [vmem:[%s1 + $0x2b0] sm:$0xff]
    %v128 = vld [vmem:[%s1 + $0x2b8] sm:$0xff]
    %v129 = vld [vmem:[%s1 + $0x2c0] sm:$0xff]
    %v130 = vld [vmem:[%s1 + $0x2c8] sm:$0xff]
    %v131 = vld [vmem:[%s1 + $0x2d0] sm:$0xff]
    %v132 = vld [vmem:[%s1 + $0x2d8] sm:$0xff]
    %v133 = vld [vmem:[%s1 + $0x2e0] sm:$0xff]
    %v134 = vld [vmem:[%s1 + $0x2e8] sm:$0xff]
    %v135 = vld [vmem:[%s1 + $0x2f0] sm:$0xff]
    %v136 = vld [vmem:[%s1 + $0x2f8] sm:$0xff]
    %v137 = vld [vmem:[%s1 + $0x300] sm:$0xff]
    %v138 = vld [vmem:[%s1 + $0x308] sm:$0xff]
    %v139 = vld [vmem:[%s1 + $0x310] sm:$0xff]
    %v140 = vld [vmem:[%s1 + $0x318] sm:$0xff]
    %v141 = vld [vmem:[%s1 + $0x320] sm:$0xff]
    %v142 = vld [vmem:[%s1 + $0x328] sm:$0xff]
    %v143 = vld [vmem:[%s1 + $0x330] sm:$0xff]
    %v144 = vld [vmem:[%s1 + $0x338] sm:$0xff]
    %v145 = vld [vmem:[%s1 + $0x340] sm:$0xff]
    %v146 = vld [vmem:[%s1 + $0x348] sm:$0xff]
    %v147 = vld [vmem:[%s1 + $0x350] sm:$0xff]
    %v148 = vld [vmem:[%s1 + $0x358] sm:$0xff]
    %v149 = vld [vmem:[%s1 + $0x360] sm:$0xff]
    %v150 = vld [vmem:[%s1 + $0x368] sm:$0xff]
    %v151 = vld [vmem:[%s1 + $0x370] sm:$0xff]
    %v152 = vld [vmem:[%s1 + $0x378] sm:$0xff]
    %v153 = vld [vmem:[%s1 + $0x380] sm:$0xff]
    %v154 = vld [vmem:[%s1 + $0x388] sm:$0xff]
    %v155 = vld [vmem:[%s1 + $0x390] sm:$0xff]
    %v156 = vld [vmem:[%s1 + $0x398] sm:$0xff]
    %v157 = vld [vmem:[%s1 + $0x3a0] sm:$0xff]
    %v158 = vld [vmem:[%s1 + $0x3a8] sm:$0xff]
    %v159 = vld [vmem:[%s1 + $0x3b0] sm:$0xff]
    %v160 = vld [vmem:[%s1 + $0x3b8] sm:$0xff]
    %v161 = vld [vmem:[%s1 + $0x3c0] sm:$0xff]
    %v162 = vld [vmem:[%s1 + $0x3c8] sm:$0xff]
    %v163 = vld [vmem:[%s1 + $0x3d0] sm:$0xff]
    %v164 = vld [vmem:[%s1 + $0x3d8] sm:$0xff]
    %v165 = vld [vmem:[%s1 + $0x3e0] sm:$0xff]
    %v166 = vld [vmem:[%s1 + $0x3e8] sm:$0xff]
    %v167 = vld [vmem:[%s1 + $0x3f0] sm:$0xff]
    %v168 = vld [vmem:[%s1 + $0x3f8] sm:$0xff]
    %v169 = vld [vmem:[%s2] sm:$0xff]
    %v171 = vlaneseq
    %v172 = vshrl.u32 %v171, 7
    %v173 = vsub.s32 0, %v172
    %v174 = vrot.slane %v169, %v173
    %v175 = vlaneseq
    %v176 = vshrl.u32 %v175, 7
    %v177 = vsub.s32 1, %v176
    %v178 = vrot.slane %v169, %v177
    %v179 = vlaneseq
    %v180 = vshrl.u32 %v179, 7
    %v181 = vsub.s32 2, %v180
    %v182 = vrot.slane %v169, %v181
    %v183 = vlaneseq
    %v184 = vshrl.u32 %v183, 7
    %v185 = vsub.s32 3, %v184
    %v186 = vrot.slane %v169, %v185
    %v187 = vlaneseq
    %v188 = vshrl.u32 %v187, 7
    %v189 = vsub.s32 4, %v188
    %v190 = vrot.slane %v169, %v189
    %v191 = vlaneseq
    %v192 = vshrl.u32 %v191, 7
    %v193 = vsub.s32 5, %v192
    %v194 = vrot.slane %v169, %v193
    %v195 = vlaneseq
    %v196 = vshrl.u32 %v195, 7
    %v197 = vsub.s32 6, %v196
    %v198 = vrot.slane %v169, %v197
    %v199 = vlaneseq
    %v200 = vshrl.u32 %v199, 7
    %v201 = vsub.s32 7, %v200
    %v202 = vrot.slane %v169, %v201
    %v339 = vunpack.c.l.b16 %v41
    %v340 = vunpack.c.h.b16 %v41
    %v341 = vunpack.c.l.b16 %v42
    %v342 = vunpack.c.h.b16 %v42
    %v343 = vunpack.c.l.b16 %v43
    %v344 = vunpack.c.h.b16 %v43
    %v345 = vunpack.c.l.b16 %v44
    %v346 = vunpack.c.h.b16 %v44
    %v347 = vunpack.c.l.b16 %v45
    %v348 = vunpack.c.h.b16 %v45
    %v349 = vunpack.c.l.b16 %v46
    %v350 = vunpack.c.h.b16 %v46
    %v351 = vunpack.c.l.b16 %v47
    %v352 = vunpack.c.h.b16 %v47
    %v353 = vunpack.c.l.b16 %v48
    %v354 = vunpack.c.h.b16 %v48
    %v355 = vunpack.c.l.b16 %v49
    %v356 = vunpack.c.h.b16 %v49
    %v357 = vunpack.c.l.b16 %v50
    %v358 = vunpack.c.h.b16 %v50
    %v359 = vunpack.c.l.b16 %v51
    %v360 = vunpack.c.h.b16 %v51
    %v361 = vunpack.c.l.b16 %v52
    %v362 = vunpack.c.h.b16 %v52
    %v363 = vunpack.c.l.b16 %v53
    %v364 = vunpack.c.h.b16 %v53
    %v365 = vunpack.c.l.b16 %v54
    %v366 = vunpack.c.h.b16 %v54
    %v367 = vunpack.c.l.b16 %v55
    %v368 = vunpack.c.h.b16 %v55
    %v369 = vunpack.c.l.b16 %v56
    %v370 = vunpack.c.h.b16 %v56
    %v371 = vunpack.c.l.b16 %v57
    %v372 = vunpack.c.h.b16 %v57
    %v373 = vunpack.c.l.b16 %v58
    %v374 = vunpack.c.h.b16 %v58
    %v375 = vunpack.c.l.b16 %v59
    %v376 = vunpack.c.h.b16 %v59
    %v377 = vunpack.c.l.b16 %v60
    %v378 = vunpack.c.h.b16 %v60
    %v379 = vunpack.c.l.b16 %v61
    %v380 = vunpack.c.h.b16 %v61
    %v381 = vunpack.c.l.b16 %v62
    %v382 = vunpack.c.h.b16 %v62
    %v383 = vunpack.c.l.b16 %v63
    %v384 = vunpack.c.h.b16 %v63
    %v385 = vunpack.c.l.b16 %v64
    %v386 = vunpack.c.h.b16 %v64
    %v387 = vunpack.c.l.b16 %v65
    %v388 = vunpack.c.h.b16 %v65
    %v389 = vunpack.c.l.b16 %v66
    %v390 = vunpack.c.h.b16 %v66
    %v391 = vunpack.c.l.b16 %v67
    %v392 = vunpack.c.h.b16 %v67
    %v393 = vunpack.c.l.b16 %v68
    %v394 = vunpack.c.h.b16 %v68
    %v395 = vunpack.c.l.b16 %v69
    %v396 = vunpack.c.h.b16 %v69
    %v397 = vunpack.c.l.b16 %v70
    %v398 = vunpack.c.h.b16 %v70
    %v399 = vunpack.c.l.b16 %v71
    %v400 = vunpack.c.h.b16 %v71
    %v401 = vunpack.c.l.b16 %v72
    %v402 = vunpack.c.h.b16 %v72
    %v403 = vunpack.c.l.b16 %v73
    %v404 = vunpack.c.h.b16 %v73
    %v405 = vunpack.c.l.b16 %v74
    %v406 = vunpack.c.h.b16 %v74
    %v407 = vunpack.c.l.b16 %v75
    %v408 = vunpack.c.h.b16 %v75
    %v409 = vunpack.c.l.b16 %v76
    %v410 = vunpack.c.h.b16 %v76
    %v411 = vunpack.c.l.b16 %v77
    %v412 = vunpack.c.h.b16 %v77
    %v413 = vunpack.c.l.b16 %v78
    %v414 = vunpack.c.h.b16 %v78
    %v415 = vunpack.c.l.b16 %v79
    %v416 = vunpack.c.h.b16 %v79
    %v417 = vunpack.c.l.b16 %v80
    %v418 = vunpack.c.h.b16 %v80
    %v419 = vunpack.c.l.b16 %v81
    %v420 = vunpack.c.h.b16 %v81
    %v421 = vunpack.c.l.b16 %v82
    %v422 = vunpack.c.h.b16 %v82
    %v423 = vunpack.c.l.b16 %v83
    %v424 = vunpack.c.h.b16 %v83
    %v425 = vunpack.c.l.b16 %v84
    %v426 = vunpack.c.h.b16 %v84
    %v427 = vunpack.c.l.b16 %v85
    %v428 = vunpack.c.h.b16 %v85
    %v429 = vunpack.c.l.b16 %v86
    %v430 = vunpack.c.h.b16 %v86
    %v431 = vunpack.c.l.b16 %v87
    %v432 = vunpack.c.h.b16 %v87
    %v433 = vunpack.c.l.b16 %v88
    %v434 = vunpack.c.h.b16 %v88
    %v435 = vunpack.c.l.b16 %v89
    %v436 = vunpack.c.h.b16 %v89
    %v437 = vunpack.c.l.b16 %v90
    %v438 = vunpack.c.h.b16 %v90
    %v439 = vunpack.c.l.b16 %v91
    %v440 = vunpack.c.h.b16 %v91
    %v441 = vunpack.c.l.b16 %v92
    %v442 = vunpack.c.h.b16 %v92
    %v443 = vunpack.c.l.b16 %v93
    %v444 = vunpack.c.h.b16 %v93
    %v445 = vunpack.c.l.b16 %v94
    %v446 = vunpack.c.h.b16 %v94
    %v447 = vunpack.c.l.b16 %v95
    %v448 = vunpack.c.h.b16 %v95
    %v449 = vunpack.c.l.b16 %v96
    %v450 = vunpack.c.h.b16 %v96
    %v451 = vunpack.c.l.b16 %v97
    %v452 = vunpack.c.h.b16 %v97
    %v453 = vunpack.c.l.b16 %v98
    %v454 = vunpack.c.h.b16 %v98
    %v455 = vunpack.c.l.b16 %v99
    %v456 = vunpack.c.h.b16 %v99
    %v457 = vunpack.c.l.b16 %v100
    %v458 = vunpack.c.h.b16 %v100
    %v459 = vunpack.c.l.b16 %v101
    %v460 = vunpack.c.h.b16 %v101
    %v461 = vunpack.c.l.b16 %v102
    %v462 = vunpack.c.h.b16 %v102
    %v463 = vunpack.c.l.b16 %v103
    %v464 = vunpack.c.h.b16 %v103
    %v465 = vunpack.c.l.b16 %v104
    %v466 = vunpack.c.h.b16 %v104
    %v467 = vunpack.c.l.b16 %v105
    %v468 = vunpack.c.h.b16 %v105
    %v469 = vunpack.c.l.b16 %v106
    %v470 = vunpack.c.h.b16 %v106
    %v471 = vunpack.c.l.b16 %v107
    %v472 = vunpack.c.h.b16 %v107
    %v473 = vunpack.c.l.b16 %v108
    %v474 = vunpack.c.h.b16 %v108
    %v475 = vunpack.c.l.b16 %v109
    %v476 = vunpack.c.h.b16 %v109
    %v477 = vunpack.c.l.b16 %v110
    %v478 = vunpack.c.h.b16 %v110
    %v479 = vunpack.c.l.b16 %v111
    %v480 = vunpack.c.h.b16 %v111
    %v481 = vunpack.c.l.b16 %v112
    %v482 = vunpack.c.h.b16 %v112
    %v483 = vunpack.c.l.b16 %v113
    %v484 = vunpack.c.h.b16 %v113
    %v485 = vunpack.c.l.b16 %v114
    %v486 = vunpack.c.h.b16 %v114
    %v487 = vunpack.c.l.b16 %v115
    %v488 = vunpack.c.h.b16 %v115
    %v489 = vunpack.c.l.b16 %v116
    %v490 = vunpack.c.h.b16 %v116
    %v491 = vunpack.c.l.b16 %v117
    %v492 = vunpack.c.h.b16 %v117
    %v493 = vunpack.c.l.b16 %v118
    %v494 = vunpack.c.h.b16 %v118
    %v495 = vunpack.c.l.b16 %v119
    %v496 = vunpack.c.h.b16 %v119
    %v497 = vunpack.c.l.b16 %v120
    %v498 = vunpack.c.h.b16 %v120
    %v499 = vunpack.c.l.b16 %v121
    %v500 = vunpack.c.h.b16 %v121
    %v501 = vunpack.c.l.b16 %v122
    %v502 = vunpack.c.h.b16 %v122
    %v503 = vunpack.c.l.b16 %v123
    %v504 = vunpack.c.h.b16 %v123
    %v505 = vunpack.c.l.b16 %v124
    %v506 = vunpack.c.h.b16 %v124
    %v507 = vunpack.c.l.b16 %v125
    %v508 = vunpack.c.h.b16 %v125
    %v509 = vunpack.c.l.b16 %v126
    %v510 = vunpack.c.h.b16 %v126
    %v511 = vunpack.c.l.b16 %v127
    %v512 = vunpack.c.h.b16 %v127
    %v513 = vunpack.c.l.b16 %v128
    %v514 = vunpack.c.h.b16 %v128
    %v515 = vunpack.c.l.b16 %v129
    %v516 = vunpack.c.h.b16 %v129
    %v517 = vunpack.c.l.b16 %v130
    %v518 = vunpack.c.h.b16 %v130
    %v519 = vunpack.c.l.b16 %v131
    %v520 = vunpack.c.h.b16 %v131
    %v521 = vunpack.c.l.b16 %v132
    %v522 = vunpack.c.h.b16 %v132
    %v523 = vunpack.c.l.b16 %v133
    %v524 = vunpack.c.h.b16 %v133
    %v525 = vunpack.c.l.b16 %v134
    %v526 = vunpack.c.h.b16 %v134
    %v527 = vunpack.c.l.b16 %v135
    %v528 = vunpack.c.h.b16 %v135
    %v529 = vunpack.c.l.b16 %v136
    %v530 = vunpack.c.h.b16 %v136
    %v531 = vunpack.c.l.b16 %v137
    %v532 = vunpack.c.h.b16 %v137
    %v533 = vunpack.c.l.b16 %v138
    %v534 = vunpack.c.h.b16 %v138
    %v535 = vunpack.c.l.b16 %v139
    %v536 = vunpack.c.h.b16 %v139
    %v537 = vunpack.c.l.b16 %v140
    %v538 = vunpack.c.h.b16 %v140
    %v539 = vunpack.c.l.b16 %v141
    %v540 = vunpack.c.h.b16 %v141
    %v541 = vunpack.c.l.b16 %v142
    %v542 = vunpack.c.h.b16 %v142
    %v543 = vunpack.c.l.b16 %v143
    %v544 = vunpack.c.h.b16 %v143
    %v545 = vunpack.c.l.b16 %v144
    %v546 = vunpack.c.h.b16 %v144
    %v547 = vunpack.c.l.b16 %v145
    %v548 = vunpack.c.h.b16 %v145
    %v549 = vunpack.c.l.b16 %v146
    %v550 = vunpack.c.h.b16 %v146
    %v551 = vunpack.c.l.b16 %v147
    %v552 = vunpack.c.h.b16 %v147
    %v553 = vunpack.c.l.b16 %v148
    %v554 = vunpack.c.h.b16 %v148
    %v555 = vunpack.c.l.b16 %v149
    %v556 = vunpack.c.h.b16 %v149
    %v557 = vunpack.c.l.b16 %v150
    %v558 = vunpack.c.h.b16 %v150
    %v559 = vunpack.c.l.b16 %v151
    %v560 = vunpack.c.h.b16 %v151
    %v561 = vunpack.c.l.b16 %v152
    %v562 = vunpack.c.h.b16 %v152
    %v563 = vunpack.c.l.b16 %v153
    %v564 = vunpack.c.h.b16 %v153
    %v565 = vunpack.c.l.b16 %v154
    %v566 = vunpack.c.h.b16 %v154
    %v567 = vunpack.c.l.b16 %v155
    %v568 = vunpack.c.h.b16 %v155
    %v569 = vunpack.c.l.b16 %v156
    %v570 = vunpack.c.h.b16 %v156
    %v571 = vunpack.c.l.b16 %v157
    %v572 = vunpack.c.h.b16 %v157
    %v573 = vunpack.c.l.b16 %v158
    %v574 = vunpack.c.h.b16 %v158
    %v575 = vunpack.c.l.b16 %v159
    %v576 = vunpack.c.h.b16 %v159
    %v577 = vunpack.c.l.b16 %v160
    %v578 = vunpack.c.h.b16 %v160
    %v579 = vunpack.c.l.b16 %v161
    %v580 = vunpack.c.h.b16 %v161
    %v581 = vunpack.c.l.b16 %v162
    %v582 = vunpack.c.h.b16 %v162
    %v583 = vunpack.c.l.b16 %v163
    %v584 = vunpack.c.h.b16 %v163
    %v585 = vunpack.c.l.b16 %v164
    %v586 = vunpack.c.h.b16 %v164
    %v587 = vunpack.c.l.b16 %v165
    %v588 = vunpack.c.h.b16 %v165
    %v589 = vunpack.c.l.b16 %v166
    %v590 = vunpack.c.h.b16 %v166
    %v591 = vunpack.c.l.b16 %v167
    %v592 = vunpack.c.h.b16 %v167
    %v593 = vunpack.c.l.b16 %v168
    %v594 = vunpack.c.h.b16 %v168
    %v595 = vpack.c.b16 %v347, %v339
    %v596 = vpack.c.b16 %v348, %v340
    %v597 = vpack.c.b16 %v349, %v341
    %v598 = vpack.c.b16 %v350, %v342
    %v599 = vpack.c.b16 %v351, %v343
    %v600 = vpack.c.b16 %v352, %v344
    %v601 = vpack.c.b16 %v353, %v345
    %v602 = vpack.c.b16 %v354, %v346
    %v603 = vpack.c.b16 %v363, %v355
    %v604 = vpack.c.b16 %v364, %v356
    %v605 = vpack.c.b16 %v365, %v357
    %v606 = vpack.c.b16 %v366, %v358
    %v607 = vpack.c.b16 %v367, %v359
    %v608 = vpack.c.b16 %v368, %v360
    %v609 = vpack.c.b16 %v369, %v361
    %v610 = vpack.c.b16 %v370, %v362
    %v611 = vpack.c.b16 %v379, %v371
    %v612 = vpack.c.b16 %v380, %v372
    %v613 = vpack.c.b16 %v381, %v373
    %v614 = vpack.c.b16 %v382, %v374
    %v615 = vpack.c.b16 %v383, %v375
    %v616 = vpack.c.b16 %v384, %v376
    %v617 = vpack.c.b16 %v385, %v377
    %v618 = vpack.c.b16 %v386, %v378
    %v619 = vpack.c.b16 %v395, %v387
    %v620 = vpack.c.b16 %v396, %v388
    %v621 = vpack.c.b16 %v397, %v389
    %v622 = vpack.c.b16 %v398, %v390
    %v623 = vpack.c.b16 %v399, %v391
    %v624 = vpack.c.b16 %v400, %v392
    %v625 = vpack.c.b16 %v401, %v393
    %v626 = vpack.c.b16 %v402, %v394
    %v627 = vpack.c.b16 %v411, %v403
    %v628 = vpack.c.b16 %v412, %v404
    %v629 = vpack.c.b16 %v413, %v405
    %v630 = vpack.c.b16 %v414, %v406
    %v631 = vpack.c.b16 %v415, %v407
    %v632 = vpack.c.b16 %v416, %v408
    %v633 = vpack.c.b16 %v417, %v409
    %v634 = vpack.c.b16 %v418, %v410
    %v635 = vpack.c.b16 %v427, %v419
    %v636 = vpack.c.b16 %v428, %v420
    %v637 = vpack.c.b16 %v429, %v421
    %v638 = vpack.c.b16 %v430, %v422
    %v639 = vpack.c.b16 %v431, %v423
    %v640 = vpack.c.b16 %v432, %v424
    %v641 = vpack.c.b16 %v433, %v425
    %v642 = vpack.c.b16 %v434, %v426
    %v643 = vpack.c.b16 %v443, %v435
    %v644 = vpack.c.b16 %v444, %v436
    %v645 = vpack.c.b16 %v445, %v437
    %v646 = vpack.c.b16 %v446, %v438
    %v647 = vpack.c.b16 %v447, %v439
    %v648 = vpack.c.b16 %v448, %v440
    %v649 = vpack.c.b16 %v449, %v441
    %v650 = vpack.c.b16 %v450, %v442
    %v651 = vpack.c.b16 %v459, %v451
    %v652 = vpack.c.b16 %v460, %v452
    %v653 = vpack.c.b16 %v461, %v453
    %v654 = vpack.c.b16 %v462, %v454
    %v655 = vpack.c.b16 %v463, %v455
    %v656 = vpack.c.b16 %v464, %v456
    %v657 = vpack.c.b16 %v465, %v457
    %v658 = vpack.c.b16 %v466, %v458
    %v659 = vpack.c.b16 %v475, %v467
    %v660 = vpack.c.b16 %v476, %v468
    %v661 = vpack.c.b16 %v477, %v469
    %v662 = vpack.c.b16 %v478, %v470
    %v663 = vpack.c.b16 %v479, %v471
    %v664 = vpack.c.b16 %v480, %v472
    %v665 = vpack.c.b16 %v481, %v473
    %v666 = vpack.c.b16 %v482, %v474
    %v667 = vpack.c.b16 %v491, %v483
    %v668 = vpack.c.b16 %v492, %v484
    %v669 = vpack.c.b16 %v493, %v485
    %v670 = vpack.c.b16 %v494, %v486
    %v671 = vpack.c.b16 %v495, %v487
    %v672 = vpack.c.b16 %v496, %v488
    %v673 = vpack.c.b16 %v497, %v489
    %v674 = vpack.c.b16 %v498, %v490
    %v675 = vpack.c.b16 %v507, %v499
    %v676 = vpack.c.b16 %v508, %v500
    %v677 = vpack.c.b16 %v509, %v501
    %v678 = vpack.c.b16 %v510, %v502
    %v679 = vpack.c.b16 %v511, %v503
    %v680 = vpack.c.b16 %v512, %v504
    %v681 = vpack.c.b16 %v513, %v505
    %v682 = vpack.c.b16 %v514, %v506
    %v683 = vpack.c.b16 %v523, %v515
    %v684 = vpack.c.b16 %v524, %v516
    %v685 = vpack.c.b16 %v525, %v517
    %v686 = vpack.c.b16 %v526, %v518
    %v687 = vpack.c.b16 %v527, %v519
    %v688 = vpack.c.b16 %v528, %v520
    %v689 = vpack.c.b16 %v529, %v521
    %v690 = vpack.c.b16 %v530, %v522
    %v691 = vpack.c.b16 %v539, %v531
    %v692 = vpack.c.b16 %v540, %v532
    %v693 = vpack.c.b16 %v541, %v533
    %v694 = vpack.c.b16 %v542, %v534
    %v695 = vpack.c.b16 %v543, %v535
    %v696 = vpack.c.b16 %v544, %v536
    %v697 = vpack.c.b16 %v545, %v537
    %v698 = vpack.c.b16 %v546, %v538
    %v699 = vpack.c.b16 %v555, %v547
    %v700 = vpack.c.b16 %v556, %v548
    %v701 = vpack.c.b16 %v557, %v549
    %v702 = vpack.c.b16 %v558, %v550
    %v703 = vpack.c.b16 %v559, %v551
    %v704 = vpack.c.b16 %v560, %v552
    %v705 = vpack.c.b16 %v561, %v553
    %v706 = vpack.c.b16 %v562, %v554
    %v707 = vpack.c.b16 %v571, %v563
    %v708 = vpack.c.b16 %v572, %v564
    %v709 = vpack.c.b16 %v573, %v565
    %v710 = vpack.c.b16 %v574, %v566
    %v711 = vpack.c.b16 %v575, %v567
    %v712 = vpack.c.b16 %v576, %v568
    %v713 = vpack.c.b16 %v577, %v569
    %v714 = vpack.c.b16 %v578, %v570
    %v715 = vpack.c.b16 %v587, %v579
    %v716 = vpack.c.b16 %v588, %v580
    %v717 = vpack.c.b16 %v589, %v581
    %v718 = vpack.c.b16 %v590, %v582
    %v719 = vpack.c.b16 %v591, %v583
    %v720 = vpack.c.b16 %v592, %v584
    %v721 = vpack.c.b16 %v593, %v585
    %v722 = vpack.c.b16 %v594, %v586
    %851 = vmatprep.subr.bf16.mxu0 %v596
    %852 = vmatpush1.bf16.msra.mxu0 %v595
    %853 = vmatprep.subr.bf16.mxu0 %v604
    %854 = vmatpush1.bf16.msra.mxu0 %v603
    %855 = vmatprep.subr.bf16.mxu0 %v612
    %856 = vmatpush1.bf16.msra.mxu0 %v611
    %857 = vmatprep.subr.bf16.mxu0 %v620
    %858 = vmatpush1.bf16.msra.mxu0 %v619
    %859 = vmatprep.subr.bf16.mxu0 %v628
    %860 = vmatpush1.bf16.msra.mxu0 %v627
    %861 = vmatprep.subr.bf16.mxu0 %v636
    %862 = vmatpush1.bf16.msra.mxu0 %v635
    %863 = vmatprep.subr.bf16.mxu0 %v644
    %864 = vmatpush1.bf16.msra.mxu0 %v643
    %865 = vmatprep.subr.bf16.mxu0 %v652
    %866 = vmatpush1.bf16.msra.mxu0 %v651
    %867 = vmatprep.subr.bf16.mxu0 %v660
    %868 = vmatpush1.bf16.msra.mxu0 %v659
    %869 = vmatprep.subr.bf16.mxu0 %v668
    %870 = vmatpush1.bf16.msra.mxu0 %v667
    %871 = vmatprep.subr.bf16.mxu0 %v676
    %872 = vmatpush1.bf16.msra.mxu0 %v675
    %873 = vmatprep.subr.bf16.mxu0 %v684
    %874 = vmatpush1.bf16.msra.mxu0 %v683
    %875 = vmatprep.subr.bf16.mxu0 %v692
    %876 = vmatpush1.bf16.msra.mxu0 %v691
    %877 = vmatprep.subr.bf16.mxu0 %v700
    %878 = vmatpush1.bf16.msra.mxu0 %v699
    %879 = vmatprep.subr.bf16.mxu0 %v708
    %880 = vmatpush1.bf16.msra.mxu0 %v707
    %881 = vmatprep.subr.bf16.mxu0 %v716
    %882 = vmatpush1.bf16.msra.mxu0 %v715
    %883 = vmatprep.mubr.bf16.mxu0 %v34
    %884 = vmatmul.mubr.bf16.gmra.mrb[0].mxu0 %v33
    %v885 = vpop.f32.mrb[0].mxu0
    %v886 = vadd.f32 %v174, %v885
    %v887 = vpop.f32.mrb[0].mxu0
    %v888 = vadd.f32 %v178, %v887
    %v889 = vpop.f32.mrb[0].mxu0
    %v890 = vadd.f32 %v174, %v889
    %v891 = vpop.f32.mrb[0].mxu0
    %v892 = vadd.f32 %v178, %v891
    %893 = vmatprep.mubr.bf16.mxu0 %v36
    %894 = vmatmul.mubr.bf16.gmra.mrb[0].mxu0 %v35
    %v895 = vpop.f32.mrb[0].mxu0
    %v896 = vadd.f32 %v174, %v895
    %v897 = vpop.f32.mrb[0].mxu0
    %v898 = vadd.f32 %v178, %v897
    %v899 = vpop.f32.mrb[0].mxu0
    %v900 = vadd.f32 %v174, %v899
    %v901 = vpop.f32.mrb[0].mxu0
    %v902 = vadd.f32 %v178, %v901
    %903 = vmatprep.mubr.bf16.mxu0 %v38
    %904 = vmatmul.mubr.bf16.gmra.mrb[0].mxu0 %v37
    %v905 = vpop.f32.mrb[0].mxu0
    %v906 = vadd.f32 %v174, %v905
    %v907 = vpop.f32.mrb[0].mxu0
    %v908 = vadd.f32 %v178, %v907
    %v909 = vpop.f32.mrb[0].mxu0
    %v910 = vadd.f32 %v174, %v909
    %v911 = vpop.f32.mrb[0].mxu0
    %v912 = vadd.f32 %v178, %v911
    %913 = vmatprep.mubr.bf16.mxu0 %v40
    %914 = vmatmul.mubr.bf16.gmra.mrb[0].mxu0 %v39
    %v915 = vpop.f32.mrb[0].mxu0
    %v916 = vadd.f32 %v174, %v915
    %v917 = vpop.f32.mrb[0].mxu0
    %v918 = vadd.f32 %v178, %v917
    %v919 = vpop.f32.mrb[0].mxu0
    %v920 = vadd.f32 %v174, %v919
    %v921 = vpop.f32.mrb[0].mxu0
    %v922 = vadd.f32 %v178, %v921
    %923 = vdwg.mxu0
    %924 = vmatprep.subr.bf16.mxu0 %v598
    %925 = vmatpush1.bf16.msra.mxu0 %v597
    %926 = vmatprep.subr.bf16.mxu0 %v606
    %927 = vmatpush1.bf16.msra.mxu0 %v605
    %928 = vmatprep.subr.bf16.mxu0 %v614
    %929 = vmatpush1.bf16.msra.mxu0 %v613
    %930 = vmatprep.subr.bf16.mxu0 %v622
    %931 = vmatpush1.bf16.msra.mxu0 %v621
    %932 = vmatprep.subr.bf16.mxu0 %v630
    %933 = vmatpush1.bf16.msra.mxu0 %v629
    %934 = vmatprep.subr.bf16.mxu0 %v638
    %935 = vmatpush1.bf16.msra.mxu0 %v637
    %936 = vmatprep.subr.bf16.mxu0 %v646
    %937 = vmatpush1.bf16.msra.mxu0 %v645
    %938 = vmatprep.subr.bf16.mxu0 %v654
    %939 = vmatpush1.bf16.msra.mxu0 %v653
    %940 = vmatprep.subr.bf16.mxu0 %v662
    %941 = vmatpush1.bf16.msra.mxu0 %v661
    %942 = vmatprep.subr.bf16.mxu0 %v670
    %943 = vmatpush1.bf16.msra.mxu0 %v669
    %944 = vmatprep.subr.bf16.mxu0 %v678
    %945 = vmatpush1.bf16.msra.mxu0 %v677
    %946 = vmatprep.subr.bf16.mxu0 %v686
    %947 = vmatpush1.bf16.msra.mxu0 %v685
    %948 = vmatprep.subr.bf16.mxu0 %v694
    %949 = vmatpush1.bf16.msra.mxu0 %v693
    %950 = vmatprep.subr.bf16.mxu0 %v702
    %951 = vmatpush1.bf16.msra.mxu0 %v701
    %952 = vmatprep.subr.bf16.mxu0 %v710
    %953 = vmatpush1.bf16.msra.mxu0 %v709
    %954 = vmatprep.subr.bf16.mxu0 %v718
    %955 = vmatpush1.bf16.msra.mxu0 %v717
    %956 = vmatprep.mubr.bf16.mxu0 %v34
    %957 = vmatmul.mubr.bf16.gmra.mrb[0].mxu0 %v33
    %v958 = vpop.f32.mrb[0].mxu0
    %v959 = vadd.f32 %v182, %v958
    %v960 = vpop.f32.mrb[0].mxu0
    %v961 = vadd.f32 %v186, %v960
    %v962 = vpop.f32.mrb[0].mxu0
    %v963 = vadd.f32 %v182, %v962
    %v964 = vpop.f32.mrb[0].mxu0
    %v965 = vadd.f32 %v186, %v964
    %966 = vmatprep.mubr.bf16.mxu0 %v36
    %967 = vmatmul.mubr.bf16.gmra.mrb[0].mxu0 %v35
    %v968 = vpop.f32.mrb[0].mxu0
    %v969 = vadd.f32 %v182, %v968
    %v970 = vpop.f32.mrb[0].mxu0
    %v971 = vadd.f32 %v186, %v970
    %v972 = vpop.f32.mrb[0].mxu0
    %v973 = vadd.f32 %v182, %v972
    %v974 = vpop.f32.mrb[0].mxu0
    %v975 = vadd.f32 %v186, %v974
    %976 = vmatprep.mubr.bf16.mxu0 %v38
    %977 = vmatmul.mubr.bf16.gmra.mrb[0].mxu0 %v37
    %v978 = vpop.f32.mrb[0].mxu0
    %v979 = vadd.f32 %v182, %v978
    %v980 = vpop.f32.mrb[0].mxu0
    %v981 = vadd.f32 %v186, %v980
    %v982 = vpop.f32.mrb[0].mxu0
    %v983 = vadd.f32 %v182, %v982
    %v984 = vpop.f32.mrb[0].mxu0
    %v985 = vadd.f32 %v186, %v984
    %986 = vmatprep.mubr.bf16.mxu0 %v40
    %987 = vmatmul.mubr.bf16.gmra.mrb[0].mxu0 %v39
    %v988 = vpop.f32.mrb[0].mxu0
    %v989 = vadd.f32 %v182, %v988
    %v990 = vpop.f32.mrb[0].mxu0
    %v991 = vadd.f32 %v186, %v990
    %v992 = vpop.f32.mrb[0].mxu0
    %v993 = vadd.f32 %v182, %v992
    %v994 = vpop.f32.mrb[0].mxu0
    %v995 = vadd.f32 %v186, %v994
    %996 = vdwg.mxu0
    %997 = vmatprep.subr.bf16.mxu0 %v600
    %998 = vmatpush1.bf16.msra.mxu0 %v599
    %999 = vmatprep.subr.bf16.mxu0 %v608
    %1000 = vmatpush1.bf16.msra.mxu0 %v607
    %1001 = vmatprep.subr.bf16.mxu0 %v616
    %1002 = vmatpush1.bf16.msra.mxu0 %v615
    %1003 = vmatprep.subr.bf16.mxu0 %v624
    %1004 = vmatpush1.bf16.msra.mxu0 %v623
    %1005 = vmatprep.subr.bf16.mxu0 %v632
    %1006 = vmatpush1.bf16.msra.mxu0 %v631
    %1007 = vmatprep.subr.bf16.mxu0 %v640
    %1008 = vmatpush1.bf16.msra.mxu0 %v639
    %1009 = vmatprep.subr.bf16.mxu0 %v648
    %1010 = vmatpush1.bf16.msra.mxu0 %v647
    %1011 = vmatprep.subr.bf16.mxu0 %v656
    %1012 = vmatpush1.bf16.msra.mxu0 %v655
    %1013 = vmatprep.subr.bf16.mxu0 %v664
    %1014 = vmatpush1.bf16.msra.mxu0 %v663
    %1015 = vmatprep.subr.bf16.mxu0 %v672
    %1016 = vmatpush1.bf16.msra.mxu0 %v671
    %1017 = vmatprep.subr.bf16.mxu0 %v680
    %1018 = vmatpush1.bf16.msra.mxu0 %v679
    %1019 = vmatprep.subr.bf16.mxu0 %v688
    %1020 = vmatpush1.bf16.msra.mxu0 %v687
    %1021 = vmatprep.subr.bf16.mxu0 %v696
    %1022 = vmatpush1.bf16.msra.mxu0 %v695
    %1023 = vmatprep.subr.bf16.mxu0 %v704
    %1024 = vmatpush1.bf16.msra.mxu0 %v703
    %1025 = vmatprep.subr.bf16.mxu0 %v712
    %1026 = vmatpush1.bf16.msra.mxu0 %v711
    %1027 = vmatprep.subr.bf16.mxu0 %v720
    %1028 = vmatpush1.bf16.msra.mxu0 %v719
    %1029 = vmatprep.mubr.bf16.mxu0 %v34
    %1030 = vmatmul.mubr.bf16.gmra.mrb[0].mxu0 %v33
    %v1031 = vpop.f32.mrb[0].mxu0
    %v1032 = vadd.f32 %v190, %v1031
    %v1033 = vpop.f32.mrb[0].mxu0
    %v1034 = vadd.f32 %v194, %v1033
    %v1035 = vpop.f32.mrb[0].mxu0
    %v1036 = vadd.f32 %v190, %v1035
    %v1037 = vpop.f32.mrb[0].mxu0
    %v1038 = vadd.f32 %v194, %v1037
    %1039 = vmatprep.mubr.bf16.mxu0 %v36
    %1040 = vmatmul.mubr.bf16.gmra.mrb[0].mxu0 %v35
    %v1041 = vpop.f32.mrb[0].mxu0
    %v1042 = vadd.f32 %v190, %v1041
    %v1043 = vpop.f32.mrb[0].mxu0
    %v1044 = vadd.f32 %v194, %v1043
    %v1045 = vpop.f32.mrb[0].mxu0
    %v1046 = vadd.f32 %v190, %v1045
    %v1047 = vpop.f32.mrb[0].mxu0
    %v1048 = vadd.f32 %v194, %v1047
    %1049 = vmatprep.mubr.bf16.mxu0 %v38
    %1050 = vmatmul.mubr.bf16.gmra.mrb[0].mxu0 %v37
    %v1051 = vpop.f32.mrb[0].mxu0
    %v1052 = vadd.f32 %v190, %v1051
    %v1053 = vpop.f32.mrb[0].mxu0
    %v1054 = vadd.f32 %v194, %v1053
    %v1055 = vpop.f32.mrb[0].mxu0
    %v1056 = vadd.f32 %v190, %v1055
    %v1057 = vpop.f32.mrb[0].mxu0
    %v1058 = vadd.f32 %v194, %v1057
    %1059 = vmatprep.mubr.bf16.mxu0 %v40
    %1060 = vmatmul.mubr.bf16.gmra.mrb[0].mxu0 %v39
    %v1061 = vpop.f32.mrb[0].mxu0
    %v1062 = vadd.f32 %v190, %v1061
    %v1063 = vpop.f32.mrb[0].mxu0
    %v1064 = vadd.f32 %v194, %v1063
    %v1065 = vpop.f32.mrb[0].mxu0
    %v1066 = vadd.f32 %v190, %v1065
    %v1067 = vpop.f32.mrb[0].mxu0
    %v1068 = vadd.f32 %v194, %v1067
    %1069 = vdwg.mxu0
    %1070 = vmatprep.subr.bf16.mxu0 %v602
    %1071 = vmatpush1.bf16.msra.mxu0 %v601
    %1072 = vmatprep.subr.bf16.mxu0 %v610
    %1073 = vmatpush1.bf16.msra.mxu0 %v609
    %1074 = vmatprep.subr.bf16.mxu0 %v618
    %1075 = vmatpush1.bf16.msra.mxu0 %v617
    %1076 = vmatprep.subr.bf16.mxu0 %v626
    %1077 = vmatpush1.bf16.msra.mxu0 %v625
    %1078 = vmatprep.subr.bf16.mxu0 %v634
    %1079 = vmatpush1.bf16.msra.mxu0 %v633
    %1080 = vmatprep.subr.bf16.mxu0 %v642
    %1081 = vmatpush1.bf16.msra.mxu0 %v641
    %1082 = vmatprep.subr.bf16.mxu0 %v650
    %1083 = vmatpush1.bf16.msra.mxu0 %v649
    %1084 = vmatprep.subr.bf16.mxu0 %v658
    %1085 = vmatpush1.bf16.msra.mxu0 %v657
    %1086 = vmatprep.subr.bf16.mxu0 %v666
    %1087 = vmatpush1.bf16.msra.mxu0 %v665
    %1088 = vmatprep.subr.bf16.mxu0 %v674
    %1089 = vmatpush1.bf16.msra.mxu0 %v673
    %1090 = vmatprep.subr.bf16.mxu0 %v682
    %1091 = vmatpush1.bf16.msra.mxu0 %v681
    %1092 = vmatprep.subr.bf16.mxu0 %v690
    %1093 = vmatpush1.bf16.msra.mxu0 %v689
    %1094 = vmatprep.subr.bf16.mxu0 %v698
    %1095 = vmatpush1.bf16.msra.mxu0 %v697
    %1096 = vmatprep.subr.bf16.mxu0 %v706
    %1097 = vmatpush1.bf16.msra.mxu0 %v705
    %1098 = vmatprep.subr.bf16.mxu0 %v714
    %1099 = vmatpush1.bf16.msra.mxu0 %v713
    %1100 = vmatprep.subr.bf16.mxu0 %v722
    %1101 = vmatpush1.bf16.msra.mxu0 %v721
    %1102 = vmatprep.mubr.bf16.mxu0 %v34
    %1103 = vmatmul.mubr.bf16.gmra.mrb[0].mxu0 %v33
    %v1104 = vpop.f32.mrb[0].mxu0
    %v1105 = vadd.f32 %v198, %v1104
    %v1106 = vpop.f32.mrb[0].mxu0
    %v1107 = vadd.f32 %v202, %v1106
    %v1108 = vpop.f32.mrb[0].mxu0
    %v1109 = vadd.f32 %v198, %v1108
    %v1110 = vpop.f32.mrb[0].mxu0
    %v1111 = vadd.f32 %v202, %v1110
    %1112 = vmatprep.mubr.bf16.mxu0 %v36
    %1113 = vmatmul.mubr.bf16.gmra.mrb[0].mxu0 %v35
    %v1114 = vpop.f32.mrb[0].mxu0
    %v1115 = vadd.f32 %v198, %v1114
    %v1116 = vpop.f32.mrb[0].mxu0
    %v1117 = vadd.f32 %v202, %v1116
    %v1118 = vpop.f32.mrb[0].mxu0
    %v1119 = vadd.f32 %v198, %v1118
    %v1120 = vpop.f32.mrb[0].mxu0
    %v1121 = vadd.f32 %v202, %v1120
    %1122 = vmatprep.mubr.bf16.mxu0 %v38
    %1123 = vmatmul.mubr.bf16.gmra.mrb[0].mxu0 %v37
    %v1124 = vpop.f32.mrb[0].mxu0
    %v1125 = vadd.f32 %v198, %v1124
    %v1126 = vpop.f32.mrb[0].mxu0
    %v1127 = vadd.f32 %v202, %v1126
    %v1128 = vpop.f32.mrb[0].mxu0
    %v1129 = vadd.f32 %v198, %v1128
    %v1130 = vpop.f32.mrb[0].mxu0
    %v1131 = vadd.f32 %v202, %v1130
    %1132 = vmatprep.mubr.bf16.mxu0 %v40
    %1133 = vmatmul.mubr.bf16.gmra.mrb[0].mxu0 %v39
    %v1134 = vpop.f32.mrb[0].mxu0
    %v1135 = vadd.f32 %v198, %v1134
    %v1136 = vpop.f32.mrb[0].mxu0
    %v1137 = vadd.f32 %v202, %v1136
    %v1138 = vpop.f32.mrb[0].mxu0
    %v1139 = vadd.f32 %v198, %v1138
    %v1140 = vpop.f32.mrb[0].mxu0
    %v1141 = vadd.f32 %v202, %v1140
    %1142 = vdwg.mxu0
    %1143 = vst [vmem:[#allocation4] sm:$0xff] %v886
    %1144 = vst [vmem:[#allocation4 + $0x8] sm:$0xff] %v888
    %1145 = vst [vmem:[#allocation4 + $0x10] sm:$0xff] %v959
    %1146 = vst [vmem:[#allocation4 + $0x18] sm:$0xff] %v961
    %1147 = vst [vmem:[#allocation4 + $0x20] sm:$0xff] %v1032
    %1148 = vst [vmem:[#allocation4 + $0x28] sm:$0xff] %v1034
    %1149 = vst [vmem:[#allocation4 + $0x30] sm:$0xff] %v1105
    %1150 = vst [vmem:[#allocation4 + $0x38] sm:$0xff] %v1107
    %1151 = vst [vmem:[#allocation4 + $0x40] sm:$0xff] %v890
    %1152 = vst [vmem:[#allocation4 + $0x48] sm:$0xff] %v892
    %1153 = vst [vmem:[#allocation4 + $0x50] sm:$0xff] %v963
    %1154 = vst [vmem:[#allocation4 + $0x58] sm:$0xff] %v965
    %1155 = vst [vmem:[#allocation4 + $0x60] sm:$0xff] %v1036
    %1156 = vst [vmem:[#allocation4 + $0x68] sm:$0xff] %v1038
    %1157 = vst [vmem:[#allocation4 + $0x70] sm:$0xff] %v1109
    %1158 = vst [vmem:[#allocation4 + $0x78] sm:$0xff] %v1111
    %1159 = vst [vmem:[#allocation4 + $0x80] sm:$0xff] %v896
    %1160 = vst [vmem:[#allocation4 + $0x88] sm:$0xff] %v898
    %1161 = vst [vmem:[#allocation4 + $0x90] sm:$0xff] %v969
    %1162 = vst [vmem:[#allocation4 + $0x98] sm:$0xff] %v971
    %1163 = vst [vmem:[#allocation4 + $0xa0] sm:$0xff] %v1042
    %1164 = vst [vmem:[#allocation4 + $0xa8] sm:$0xff] %v1044
    %1165 = vst [vmem:[#allocation4 + $0xb0] sm:$0xff] %v1115
    %1166 = vst [vmem:[#allocation4 + $0xb8] sm:$0xff] %v1117
    %1167 = vst [vmem:[#allocation4 + $0xc0] sm:$0xff] %v900
    %1168 = vst [vmem:[#allocation4 + $0xc8] sm:$0xff] %v902
    %1169 = vst [vmem:[#allocation4 + $0xd0] sm:$0xff] %v973
    %1170 = vst [vmem:[#allocation4 + $0xd8] sm:$0xff] %v975
    %1171 = vst [vmem:[#allocation4 + $0xe0] sm:$0xff] %v1046
    %1172 = vst [vmem:[#allocation4 + $0xe8] sm:$0xff] %v1048
    %1173 = vst [vmem:[#allocation4 + $0xf0] sm:$0xff] %v1119
    %1174 = vst [vmem:[#allocation4 + $0xf8] sm:$0xff] %v1121
    %1175 = vst [vmem:[#allocation4 + $0x100] sm:$0xff] %v906
    %1176 = vst [vmem:[#allocation4 + $0x108] sm:$0xff] %v908
    %1177 = vst [vmem:[#allocation4 + $0x110] sm:$0xff] %v979
    %1178 = vst [vmem:[#allocation4 + $0x118] sm:$0xff] %v981
    %1179 = vst [vmem:[#allocation4 + $0x120] sm:$0xff] %v1052
    %1180 = vst [vmem:[#allocation4 + $0x128] sm:$0xff] %v1054
    %1181 = vst [vmem:[#allocation4 + $0x130] sm:$0xff] %v1125
    %1182 = vst [vmem:[#allocation4 + $0x138] sm:$0xff] %v1127
    %1183 = vst [vmem:[#allocation4 + $0x140] sm:$0xff] %v910
    %1184 = vst [vmem:[#allocation4 + $0x148] sm:$0xff] %v912
    %1185 = vst [vmem:[#allocation4 + $0x150] sm:$0xff] %v983
    %1186 = vst [vmem:[#allocation4 + $0x158] sm:$0xff] %v985
    %1187 = vst [vmem:[#allocation4 + $0x160] sm:$0xff] %v1056
    %1188 = vst [vmem:[#allocation4 + $0x168] sm:$0xff] %v1058
    %1189 = vst [vmem:[#allocation4 + $0x170] sm:$0xff] %v1129
    %1190 = vst [vmem:[#allocation4 + $0x178] sm:$0xff] %v1131
    %1191 = vst [vmem:[#allocation4 + $0x180] sm:$0xff] %v916
    %1192 = vst [vmem:[#allocation4 + $0x188] sm:$0xff] %v918
    %1193 = vst [vmem:[#allocation4 + $0x190] sm:$0xff] %v989
    %1194 = vst [vmem:[#allocation4 + $0x198] sm:$0xff] %v991
    %1195 = vst [vmem:[#allocation4 + $0x1a0] sm:$0xff] %v1062
    %1196 = vst [vmem:[#allocation4 + $0x1a8] sm:$0xff] %v1064
    %1197 = vst [vmem:[#allocation4 + $0x1b0] sm:$0xff] %v1135
    %1198 = vst [vmem:[#allocation4 + $0x1b8] sm:$0xff] %v1137
    %1199 = vst [vmem:[#allocation4 + $0x1c0] sm:$0xff] %v920
    %1200 = vst [vmem:[#allocation4 + $0x1c8] sm:$0xff] %v922
    %1201 = vst [vmem:[#allocation4 + $0x1d0] sm:$0xff] %v993
    %1202 = vst [vmem:[#allocation4 + $0x1d8] sm:$0xff] %v995
    %1203 = vst [vmem:[#allocation4 + $0x1e0] sm:$0xff] %v1066
    %1204 = vst [vmem:[#allocation4 + $0x1e8] sm:$0xff] %v1068
    %1205 = vst [vmem:[#allocation4 + $0x1f0] sm:$0xff] %v1139
    %1206 = vst [vmem:[#allocation4 + $0x1f8] sm:$0xff] %v1141
    %p1207 = scmp.eq.s32.totalorder 0, 0
    // Predicated region
    $region14: #{simple_rnn_decoder_forward.3} parent=1 // pred_check
      %p1208 = pneg %p1207
    $region15: #{simple_rnn_decoder_forward.3} parent=1 // pred_check_branch
      %1210 = sbr.rel (%p1208) target = $region17
    $region16: #{simple_rnn_decoder_forward.3} parent=1 // pred_region
      %vm1211 = vcmask 7168
      %1212 = vst.msk [vmem:[#allocation2] sm:$0xff] %vm1211, -inf
      %1213 = vst.msk [vmem:[#allocation2 + $0x8] sm:$0xff] %vm1211, -inf
      %1214 = vst.msk [vmem:[#allocation2 + $0x10] sm:$0xff] %vm1211, -inf
      %1215 = vst.msk [vmem:[#allocation2 + $0x18] sm:$0xff] %vm1211, -inf
      %1216 = vst.msk [vmem:[#allocation2 + $0x20] sm:$0xff] %vm1211, -inf
      %1217 = vst.msk [vmem:[#allocation2 + $0x28] sm:$0xff] %vm1211, -inf
      %1218 = vst.msk [vmem:[#allocation2 + $0x30] sm:$0xff] %vm1211, -inf
      %1219 = vst.msk [vmem:[#allocation2 + $0x38] sm:$0xff] %vm1211, -inf
      %1220 = vst.msk [vmem:[#allocation3] sm:$0xff] %vm1211, 0
      %1221 = vst.msk [vmem:[#allocation3 + $0x8] sm:$0xff] %vm1211, 0
      %1222 = vst.msk [vmem:[#allocation3 + $0x10] sm:$0xff] %vm1211, 0
      %1223 = vst.msk [vmem:[#allocation3 + $0x18] sm:$0xff] %vm1211, 0
      %1224 = vst.msk [vmem:[#allocation3 + $0x20] sm:$0xff] %vm1211, 0
      %1225 = vst.msk [vmem:[#allocation3 + $0x28] sm:$0xff] %vm1211, 0
      %1226 = vst.msk [vmem:[#allocation3 + $0x30] sm:$0xff] %vm1211, 0
      %1227 = vst.msk [vmem:[#allocation3 + $0x38] sm:$0xff] %vm1211, 0
    $region17: #{simple_rnn_decoder_forward.3} parent=1 // pred_fallthru
      _
    %v1228 = vlaneseq
    %v1229 = vand.u32 %v1228, 127
    %v1230 = vadd.s32 %v1229, 128
    %v1231 = vadd.s32 %v1229, 256
    %v1232 = vadd.s32 %v1229, 384
    %v1233 = vadd.s32 %v1229, 512
    %v1234 = vadd.s32 %v1229, 640
    %v1235 = vadd.s32 %v1229, 768
    %v1236 = vadd.s32 %v1229, 896
    %v1237 = vmax.f32 %v886, %v888
    %v1238 = vmax.f32 %v1237, %v959
    %v1239 = vmax.f32 %v1238, %v961
    %v1240 = vmax.f32 %v1239, %v1032
    %v1241 = vmax.f32 %v1240, %v1034
    %v1242 = vmax.f32 %v1241, %v1105
    %v1243 = vmax.f32 %v1242, %v1107
    %1244 = vmax.xlane.f32.xlu0 %v1243
    %v1245 = vpop.xlane.xlu0 %1244
    %v1246 = vmax.f32 %v890, %v892
    %v1247 = vmax.f32 %v1246, %v963
    %v1248 = vmax.f32 %v1247, %v965
    %v1249 = vmax.f32 %v1248, %v1036
    %v1250 = vmax.f32 %v1249, %v1038
    %v1251 = vmax.f32 %v1250, %v1109
    %v1252 = vmax.f32 %v1251, %v1111
    %1253 = vmax.xlane.f32.xlu0 %v1252
    %v1254 = vpop.xlane.xlu0 %1253
    %v1255 = vmax.f32 %v896, %v898
    %v1256 = vmax.f32 %v1255, %v969
    %v1257 = vmax.f32 %v1256, %v971
    %v1258 = vmax.f32 %v1257, %v1042
    %v1259 = vmax.f32 %v1258, %v1044
    %v1260 = vmax.f32 %v1259, %v1115
    %v1261 = vmax.f32 %v1260, %v1117
    %1262 = vmax.xlane.f32.xlu0 %v1261
    %v1263 = vpop.xlane.xlu0 %1262
    %v1264 = vmax.f32 %v900, %v902
    %v1265 = vmax.f32 %v1264, %v973
    %v1266 = vmax.f32 %v1265, %v975
    %v1267 = vmax.f32 %v1266, %v1046
    %v1268 = vmax.f32 %v1267, %v1048
    %v1269 = vmax.f32 %v1268, %v1119
    %v1270 = vmax.f32 %v1269, %v1121
    %1271 = vmax.xlane.f32.xlu0 %v1270
    %v1272 = vpop.xlane.xlu0 %1271
    %v1273 = vmax.f32 %v906, %v908
    %v1274 = vmax.f32 %v1273, %v979
    %v1275 = vmax.f32 %v1274, %v981
    %v1276 = vmax.f32 %v1275, %v1052
    %v1277 = vmax.f32 %v1276, %v1054
    %v1278 = vmax.f32 %v1277, %v1125
    %v1279 = vmax.f32 %v1278, %v1127
    %1280 = vmax.xlane.f32.xlu0 %v1279
    %v1281 = vpop.xlane.xlu0 %1280
    %v1282 = vmax.f32 %v910, %v912
    %v1283 = vmax.f32 %v1282, %v983
    %v1284 = vmax.f32 %v1283, %v985
    %v1285 = vmax.f32 %v1284, %v1056
    %v1286 = vmax.f32 %v1285, %v1058
    %v1287 = vmax.f32 %v1286, %v1129
    %v1288 = vmax.f32 %v1287, %v1131
    %1289 = vmax.xlane.f32.xlu0 %v1288
    %v1290 = vpop.xlane.xlu0 %1289
    %v1291 = vmax.f32 %v916, %v918
    %v1292 = vmax.f32 %v1291, %v989
    %v1293 = vmax.f32 %v1292, %v991
    %v1294 = vmax.f32 %v1293, %v1062
    %v1295 = vmax.f32 %v1294, %v1064
    %v1296 = vmax.f32 %v1295, %v1135
    %v1297 = vmax.f32 %v1296, %v1137
    %1298 = vmax.xlane.f32.xlu0 %v1297
    %v1299 = vpop.xlane.xlu0 %1298
    %v1300 = vmax.f32 %v920, %v922
    %v1301 = vmax.f32 %v1300, %v993
    %v1302 = vmax.f32 %v1301, %v995
    %v1303 = vmax.f32 %v1302, %v1066
    %v1304 = vmax.f32 %v1303, %v1068
    %v1305 = vmax.f32 %v1304, %v1139
    %v1306 = vmax.f32 %v1305, %v1141
    %1307 = vmax.xlane.f32.xlu0 %v1306
    %v1308 = vpop.xlane.xlu0 %1307
    %vm1309 = vcmp.eq.f32.partialorder %v886, %v1245
    %vm1310 = vcmp.eq.f32.partialorder %v888, %v1245
    %vm1311 = vcmp.eq.f32.partialorder %v959, %v1245
    %vm1312 = vcmp.eq.f32.partialorder %v961, %v1245
    %vm1313 = vcmp.eq.f32.partialorder %v1032, %v1245
    %vm1314 = vcmp.eq.f32.partialorder %v1034, %v1245
    %vm1315 = vcmp.eq.f32.partialorder %v1105, %v1245
    %vm1316 = vcmp.eq.f32.partialorder %v1107, %v1245
    %vm1317 = vcmp.eq.f32.partialorder %v890, %v1254
    %vm1318 = vcmp.eq.f32.partialorder %v892, %v1254
    %vm1319 = vcmp.eq.f32.partialorder %v963, %v1254
    %vm1320 = vcmp.eq.f32.partialorder %v965, %v1254
    %vm1321 = vcmp.eq.f32.partialorder %v1036, %v1254
    %vm1322 = vcmp.eq.f32.partialorder %v1038, %v1254
    %vm1323 = vcmp.eq.f32.partialorder %v1109, %v1254
    %vm1324 = vcmp.eq.f32.partialorder %v1111, %v1254
    %vm1325 = vcmp.eq.f32.partialorder %v896, %v1263
    %vm1326 = vcmp.eq.f32.partialorder %v898, %v1263
    %vm1327 = vcmp.eq.f32.partialorder %v969, %v1263
    %vm1328 = vcmp.eq.f32.partialorder %v971, %v1263
    %vm1329 = vcmp.eq.f32.partialorder %v1042, %v1263
    %vm1330 = vcmp.eq.f32.partialorder %v1044, %v1263
    %vm1331 = vcmp.eq.f32.partialorder %v1115, %v1263
    %vm1332 = vcmp.eq.f32.partialorder %v1117, %v1263
    %vm1333 = vcmp.eq.f32.partialorder %v900, %v1272
    %vm1334 = vcmp.eq.f32.partialorder %v902, %v1272
    %vm1335 = vcmp.eq.f32.partialorder %v973, %v1272
    %vm1336 = vcmp.eq.f32.partialorder %v975, %v1272
    %vm1337 = vcmp.eq.f32.partialorder %v1046, %v1272
    %vm1338 = vcmp.eq.f32.partialorder %v1048, %v1272
    %vm1339 = vcmp.eq.f32.partialorder %v1119, %v1272
    %vm1340 = vcmp.eq.f32.partialorder %v1121, %v1272
    %vm1341 = vcmp.eq.f32.partialorder %v906, %v1281
    %vm1342 = vcmp.eq.f32.partialorder %v908, %v1281
    %vm1343 = vcmp.eq.f32.partialorder %v979, %v1281
    %vm1344 = vcmp.eq.f32.partialorder %v981, %v1281
    %vm1345 = vcmp.eq.f32.partialorder %v1052, %v1281
    %vm1346 = vcmp.eq.f32.partialorder %v1054, %v1281
    %vm1347 = vcmp.eq.f32.partialorder %v1125, %v1281
    %vm1348 = vcmp.eq.f32.partialorder %v1127, %v1281
    %vm1349 = vcmp.eq.f32.partialorder %v910, %v1290
    %vm1350 = vcmp.eq.f32.partialorder %v912, %v1290
    %vm1351 = vcmp.eq.f32.partialorder %v983, %v1290
    %vm1352 = vcmp.eq.f32.partialorder %v985, %v1290
    %vm1353 = vcmp.eq.f32.partialorder %v1056, %v1290
    %vm1354 = vcmp.eq.f32.partialorder %v1058, %v1290
    %vm1355 = vcmp.eq.f32.partialorder %v1129, %v1290
    %vm1356 = vcmp.eq.f32.partialorder %v1131, %v1290
    %vm1357 = vcmp.eq.f32.partialorder %v916, %v1299
    %vm1358 = vcmp.eq.f32.partialorder %v918, %v1299
    %vm1359 = vcmp.eq.f32.partialorder %v989, %v1299
    %vm1360 = vcmp.eq.f32.partialorder %v991, %v1299
    %vm1361 = vcmp.eq.f32.partialorder %v1062, %v1299
    %vm1362 = vcmp.eq.f32.partialorder %v1064, %v1299
    %vm1363 = vcmp.eq.f32.partialorder %v1135, %v1299
    %vm1364 = vcmp.eq.f32.partialorder %v1137, %v1299
    %vm1365 = vcmp.eq.f32.partialorder %v920, %v1308
    %vm1366 = vcmp.eq.f32.partialorder %v922, %v1308
    %vm1367 = vcmp.eq.f32.partialorder %v993, %v1308
    %vm1368 = vcmp.eq.f32.partialorder %v995, %v1308
    %vm1369 = vcmp.eq.f32.partialorder %v1066, %v1308
    %vm1370 = vcmp.eq.f32.partialorder %v1068, %v1308
    %vm1371 = vcmp.eq.f32.partialorder %v1139, %v1308
    %vm1372 = vcmp.eq.f32.partialorder %v1141, %v1308
    %v1373 = vsel %vm1309, %v1229, 1024
    %v1374 = vsel %vm1310, %v1230, 1024
    %v1375 = vsel %vm1311, %v1231, 1024
    %v1376 = vsel %vm1312, %v1232, 1024
    %v1377 = vsel %vm1313, %v1233, 1024
    %v1378 = vsel %vm1314, %v1234, 1024
    %v1379 = vsel %vm1315, %v1235, 1024
    %v1380 = vsel %vm1316, %v1236, 1024
    %v1381 = vsel %vm1317, %v1229, 1024
    %v1382 = vsel %vm1318, %v1230, 1024
    %v1383 = vsel %vm1319, %v1231, 1024
    %v1384 = vsel %vm1320, %v1232, 1024
    %v1385 = vsel %vm1321, %v1233, 1024
    %v1386 = vsel %vm1322, %v1234, 1024
    %v1387 = vsel %vm1323, %v1235, 1024
    %v1388 = vsel %vm1324, %v1236, 1024
    %v1389 = vsel %vm1325, %v1229, 1024
    %v1390 = vsel %vm1326, %v1230, 1024
    %v1391 = vsel %vm1327, %v1231, 1024
    %v1392 = vsel %vm1328, %v1232, 1024
    %v1393 = vsel %vm1329, %v1233, 1024
    %v1394 = vsel %vm1330, %v1234, 1024
    %v1395 = vsel %vm1331, %v1235, 1024
    %v1396 = vsel %vm1332, %v1236, 1024
    %v1397 = vsel %vm1333, %v1229, 1024
    %v1398 = vsel %vm1334, %v1230, 1024
    %v1399 = vsel %vm1335, %v1231, 1024
    %v1400 = vsel %vm1336, %v1232, 1024
    %v1401 = vsel %vm1337, %v1233, 1024
    %v1402 = vsel %vm1338, %v1234, 1024
    %v1403 = vsel %vm1339, %v1235, 1024
    %v1404 = vsel %vm1340, %v1236, 1024
    %v1405 = vsel %vm1341, %v1229, 1024
    %v1406 = vsel %vm1342, %v1230, 1024
    %v1407 = vsel %vm1343, %v1231, 1024
    %v1408 = vsel %vm1344, %v1232, 1024
    %v1409 = vsel %vm1345, %v1233, 1024
    %v1410 = vsel %vm1346, %v1234, 1024
    %v1411 = vsel %vm1347, %v1235, 1024
    %v1412 = vsel %vm1348, %v1236, 1024
    %v1413 = vsel %vm1349, %v1229, 1024
    %v1414 = vsel %vm1350, %v1230, 1024
    %v1415 = vsel %vm1351, %v1231, 1024
    %v1416 = vsel %vm1352, %v1232, 1024
    %v1417 = vsel %vm1353, %v1233, 1024
    %v1418 = vsel %vm1354, %v1234, 1024
    %v1419 = vsel %vm1355, %v1235, 1024
    %v1420 = vsel %vm1356, %v1236, 1024
    %v1421 = vsel %vm1357, %v1229, 1024
    %v1422 = vsel %vm1358, %v1230, 1024
    %v1423 = vsel %vm1359, %v1231, 1024
    %v1424 = vsel %vm1360, %v1232, 1024
    %v1425 = vsel %vm1361, %v1233, 1024
    %v1426 = vsel %vm1362, %v1234, 1024
    %v1427 = vsel %vm1363, %v1235, 1024
    %v1428 = vsel %vm1364, %v1236, 1024
    %v1429 = vsel %vm1365, %v1229, 1024
    %v1430 = vsel %vm1366, %v1230, 1024
    %v1431 = vsel %vm1367, %v1231, 1024
    %v1432 = vsel %vm1368, %v1232, 1024
    %v1433 = vsel %vm1369, %v1233, 1024
    %v1434 = vsel %vm1370, %v1234, 1024
    %v1435 = vsel %vm1371, %v1235, 1024
    %v1436 = vsel %vm1372, %v1236, 1024
    %vm1437 = vcmp.lt.s32.totalorder %v1373, %v1374
    %v1438 = vsel %vm1437, %v1373, %v1374
    %vm1439 = vcmp.lt.s32.totalorder %v1438, %v1375
    %v1440 = vsel %vm1439, %v1438, %v1375
    %vm1441 = vcmp.lt.s32.totalorder %v1440, %v1376
    %v1442 = vsel %vm1441, %v1440, %v1376
    %vm1443 = vcmp.lt.s32.totalorder %v1442, %v1377
    %v1444 = vsel %vm1443, %v1442, %v1377
    %vm1445 = vcmp.lt.s32.totalorder %v1444, %v1378
    %v1446 = vsel %vm1445, %v1444, %v1378
    %vm1447 = vcmp.lt.s32.totalorder %v1446, %v1379
    %v1448 = vsel %vm1447, %v1446, %v1379
    %vm1449 = vcmp.lt.s32.totalorder %v1448, %v1380
    %v1450 = vsel %vm1449, %v1448, %v1380
    %v1451 = vand.u32 %v1450, 65535
    %v1452 = vshra.s32 %v1450, 16
    %v1453 = vcvt.s32.f32 %v1451
    %v1454 = vcvt.s32.f32 %v1452
    %1455 = vmin.xlane.f32.xlu0 %v1454
    %v1456 = vpop.xlane.xlu0 %1455
    %vm1457 = vcmp.eq.f32.partialorder %v1454, %v1456
    %v1458 = vsel %vm1457, %v1453, inf
    %1459 = vmin.xlane.f32.xlu0 %v1458
    %v1460 = vpop.xlane.xlu0 %1459
    %v1461 = vcvt.f32.s32 %v1460
    %v1462 = vcvt.f32.s32 %v1456
    %v1463 = vshll.u32 %v1462, 16
    %v1464 = vadd.s32 %v1463, %v1461
    %vm1465 = vcmp.lt.s32.totalorder %v1381, %v1382
    %v1466 = vsel %vm1465, %v1381, %v1382
    %vm1467 = vcmp.lt.s32.totalorder %v1466, %v1383
    %v1468 = vsel %vm1467, %v1466, %v1383
    %vm1469 = vcmp.lt.s32.totalorder %v1468, %v1384
    %v1470 = vsel %vm1469, %v1468, %v1384
    %vm1471 = vcmp.lt.s32.totalorder %v1470, %v1385
    %v1472 = vsel %vm1471, %v1470, %v1385
    %vm1473 = vcmp.lt.s32.totalorder %v1472, %v1386
    %v1474 = vsel %vm1473, %v1472, %v1386
    %vm1475 = vcmp.lt.s32.totalorder %v1474, %v1387
    %v1476 = vsel %vm1475, %v1474, %v1387
    %vm1477 = vcmp.lt.s32.totalorder %v1476, %v1388
    %v1478 = vsel %vm1477, %v1476, %v1388
    %v1479 = vand.u32 %v1478, 65535
    %v1480 = vshra.s32 %v1478, 16
    %v1481 = vcvt.s32.f32 %v1479
    %v1482 = vcvt.s32.f32 %v1480
    %1483 = vmin.xlane.f32.xlu0 %v1482
    %v1484 = vpop.xlane.xlu0 %1483
    %vm1485 = vcmp.eq.f32.partialorder %v1482, %v1484
    %v1486 = vsel %vm1485, %v1481, inf
    %1487 = vmin.xlane.f32.xlu0 %v1486
    %v1488 = vpop.xlane.xlu0 %1487
    %v1489 = vcvt.f32.s32 %v1488
    %v1490 = vcvt.f32.s32 %v1484
    %v1491 = vshll.u32 %v1490, 16
    %v1492 = vadd.s32 %v1491, %v1489
    %vm1493 = vcmp.lt.s32.totalorder %v1389, %v1390
    %v1494 = vsel %vm1493, %v1389, %v1390
    %vm1495 = vcmp.lt.s32.totalorder %v1494, %v1391
    %v1496 = vsel %vm1495, %v1494, %v1391
    %vm1497 = vcmp.lt.s32.totalorder %v1496, %v1392
    %v1498 = vsel %vm1497, %v1496, %v1392
    %vm1499 = vcmp.lt.s32.totalorder %v1498, %v1393
    %v1500 = vsel %vm1499, %v1498, %v1393
    %vm1501 = vcmp.lt.s32.totalorder %v1500, %v1394
    %v1502 = vsel %vm1501, %v1500, %v1394
    %vm1503 = vcmp.lt.s32.totalorder %v1502, %v1395
    %v1504 = vsel %vm1503, %v1502, %v1395
    %vm1505 = vcmp.lt.s32.totalorder %v1504, %v1396
    %v1506 = vsel %vm1505, %v1504, %v1396
    %v1507 = vand.u32 %v1506, 65535
    %v1508 = vshra.s32 %v1506, 16
    %v1509 = vcvt.s32.f32 %v1507
    %v1510 = vcvt.s32.f32 %v1508
    %1511 = vmin.xlane.f32.xlu0 %v1510
    %v1512 = vpop.xlane.xlu0 %1511
    %vm1513 = vcmp.eq.f32.partialorder %v1510, %v1512
    %v1514 = vsel %vm1513, %v1509, inf
    %1515 = vmin.xlane.f32.xlu0 %v1514
    %v1516 = vpop.xlane.xlu0 %1515
    %v1517 = vcvt.f32.s32 %v1516
    %v1518 = vcvt.f32.s32 %v1512
    %v1519 = vshll.u32 %v1518, 16
    %v1520 = vadd.s32 %v1519, %v1517
    %vm1521 = vcmp.lt.s32.totalorder %v1397, %v1398
    %v1522 = vsel %vm1521, %v1397, %v1398
    %vm1523 = vcmp.lt.s32.totalorder %v1522, %v1399
    %v1524 = vsel %vm1523, %v1522, %v1399
    %vm1525 = vcmp.lt.s32.totalorder %v1524, %v1400
    %v1526 = vsel %vm1525, %v1524, %v1400
    %vm1527 = vcmp.lt.s32.totalorder %v1526, %v1401
    %v1528 = vsel %vm1527, %v1526, %v1401
    %vm1529 = vcmp.lt.s32.totalorder %v1528, %v1402
    %v1530 = vsel %vm1529, %v1528, %v1402
    %vm1531 = vcmp.lt.s32.totalorder %v1530, %v1403
    %v1532 = vsel %vm1531, %v1530, %v1403
    %vm1533 = vcmp.lt.s32.totalorder %v1532, %v1404
    %v1534 = vsel %vm1533, %v1532, %v1404
    %v1535 = vand.u32 %v1534, 65535
    %v1536 = vshra.s32 %v1534, 16
    %v1537 = vcvt.s32.f32 %v1535
    %v1538 = vcvt.s32.f32 %v1536
    %1539 = vmin.xlane.f32.xlu0 %v1538
    %v1540 = vpop.xlane.xlu0 %1539
    %vm1541 = vcmp.eq.f32.partialorder %v1538, %v1540
    %v1542 = vsel %vm1541, %v1537, inf
    %1543 = vmin.xlane.f32.xlu0 %v1542
    %v1544 = vpop.xlane.xlu0 %1543
    %v1545 = vcvt.f32.s32 %v1544
    %v1546 = vcvt.f32.s32 %v1540
    %v1547 = vshll.u32 %v1546, 16
    %v1548 = vadd.s32 %v1547, %v1545
    %vm1549 = vcmp.lt.s32.totalorder %v1405, %v1406
    %v1550 = vsel %vm1549, %v1405, %v1406
    %vm1551 = vcmp.lt.s32.totalorder %v1550, %v1407
    %v1552 = vsel %vm1551, %v1550, %v1407
    %vm1553 = vcmp.lt.s32.totalorder %v1552, %v1408
    %v1554 = vsel %vm1553, %v1552, %v1408
    %vm1555 = vcmp.lt.s32.totalorder %v1554, %v1409
    %v1556 = vsel %vm1555, %v1554, %v1409
    %vm1557 = vcmp.lt.s32.totalorder %v1556, %v1410
    %v1558 = vsel %vm1557, %v1556, %v1410
    %vm1559 = vcmp.lt.s32.totalorder %v1558, %v1411
    %v1560 = vsel %vm1559, %v1558, %v1411
    %vm1561 = vcmp.lt.s32.totalorder %v1560, %v1412
    %v1562 = vsel %vm1561, %v1560, %v1412
    %v1563 = vand.u32 %v1562, 65535
    %v1564 = vshra.s32 %v1562, 16
    %v1565 = vcvt.s32.f32 %v1563
    %v1566 = vcvt.s32.f32 %v1564
    %1567 = vmin.xlane.f32.xlu0 %v1566
    %v1568 = vpop.xlane.xlu0 %1567
    %vm1569 = vcmp.eq.f32.partialorder %v1566, %v1568
    %v1570 = vsel %vm1569, %v1565, inf
    %1571 = vmin.xlane.f32.xlu0 %v1570
    %v1572 = vpop.xlane.xlu0 %1571
    %v1573 = vcvt.f32.s32 %v1572
    %v1574 = vcvt.f32.s32 %v1568
    %v1575 = vshll.u32 %v1574, 16
    %v1576 = vadd.s32 %v1575, %v1573
    %vm1577 = vcmp.lt.s32.totalorder %v1413, %v1414
    %v1578 = vsel %vm1577, %v1413, %v1414
    %vm1579 = vcmp.lt.s32.totalorder %v1578, %v1415
    %v1580 = vsel %vm1579, %v1578, %v1415
    %vm1581 = vcmp.lt.s32.totalorder %v1580, %v1416
    %v1582 = vsel %vm1581, %v1580, %v1416
    %vm1583 = vcmp.lt.s32.totalorder %v1582, %v1417
    %v1584 = vsel %vm1583, %v1582, %v1417
    %vm1585 = vcmp.lt.s32.totalorder %v1584, %v1418
    %v1586 = vsel %vm1585, %v1584, %v1418
    %vm1587 = vcmp.lt.s32.totalorder %v1586, %v1419
    %v1588 = vsel %vm1587, %v1586, %v1419
    %vm1589 = vcmp.lt.s32.totalorder %v1588, %v1420
    %v1590 = vsel %vm1589, %v1588, %v1420
    %v1591 = vand.u32 %v1590, 65535
    %v1592 = vshra.s32 %v1590, 16
    %v1593 = vcvt.s32.f32 %v1591
    %v1594 = vcvt.s32.f32 %v1592
    %1595 = vmin.xlane.f32.xlu0 %v1594
    %v1596 = vpop.xlane.xlu0 %1595
    %vm1597 = vcmp.eq.f32.partialorder %v1594, %v1596
    %v1598 = vsel %vm1597, %v1593, inf
    %1599 = vmin.xlane.f32.xlu0 %v1598
    %v1600 = vpop.xlane.xlu0 %1599
    %v1601 = vcvt.f32.s32 %v1600
    %v1602 = vcvt.f32.s32 %v1596
    %v1603 = vshll.u32 %v1602, 16
    %v1604 = vadd.s32 %v1603, %v1601
    %vm1605 = vcmp.lt.s32.totalorder %v1421, %v1422
    %v1606 = vsel %vm1605, %v1421, %v1422
    %vm1607 = vcmp.lt.s32.totalorder %v1606, %v1423
    %v1608 = vsel %vm1607, %v1606, %v1423
    %vm1609 = vcmp.lt.s32.totalorder %v1608, %v1424
    %v1610 = vsel %vm1609, %v1608, %v1424
    %vm1611 = vcmp.lt.s32.totalorder %v1610, %v1425
    %v1612 = vsel %vm1611, %v1610, %v1425
    %vm1613 = vcmp.lt.s32.totalorder %v1612, %v1426
    %v1614 = vsel %vm1613, %v1612, %v1426
    %vm1615 = vcmp.lt.s32.totalorder %v1614, %v1427
    %v1616 = vsel %vm1615, %v1614, %v1427
    %vm1617 = vcmp.lt.s32.totalorder %v1616, %v1428
    %v1618 = vsel %vm1617, %v1616, %v1428
    %v1619 = vand.u32 %v1618, 65535
    %v1620 = vshra.s32 %v1618, 16
    %v1621 = vcvt.s32.f32 %v1619
    %v1622 = vcvt.s32.f32 %v1620
    %1623 = vmin.xlane.f32.xlu0 %v1622
    %v1624 = vpop.xlane.xlu0 %1623
    %vm1625 = vcmp.eq.f32.partialorder %v1622, %v1624
    %v1626 = vsel %vm1625, %v1621, inf
    %1627 = vmin.xlane.f32.xlu0 %v1626
    %v1628 = vpop.xlane.xlu0 %1627
    %v1629 = vcvt.f32.s32 %v1628
    %v1630 = vcvt.f32.s32 %v1624
    %v1631 = vshll.u32 %v1630, 16
    %v1632 = vadd.s32 %v1631, %v1629
    %vm1633 = vcmp.lt.s32.totalorder %v1429, %v1430
    %v1634 = vsel %vm1633, %v1429, %v1430
    %vm1635 = vcmp.lt.s32.totalorder %v1634, %v1431
    %v1636 = vsel %vm1635, %v1634, %v1431
    %vm1637 = vcmp.lt.s32.totalorder %v1636, %v1432
    %v1638 = vsel %vm1637, %v1636, %v1432
    %vm1639 = vcmp.lt.s32.totalorder %v1638, %v1433
    %v1640 = vsel %vm1639, %v1638, %v1433
    %vm1641 = vcmp.lt.s32.totalorder %v1640, %v1434
    %v1642 = vsel %vm1641, %v1640, %v1434
    %vm1643 = vcmp.lt.s32.totalorder %v1642, %v1435
    %v1644 = vsel %vm1643, %v1642, %v1435
    %vm1645 = vcmp.lt.s32.totalorder %v1644, %v1436
    %v1646 = vsel %vm1645, %v1644, %v1436
    %v1647 = vand.u32 %v1646, 65535
    %v1648 = vshra.s32 %v1646, 16
    %v1649 = vcvt.s32.f32 %v1647
    %v1650 = vcvt.s32.f32 %v1648
    %1651 = vmin.xlane.f32.xlu0 %v1650
    %v1652 = vpop.xlane.xlu0 %1651
    %vm1653 = vcmp.eq.f32.partialorder %v1650, %v1652
    %v1654 = vsel %vm1653, %v1649, inf
    %1655 = vmin.xlane.f32.xlu0 %v1654
    %v1656 = vpop.xlane.xlu0 %1655
    %v1657 = vcvt.f32.s32 %v1656
    %v1658 = vcvt.f32.s32 %v1652
    %v1659 = vshll.u32 %v1658, 16
    %v1660 = vadd.s32 %v1659, %v1657
    %s1661 = smul.u32 0, 1024
    %v1662 = vstv %s1661
    %v1663 = vadd.s32 %v1464, %v1662
    %v1664 = vadd.s32 %v1492, %v1662
    %v1665 = vadd.s32 %v1520, %v1662
    %v1666 = vadd.s32 %v1548, %v1662
    %v1667 = vadd.s32 %v1576, %v1662
    %v1668 = vadd.s32 %v1604, %v1662
    %v1669 = vadd.s32 %v1632, %v1662
    %v1670 = vadd.s32 %v1660, %v1662
    %v1671 = vld [vmem:[#allocation2] sm:$0xff]
    %v1672 = vld [vmem:[#allocation2 + $0x8] sm:$0xff]
    %v1673 = vld [vmem:[#allocation2 + $0x10] sm:$0xff]
    %v1674 = vld [vmem:[#allocation2 + $0x18] sm:$0xff]
    %v1675 = vld [vmem:[#allocation2 + $0x20] sm:$0xff]
    %v1676 = vld [vmem:[#allocation2 + $0x28] sm:$0xff]
    %v1677 = vld [vmem:[#allocation2 + $0x30] sm:$0xff]
    %v1678 = vld [vmem:[#allocation2 + $0x38] sm:$0xff]
    %vm1679 = vcmp.gt.f32.partialorder %v1245, %v1671
    %vm1680 = vcmp.gt.f32.partialorder %v1254, %v1672
    %vm1681 = vcmp.gt.f32.partialorder %v1263, %v1673
    %vm1682 = vcmp.gt.f32.partialorder %v1272, %v1674
    %vm1683 = vcmp.gt.f32.partialorder %v1281, %v1675
    %vm1684 = vcmp.gt.f32.partialorder %v1290, %v1676
    %vm1685 = vcmp.gt.f32.partialorder %v1299, %v1677
    %vm1686 = vcmp.gt.f32.partialorder %v1308, %v1678
    %v1687 = vld [vmem:[#allocation3] sm:$0xff]
    %v1688 = vld [vmem:[#allocation3 + $0x8] sm:$0xff]
    %v1689 = vld [vmem:[#allocation3 + $0x10] sm:$0xff]
    %v1690 = vld [vmem:[#allocation3 + $0x18] sm:$0xff]
    %v1691 = vld [vmem:[#allocation3 + $0x20] sm:$0xff]
    %v1692 = vld [vmem:[#allocation3 + $0x28] sm:$0xff]
    %v1693 = vld [vmem:[#allocation3 + $0x30] sm:$0xff]
    %v1694 = vld [vmem:[#allocation3 + $0x38] sm:$0xff]
    %v1695 = vsel %vm1679, %v1663, %v1687
    %v1696 = vsel %vm1680, %v1664, %v1688
    %v1697 = vsel %vm1681, %v1665, %v1689
    %v1698 = vsel %vm1682, %v1666, %v1690
    %v1699 = vsel %vm1683, %v1667, %v1691
    %v1700 = vsel %vm1684, %v1668, %v1692
    %v1701 = vsel %vm1685, %v1669, %v1693
    %v1702 = vsel %vm1686, %v1670, %v1694
    %vm1703 = vcmask 7168
    %1704 = vst.msk [vmem:[#allocation3] sm:$0xff] %vm1703, %v1695
    %1705 = vst.msk [vmem:[#allocation3 + $0x8] sm:$0xff] %vm1703, %v1696
    %1706 = vst.msk [vmem:[#allocation3 + $0x10] sm:$0xff] %vm1703, %v1697
    %1707 = vst.msk [vmem:[#allocation3 + $0x18] sm:$0xff] %vm1703, %v1698
    %1708 = vst.msk [vmem:[#allocation3 + $0x20] sm:$0xff] %vm1703, %v1699
    %1709 = vst.msk [vmem:[#allocation3 + $0x28] sm:$0xff] %vm1703, %v1700
    %1710 = vst.msk [vmem:[#allocation3 + $0x30] sm:$0xff] %vm1703, %v1701
    %1711 = vst.msk [vmem:[#allocation3 + $0x38] sm:$0xff] %vm1703, %v1702
    %v1712 = vld [vmem:[#allocation2] sm:$0xff]
    %v1713 = vld [vmem:[#allocation2 + $0x8] sm:$0xff]
    %v1714 = vld [vmem:[#allocation2 + $0x10] sm:$0xff]
    %v1715 = vld [vmem:[#allocation2 + $0x18] sm:$0xff]
    %v1716 = vld [vmem:[#allocation2 + $0x20] sm:$0xff]
    %v1717 = vld [vmem:[#allocation2 + $0x28] sm:$0xff]
    %v1718 = vld [vmem:[#allocation2 + $0x30] sm:$0xff]
    %v1719 = vld [vmem:[#allocation2 + $0x38] sm:$0xff]
    %v1720 = vsel %vm1679, %v1245, %v1712
    %v1721 = vsel %vm1680, %v1254, %v1713
    %v1722 = vsel %vm1681, %v1263, %v1714
    %v1723 = vsel %vm1682, %v1272, %v1715
    %v1724 = vsel %vm1683, %v1281, %v1716
    %v1725 = vsel %vm1684, %v1290, %v1717
    %v1726 = vsel %vm1685, %v1299, %v1718
    %v1727 = vsel %vm1686, %v1308, %v1719
    %1728 = vst.msk [vmem:[#allocation2] sm:$0xff] %vm1703, %v1720
    %1729 = vst.msk [vmem:[#allocation2 + $0x8] sm:$0xff] %vm1703, %v1721
    %1730 = vst.msk [vmem:[#allocation2 + $0x10] sm:$0xff] %vm1703, %v1722
    %1731 = vst.msk [vmem:[#allocation2 + $0x18] sm:$0xff] %vm1703, %v1723
    %1732 = vst.msk [vmem:[#allocation2 + $0x20] sm:$0xff] %vm1703, %v1724
    %1733 = vst.msk [vmem:[#allocation2 + $0x28] sm:$0xff] %vm1703, %v1725
    %1734 = vst.msk [vmem:[#allocation2 + $0x30] sm:$0xff] %vm1703, %v1726
    %1735 = vst.msk [vmem:[#allocation2 + $0x38] sm:$0xff] %vm1703, %v1727
    // Predicated region
    $region18: #{simple_rnn_decoder_forward.3} parent=1 // pred_check
      %p1736 = pneg %p1207
    $region19: #{simple_rnn_decoder_forward.3} parent=1 // pred_check_branch
      %1738 = sbr.rel (%p1736) target = $region21
    $region20: #{simple_rnn_decoder_forward.3} parent=1 // pred_region
      %v1739 = vld [vmem:[#allocation3] sm:$0xff]
      %v1740 = vld [vmem:[#allocation3 + $0x8] sm:$0xff]
      %v1741 = vld [vmem:[#allocation3 + $0x10] sm:$0xff]
      %v1742 = vld [vmem:[#allocation3 + $0x18] sm:$0xff]
      %v1743 = vld [vmem:[#allocation3 + $0x20] sm:$0xff]
      %v1744 = vld [vmem:[#allocation3 + $0x28] sm:$0xff]
      %v1745 = vld [vmem:[#allocation3 + $0x30] sm:$0xff]
      %v1746 = vld [vmem:[#allocation3 + $0x38] sm:$0xff]
      %1747 = vst.msk [vmem:[%s4] sm:$0xff] %vm1703, %v1739
      %1748 = vst.msk [vmem:[%s4 + $0x8] sm:$0xff] %vm1703, %v1740
      %1749 = vst.msk [vmem:[%s4 + $0x10] sm:$0xff] %vm1703, %v1741
      %1750 = vst.msk [vmem:[%s4 + $0x18] sm:$0xff] %vm1703, %v1742
      %1751 = vst.msk [vmem:[%s4 + $0x20] sm:$0xff] %vm1703, %v1743
      %1752 = vst.msk [vmem:[%s4 + $0x28] sm:$0xff] %vm1703, %v1744
      %1753 = vst.msk [vmem:[%s4 + $0x30] sm:$0xff] %vm1703, %v1745
      %1754 = vst.msk [vmem:[%s4 + $0x38] sm:$0xff] %vm1703, %v1746
    $region21: #{simple_rnn_decoder_forward.3} parent=1 // pred_fallthru
      _
    // Predicated region
    $region22: #{simple_rnn_decoder_forward.3} parent=1 // pred_check
      _
    $region23: #{simple_rnn_decoder_forward.3} parent=1 // pred_check_branch
      %1756 = sbr.rel (0) target = $region25
    $region24: #{simple_rnn_decoder_forward.3} parent=1 // pred_region
      %s1758 = ssub.s32 8192, 8192
      %1759 = vsyncadd [#allocation5], %s1758
      %s1760 = sshll.u32 [#allocation4], 4
      %s1761 = int_to_ptr.vmem [resolvable:$true] %s1760
      %1766 = dma.vmem_to_hbm [thread:$0]  %s1761, 8192, %s3, [#allocation5], 1024, 1024, 64
    $region25: #{simple_rnn_decoder_forward.3} parent=1 // pred_fallthru
      _
    // Predicated region
    $region26: #{simple_rnn_decoder_forward.3} parent=1 // pred_check
      _
    $region27: #{simple_rnn_decoder_forward.3} parent=1 // pred_check_branch
      %1768 = sbr.rel (0) target = $region29
    $region28: #{simple_rnn_decoder_forward.3} parent=1 // pred_region
      _
    $region29: #{simple_rnn_decoder_forward.3} parent=1 // pred_fallthru
      _
    // Predicated region
    $region30: #{simple_rnn_decoder_forward.3} parent=1 // pred_check
      _
    $region31: #{simple_rnn_decoder_forward.3} parent=1 // pred_check_branch
      %1770 = sbr.rel (0) target = $region33
    $region32: #{simple_rnn_decoder_forward.3} parent=1 // pred_region
      %1771 = dma.done [#allocation5], 8192
    $region33: #{simple_rnn_decoder_forward.3} parent=1 // pred_fallthru
      _
    // Predicated region
    $region34: #{simple_rnn_decoder_forward.3} parent=1 // pred_check
      _
    $region35: #{simple_rnn_decoder_forward.3} parent=1 // pred_check_branch
      %1773 = sbr.rel (0) target = $region37
    $region36: #{simple_rnn_decoder_forward.3} parent=1 // pred_region
      _
    $region37: #{simple_rnn_decoder_forward.3} parent=1 // pred_fallthru
      _
    %1774 = vsyncpa [#allocation5], 1

</llo_original>
